<compile_context>
chip_gen: v6e
topology: v6e:2x2x1
jax: 0.10.0
libtpu: 0.0.40
codegen_flags: <defaults>
</compile_context>

<pallas_src>
import jax
import jax.numpy as jnp
from jax.experimental import pallas as pl
from jax.experimental.pallas import tpu as pltpu


def make_fused_kernel(H, W, B):
    HW = H * W

    def kernel(x_ref, w1_ref, b1_ref, w2_ref, b2_ref, w3_ref, b3_ref,
               o_ref, yp_ref):
        # ---- stage 1: 1x1 conv-transpose == (B*HW,128)@(128,128) matmul + SiLU ----
        xb = x_ref[...].reshape(B * HW, 128)
        v1 = jnp.dot(xb, w1_ref[...], preferred_element_type=jnp.float32)
        v1 = v1 + b1_ref[...]
        v3 = v1 * jax.nn.sigmoid(v1)                       # (B*HW, 128), stays in regs

        # ---- stage 2: all 9 taps of the 3x3 conv in ONE lane-dense matmul,
        #      then halo-pad the tiny 18-wide result (pad AFTER the 128->18 reduction)
        y = jnp.dot(v3, w2_ref[...], preferred_element_type=jnp.float32)  # (B*HW, 18)

        # Small scratch (B, H+2, W+2, 18): zeroing it is ~28 vregs per batch item and
        # is redone every step so it stays correct when the grid is split across TCs.
        yp_ref[...] = jnp.zeros_like(yp_ref)
        yp_ref[:, 1:H + 1, 1:W + 1, :] = y.reshape(B, H, W, 18)
        yp = yp_ref[...]

        # combine taps with shifted adds on the tiny 18-wide data
        v4 = yp[:, 0:H, 0:W, 0:2]                          # tap (kh=0, kw=0)
        for t in range(1, 9):
            kh, kw = divmod(t, 3)
            v4 = v4 + yp[:, kh:kh + H, kw:kw + W, 2 * t:2 * t + 2]
        v4 = v4.reshape(B * HW, 2) + b2_ref[...]
        v6 = v4 * jax.nn.sigmoid(v4)                       # SiLU, (B*HW, 2)

        # ---- stage 3: stride-2 2x2 conv-transpose == 2 -> 8 expansion on the VPU ----
        z = (v6[:, 0:1] * w3_ref[0:1, :]
             + v6[:, 1:2] * w3_ref[1:2, :]
             + b3_ref[...])                                # (B*HW, 8) = (kh, kw, co)
        o_ref[...] = z.reshape(B, HW, 8)

    return kernel


def _pick_batch_block(N, HW):
    # Largest divisor of N that (a) keeps the per-step x block a few MiB and
    # (b) leaves >= 2 grid steps when possible so v7x's two TensorCores both work.
    vmem_cap = max(1, (4 << 20) // (HW * 128 * 4))
    best = 1
    for b in range(1, N + 1):
        if N % b:
            continue
        if b > vmem_cap:
            break
        if N // b >= 2 or N == 1:
            best = b
    return best


def model_forward(x_nchw, params, block_n=None):
    w1, b1, w2, b2, w3, b3 = params
    N, Cin, H, W = x_nchw.shape
    assert Cin == 128
    HW = H * W

    if block_n is None:
        block_n = _pick_batch_block(N, HW)
    assert N % block_n == 0

    # NCHW -> pixel-flat, channels on the 128-lane axis   (glue)
    x = jnp.transpose(x_nchw, (0, 2, 3, 1)).astype(jnp.float32).reshape(N, HW, 128)

    # layer-1 weights: 1x1 conv-transpose == matmul (Cin, Cout)
    w1mat = w1[:, :, 0, 0]                                  # (128, 128)
    b1r = b1.reshape(1, 128)

    # layer-2 weights: transposed conv (s=1, p=1) == conv with spatially flipped
    # kernel; pack all 9 taps as (Cin=128, kh*kw*co=18) so the kernel uses a plain
    # (M,K)@(K,N) dot in the orientation the MXU wants.
    w2flip = w2[:, :, ::-1, ::-1]                           # (128, 2, 3, 3)
    w2p = jnp.transpose(w2flip, (0, 2, 3, 1)).reshape(128, 18)
    b2r = b2.reshape(1, 2)

    # layer-3 weights: stride-2 2x2 conv-transpose == per-pixel 2 -> (kh, kw, co)=8
    w3r = jnp.transpose(w3, (0, 2, 3, 1)).reshape(2, 8)
    b3r = jnp.tile(b3, (4,)).reshape(1, 8)                  # co fastest

    kernel = make_fused_kernel(H, W, block_n)
    z = pl.pallas_call(
        kernel,
        out_shape=jax.ShapeDtypeStruct((N, HW, 8), jnp.float32),
        grid=(N // block_n,),
        in_specs=[
            pl.BlockSpec((block_n, HW, 128), lambda n: (n, 0, 0)),  # x (batch block)
            pl.BlockSpec((128, 128), lambda n: (0, 0)),             # w1
            pl.BlockSpec((1, 128), lambda n: (0, 0)),               # b1
            pl.BlockSpec((128, 18), lambda n: (0, 0)),              # w2 packed
            pl.BlockSpec((1, 2), lambda n: (0, 0)),                 # b2
            pl.BlockSpec((2, 8), lambda n: (0, 0)),                 # w3
            pl.BlockSpec((1, 8), lambda n: (0, 0)),                 # b3
        ],
        out_specs=pl.BlockSpec((block_n, HW, 8), lambda n: (n, 0, 0)),
        scratch_shapes=[pltpu.VMEM((block_n, H + 2, W + 2, 18), jnp.float32)],
        compiler_params=pltpu.CompilerParams(
            dimension_semantics=("parallel",)),
    )(x, w1mat, b1r, w2p, b2r, w3r, b3r)

    # (N, H*W, 8) -> (N, H, W, kh, kw, co) -> (N, 2H, 2W, co) -> NCHW   (glue)
    y = z.reshape(N, H, W, 2, 2, 2)
    y = jnp.transpose(y, (0, 1, 3, 2, 4, 5))                # (N, H, kh, W, kw, co)
    y = y.reshape(N, 2 * H, 2 * W, 2)
    return jnp.transpose(y, (0, 3, 1, 2))                   # (N, 2, 2H, 2W)


def init_params(key):
    k1, k2, k3, k4, k5, k6 = jax.random.split(key, 6)
    w1 = 0.05 * jax.random.normal(k1, (128, 128, 1, 1), jnp.float32)  # (Cin,Cout,kH,kW)
    b1 = 0.05 * jax.random.normal(k2, (128,), jnp.float32)
    w2 = 0.05 * jax.random.normal(k3, (128, 2, 3, 3), jnp.float32)
    b2 = 0.05 * jax.random.normal(k4, (2,), jnp.float32)
    w3 = 0.05 * jax.random.normal(k5, (2, 2, 2, 2), jnp.float32)
    b3 = 0.05 * jax.random.normal(k6, (2,), jnp.float32)
    return (w1, b1, w2, b2, w3, b3)


if __name__ == "__main__":
    key = jax.random.PRNGKey(0)
    kx, kp = jax.random.split(key)
    # Small input consistent with the module (Cin fixed at 128, spatial 12x12;
    # batch 4 so batch-blocking yields B_blk=2 with a 2-step parallel grid).
    x = jax.random.normal(kx, (4, 128, 12, 12), jnp.float32)   # NCHW
    params = init_params(kp)

    fwd = jax.jit(model_forward)
    out = jax.block_until_ready(fwd(x, params))
    assert out.shape == (4, 2, 24, 24), out.shape
    assert bool(jnp.all(jnp.isfinite(out)))
    print("KERNEL_OK")
</pallas_src>

<mosaic_0001>
module attributes {stable_mosaic.version = 11 : i64} {
  func.func @kernel(%arg0: i32, %arg1: memref<2x144x128xf32, #tpu.memory_space<vmem>>, %arg2: memref<128x128xf32, #tpu.memory_space<vmem>>, %arg3: memref<1x128xf32, #tpu.memory_space<vmem>>, %arg4: memref<128x18xf32, #tpu.memory_space<vmem>>, %arg5: memref<1x2xf32, #tpu.memory_space<vmem>>, %arg6: memref<2x8xf32, #tpu.memory_space<vmem>>, %arg7: memref<1x8xf32, #tpu.memory_space<vmem>>, %arg8: memref<2x144x8xf32, #tpu.memory_space<vmem>>, %arg9: memref<2x14x14x18xf32, #tpu.memory_space<vmem>>) attributes {dimension_semantics = [#tpu.dimension_semantics<parallel>], iteration_bounds = array<i64: 2>, scalar_prefetch = 0 : i64, scratch_operands = 1 : i64, tpu.core_type = #tpu.core_type<tc>, window_params = [{transform_indices = @transform_0, window_bounds = array<i64: 2, 144, 128>}, {pipeline_mode = #tpu.pipeline_mode<synchronous>, transform_indices = @transform_1, window_bounds = array<i64: 128, 128>}, {pipeline_mode = #tpu.pipeline_mode<synchronous>, transform_indices = @transform_2, window_bounds = array<i64: 1, 128>}, {pipeline_mode = #tpu.pipeline_mode<synchronous>, transform_indices = @transform_3, window_bounds = array<i64: 128, 18>}, {pipeline_mode = #tpu.pipeline_mode<synchronous>, transform_indices = @transform_4, window_bounds = array<i64: 1, 2>}, {pipeline_mode = #tpu.pipeline_mode<synchronous>, transform_indices = @transform_5, window_bounds = array<i64: 2, 8>}, {pipeline_mode = #tpu.pipeline_mode<synchronous>, transform_indices = @transform_6, window_bounds = array<i64: 1, 8>}, {transform_indices = @transform_7, window_bounds = array<i64: 2, 144, 8>}]} {
    %c0 = arith.constant 0 : index
    %c0_0 = arith.constant 0 : index
    %c0_1 = arith.constant 0 : index
    %0 = vector.load %arg1[%c0, %c0_0, %c0_1] : memref<2x144x128xf32, #tpu.memory_space<vmem>>, vector<2x144x128xf32>
    %1 = vector.shape_cast %0 : vector<2x144x128xf32> to vector<288x128xf32>
    %c0_2 = arith.constant 0 : index
    %c0_3 = arith.constant 0 : index
    %2 = vector.load %arg2[%c0_2, %c0_3] : memref<128x128xf32, #tpu.memory_space<vmem>>, vector<128x128xf32>
    %cst = arith.constant dense<0.000000e+00> : vector<288x128xf32>
    %3 = tpu.matmul %1, %2, %cst {dimension_numbers = #tpu.dot_dimension_numbers<[1], [0], [0], [1], [0, 0, 1, 1], [], []>} : vector<288x128xf32>, vector<128x128xf32>, vector<288x128xf32> -> vector<288x128xf32>
    %c0_4 = arith.constant 0 : index
    %c0_5 = arith.constant 0 : index
    %4 = vector.load %arg3[%c0_4, %c0_5] : memref<1x128xf32, #tpu.memory_space<vmem>>, vector<1x128xf32>
    %5 = vector.broadcast %4 : vector<1x128xf32> to vector<288x128xf32>
    %6 = arith.addf %3, %5 : vector<288x128xf32>
    %7 = arith.negf %6 : vector<288x128xf32>
    %8 = math.exp %7 : vector<288x128xf32>
    %cst_6 = arith.constant 1.000000e+00 : f32
    %9 = vector.broadcast %cst_6 : f32 to vector<288x128xf32>
    %10 = arith.addf %9, %8 : vector<288x128xf32>
    %11 = arith.divf %9, %10 : vector<288x128xf32>
    %12 = arith.mulf %6, %11 : vector<288x128xf32>
    %c0_7 = arith.constant 0 : index
    %c0_8 = arith.constant 0 : index
    %13 = vector.load %arg4[%c0_7, %c0_8] : memref<128x18xf32, #tpu.memory_space<vmem>>, vector<128x18xf32>
    %cst_9 = arith.constant dense<0.000000e+00> : vector<288x18xf32>
    %14 = tpu.matmul %12, %13, %cst_9 {dimension_numbers = #tpu.dot_dimension_numbers<[1], [0], [0], [1], [0, 0, 1, 1], [], []>} : vector<288x128xf32>, vector<128x18xf32>, vector<288x18xf32> -> vector<288x18xf32>
    %cst_10 = arith.constant 0.000000e+00 : f32
    %15 = vector.broadcast %cst_10 : f32 to vector<2x14x14x18xf32>
    %c0_11 = arith.constant 0 : index
    %c0_12 = arith.constant 0 : index
    %c0_13 = arith.constant 0 : index
    %c0_14 = arith.constant 0 : index
    %16 = vector.load %arg9[%c0_11, %c0_12, %c0_13, %c0_14] : memref<2x14x14x18xf32, #tpu.memory_space<vmem>>, vector<2x14x14x18xf32>
    tpu.vector_store %arg9[%c0_11, %c0_12, %c0_13, %c0_14], %15 {strides = array<i32>} : memref<2x14x14x18xf32, #tpu.memory_space<vmem>>, vector<2x14x14x18xf32>,
    %17 = vector.shape_cast %14 : vector<288x18xf32> to vector<2x12x12x18xf32>
    %c0_15 = arith.constant 0 : index
    %c1 = arith.constant 1 : index
    %c1_16 = arith.constant 1 : index
    %c0_17 = arith.constant 0 : index
    %18 = vector.load %arg9[%c0_15, %c1, %c1_16, %c0_17] : memref<2x14x14x18xf32, #tpu.memory_space<vmem>>, vector<2x12x12x18xf32>
    tpu.vector_store %arg9[%c0_15, %c1, %c1_16, %c0_17], %17 {strides = array<i32>} : memref<2x14x14x18xf32, #tpu.memory_space<vmem>>, vector<2x12x12x18xf32>,
    %c0_18 = arith.constant 0 : index
    %c0_19 = arith.constant 0 : index
    %c0_20 = arith.constant 0 : index
    %c0_21 = arith.constant 0 : index
    %19 = vector.load %arg9[%c0_18, %c0_19, %c0_20, %c0_21] : memref<2x14x14x18xf32, #tpu.memory_space<vmem>>, vector<2x14x14x18xf32>
    %20 = vector.extract_strided_slice %19 {offsets = [0, 0, 0, 0], sizes = [2, 12, 12, 2], strides = [1, 1, 1, 1]} : vector<2x14x14x18xf32> to vector<2x12x12x2xf32>
    %21 = vector.extract_strided_slice %19 {offsets = [0, 0, 1, 2], sizes = [2, 12, 12, 2], strides = [1, 1, 1, 1]} : vector<2x14x14x18xf32> to vector<2x12x12x2xf32>
    %22 = arith.addf %20, %21 : vector<2x12x12x2xf32>
    %23 = vector.extract_strided_slice %19 {offsets = [0, 0, 2, 4], sizes = [2, 12, 12, 2], strides = [1, 1, 1, 1]} : vector<2x14x14x18xf32> to vector<2x12x12x2xf32>
    %24 = arith.addf %22, %23 : vector<2x12x12x2xf32>
    %25 = vector.extract_strided_slice %19 {offsets = [0, 1, 0, 6], sizes = [2, 12, 12, 2], strides = [1, 1, 1, 1]} : vector<2x14x14x18xf32> to vector<2x12x12x2xf32>
    %26 = arith.addf %24, %25 : vector<2x12x12x2xf32>
    %27 = vector.extract_strided_slice %19 {offsets = [0, 1, 1, 8], sizes = [2, 12, 12, 2], strides = [1, 1, 1, 1]} : vector<2x14x14x18xf32> to vector<2x12x12x2xf32>
    %28 = arith.addf %26, %27 : vector<2x12x12x2xf32>
    %29 = vector.extract_strided_slice %19 {offsets = [0, 1, 2, 10], sizes = [2, 12, 12, 2], strides = [1, 1, 1, 1]} : vector<2x14x14x18xf32> to vector<2x12x12x2xf32>
    %30 = arith.addf %28, %29 : vector<2x12x12x2xf32>
    %31 = vector.extract_strided_slice %19 {offsets = [0, 2, 0, 12], sizes = [2, 12, 12, 2], strides = [1, 1, 1, 1]} : vector<2x14x14x18xf32> to vector<2x12x12x2xf32>
    %32 = arith.addf %30, %31 : vector<2x12x12x2xf32>
    %33 = vector.extract_strided_slice %19 {offsets = [0, 2, 1, 14], sizes = [2, 12, 12, 2], strides = [1, 1, 1, 1]} : vector<2x14x14x18xf32> to vector<2x12x12x2xf32>
    %34 = arith.addf %32, %33 : vector<2x12x12x2xf32>
    %35 = vector.extract_strided_slice %19 {offsets = [0, 2, 2, 16], sizes = [2, 12, 12, 2], strides = [1, 1, 1, 1]} : vector<2x14x14x18xf32> to vector<2x12x12x2xf32>
    %36 = arith.addf %34, %35 : vector<2x12x12x2xf32>
    %37 = vector.shape_cast %36 : vector<2x12x12x2xf32> to vector<288x2xf32>
    %c0_22 = arith.constant 0 : index
    %c0_23 = arith.constant 0 : index
    %38 = vector.load %arg5[%c0_22, %c0_23] : memref<1x2xf32, #tpu.memory_space<vmem>>, vector<1x2xf32>
    %39 = vector.broadcast %38 : vector<1x2xf32> to vector<288x2xf32>
    %40 = arith.addf %37, %39 : vector<288x2xf32>
    %41 = arith.negf %40 : vector<288x2xf32>
    %42 = math.exp %41 : vector<288x2xf32>
    %cst_24 = arith.constant 1.000000e+00 : f32
    %43 = vector.broadcast %cst_24 : f32 to vector<288x2xf32>
    %44 = arith.addf %43, %42 : vector<288x2xf32>
    %45 = arith.divf %43, %44 : vector<288x2xf32>
    %46 = arith.mulf %40, %45 : vector<288x2xf32>
    %47 = vector.extract_strided_slice %46 {offsets = [0, 0], sizes = [288, 1], strides = [1, 1]} : vector<288x2xf32> to vector<288x1xf32>
    %c0_25 = arith.constant 0 : index
    %c0_26 = arith.constant 0 : index
    %48 = vector.load %arg6[%c0_25, %c0_26] : memref<2x8xf32, #tpu.memory_space<vmem>>, vector<1x8xf32>
    %49 = vector.broadcast %47 : vector<288x1xf32> to vector<288x8xf32>
    %50 = vector.broadcast %48 : vector<1x8xf32> to vector<288x8xf32>
    %51 = arith.mulf %49, %50 : vector<288x8xf32>
    %52 = vector.extract_strided_slice %46 {offsets = [0, 1], sizes = [288, 1], strides = [1, 1]} : vector<288x2xf32> to vector<288x1xf32>
    %c1_27 = arith.constant 1 : index
    %c0_28 = arith.constant 0 : index
    %53 = vector.load %arg6[%c1_27, %c0_28] : memref<2x8xf32, #tpu.memory_space<vmem>>, vector<1x8xf32>
    %54 = vector.broadcast %52 : vector<288x1xf32> to vector<288x8xf32>
    %55 = vector.broadcast %53 : vector<1x8xf32> to vector<288x8xf32>
    %56 = arith.mulf %54, %55 : vector<288x8xf32>
    %57 = arith.addf %51, %56 : vector<288x8xf32>
    %c0_29 = arith.constant 0 : index
    %c0_30 = arith.constant 0 : index
    %58 = vector.load %arg7[%c0_29, %c0_30] : memref<1x8xf32, #tpu.memory_space<vmem>>, vector<1x8xf32>
    %59 = vector.broadcast %58 : vector<1x8xf32> to vector<288x8xf32>
    %60 = arith.addf %57, %59 : vector<288x8xf32>
    %61 = vector.shape_cast %60 : vector<288x8xf32> to vector<2x144x8xf32>
    %c0_31 = arith.constant 0 : index
    %c0_32 = arith.constant 0 : index
    %c0_33 = arith.constant 0 : index
    %62 = vector.load %arg8[%c0_31, %c0_32, %c0_33] : memref<2x144x8xf32, #tpu.memory_space<vmem>>, vector<2x144x8xf32>
    tpu.vector_store %arg8[%c0_31, %c0_32, %c0_33], %61 {strides = array<i32>} : memref<2x144x8xf32, #tpu.memory_space<vmem>>, vector<2x144x8xf32>,
    return
  }
  func.func @transform_0(%arg0: i32) -> (i32, i32, i32) {
    %c0_i32 = arith.constant 0 : i32
    %c0_i32_0 = arith.constant 0 : i32
    %c0_i32_1 = arith.constant 0 : i32
    return %arg0, %c0_i32, %c0_i32_0 : i32, i32, i32
  }
  func.func @transform_1(%arg0: i32) -> (i32, i32) {
    %c0_i32 = arith.constant 0 : i32
    %c0_i32_0 = arith.constant 0 : i32
    %c0_i32_1 = arith.constant 0 : i32
    return %c0_i32, %c0_i32_0 : i32, i32
  }
  func.func @transform_2(%arg0: i32) -> (i32, i32) {
    %c0_i32 = arith.constant 0 : i32
    %c0_i32_0 = arith.constant 0 : i32
    %c0_i32_1 = arith.constant 0 : i32
    return %c0_i32, %c0_i32_0 : i32, i32
  }
  func.func @transform_3(%arg0: i32) -> (i32, i32) {
    %c0_i32 = arith.constant 0 : i32
    %c0_i32_0 = arith.constant 0 : i32
    %c0_i32_1 = arith.constant 0 : i32
    return %c0_i32, %c0_i32_0 : i32, i32
  }
  func.func @transform_4(%arg0: i32) -> (i32, i32) {
    %c0_i32 = arith.constant 0 : i32
    %c0_i32_0 = arith.constant 0 : i32
    %c0_i32_1 = arith.constant 0 : i32
    return %c0_i32, %c0_i32_0 : i32, i32
  }
  func.func @transform_5(%arg0: i32) -> (i32, i32) {
    %c0_i32 = arith.constant 0 : i32
    %c0_i32_0 = arith.constant 0 : i32
    %c0_i32_1 = arith.constant 0 : i32
    return %c0_i32, %c0_i32_0 : i32, i32
  }
  func.func @transform_6(%arg0: i32) -> (i32, i32) {
    %c0_i32 = arith.constant 0 : i32
    %c0_i32_0 = arith.constant 0 : i32
    %c0_i32_1 = arith.constant 0 : i32
    return %c0_i32, %c0_i32_0 : i32, i32
  }
  func.func @transform_7(%arg0: i32) -> (i32, i32, i32) {
    %c0_i32 = arith.constant 0 : i32
    %c0_i32_0 = arith.constant 0 : i32
    %c0_i32_1 = arith.constant 0 : i32
    return %arg0, %c0_i32, %c0_i32_0 : i32, i32, i32
  }
}

</mosaic_0001>

<llo_original>
// kernel: tile.9
$region0: #{tile.9}
  %s0 = inlined_call_operand.vmem [shape: f32[4,2], index: 0, kind: input, shape index: {}]
  %s1 = inlined_call_operand.vmem [shape: f32[1,8], index: 1, kind: output, shape index: {}]
  $region1: #{tile.9} parent=0
    #allocation0 [shape = 'u8[4096]{0}', space=vmem, size = 0x1000, scoped, tag = 'scoped mem for output reshape']
    #allocation1 [shape = 'u8[4096]{0}', space=vmem, size = 0x1000, scoped, tag = 'scoped mem for input reshape']
    %s3 = sshll.u32 1, 4
    %s4 = ssub.s32 %s3, 1
    %v5 = vld [vmem:[%s0] sm:%s4]
    %6 = vst [vmem:[#allocation1] sm:%s4] %v5
    %v7 = vld [vmem:[#allocation1] sm:$0x1]
    %vm8 = vcmask 15360
    %9 = vst.msk [vmem:[#allocation0] sm:$0x1] %vm8, %v7
    %s10 = scalar_lea.vmem [#allocation1], 3
    %v11 = vld [vmem:[%s10] sm:$0x1]
    %12 = vrot.lane.b32.xlu0 %v11, 6
    %v13 = vpop.permute.xlu0 %12
    %vm14 = vcmask 64560
    %15 = vst.msk [vmem:[#allocation0] sm:$0x1] %vm14, %v13
    %s16 = scalar_lea.vmem [#allocation1], 2
    %v17 = vld [vmem:[%s16] sm:$0x1]
    %18 = vrot.lane.b32.xlu0 %v17, 4
    %v19 = vpop.permute.xlu0 %18
    %vm20 = vcmask 48160
    %21 = vst.msk [vmem:[#allocation0] sm:$0x1] %vm20, %v19
    %s22 = scalar_lea.vmem [#allocation1], 1
    %v23 = vld [vmem:[%s22] sm:$0x1]
    %24 = vrot.lane.b32.xlu0 %v23, 2
    %v25 = vpop.permute.xlu0 %24
    %vm26 = vcmask 31760
    %27 = vst.msk [vmem:[#allocation0] sm:$0x1] %vm26, %v25
    %s29 = sshll.u32 1, 1
    %s30 = ssub.s32 %s29, 1
    %v32 = vld [vmem:[#allocation0] sm:%s30]
    %s33 = sshll.u32 1, 1
    %s34 = ssub.s32 %s33, 1
    %35 = vst [vmem:[%s1] sm:%s34] %v32

// kernel: tile.8
$region0: #{tile.8}
  #allocation0 [shape = 's32[1]{0}', space=sflag, size = 0x4, scoped, tag = 'scoped memory for tile.8']
  %s0 = inlined_call_operand.vmem [shape: f32[2], index: 0, kind: input, shape index: {}]
  %s1 = inlined_call_operand.vmem [shape: f32[4,2], index: 1, kind: output, shape index: {}]
  // Predicated region
  $region2: #{tile.8} parent=0 // pred_check
    _
  $region3: #{tile.8} parent=0 // pred_check_branch
    %3 = sbr.rel (0) target = $region5
  $region4: #{tile.8} parent=0 // pred_region
    _
  $region5: #{tile.8} parent=0 // pred_fallthru
    _
  %v4 = vld [vmem:[%s0] ss:$0 sm:$0xff]
  %5 = vst [vmem:[%s1] sm:$0xf] %v4

// kernel: model_forward.1
$region0: #{model_forward.1}
  #allocation0 [shape = 'u32[]', space=smem, size = 0x4, offset = 0x4, fixed_abs, tag = 'smem constant byte address 0x4 - core index']
  #allocation1 [shape = 'u32[144,128]{1,0:T(1,128)}', space=vmem, size = 0x12000, scoped, tag = 'internal scratch']
  #allocation2 [shape = 'f32[2,14,14,18]{3,2,1,0:T(8,128)}', space=vmem, size = 0x38000, scoped, tag = 'scratch operand']
  %s0 = inlined_call_operand.vmem [shape: f32[4,144,128], index: 0, kind: input, shape index: {}]
  %s1 = inlined_call_operand.vmem [shape: f32[128,128], index: 1, kind: input, shape index: {}]
  %s2 = inlined_call_operand.vmem [shape: f32[1,128], index: 2, kind: input, shape index: {}]
  %s3 = inlined_call_operand.vmem [shape: f32[128,18], index: 3, kind: input, shape index: {}]
  %s4 = inlined_call_operand.vmem [shape: f32[1,2], index: 4, kind: input, shape index: {}]
  %s5 = inlined_call_operand.vmem [shape: f32[2,8], index: 5, kind: input, shape index: {}]
  %s6 = inlined_call_operand.vmem [shape: f32[1,8], index: 6, kind: input, shape index: {}]
  %s7 = inlined_call_operand.vmem [shape: f32[4,144,8], index: 7, kind: output, shape index: {}]
  %s8 = sld [smem:[#allocation0]]
  $region61: #{model_forward.1} parent=0
    _
  %s10 = ssub.s32 1, %s8
  %s11 = scalar_select 0, %s10, %s8
  loop: start=0, step=1, limit=4
  $region2: #{model_forward.1} parent=0 // loop_pre_header
    _
  $region3: #{model_forward.1} parent=0 // loop_header
    %s13 = sphi 0, %s17
    %p14 = scmp.ge.s32.totalorder %s13, 4
    %s23 = sphi 0, %s25
    %s26 = sphi 0, %s23
    %s27 = sphi 0, %s26
    %s43 = sphi 0, %s27
    %s47 = sphi 0, %s47
    %s49 = sphi 0, %s47
    %s50 = sphi 0, %s49
    %s64 = sphi 0, %s50
    %s68 = sphi 0, %s68
    %s70 = sphi 0, %s68
    %s71 = sphi 0, %s70
    %s85 = sphi 0, %s71
    %s89 = sphi 0, %s89
    %s91 = sphi 0, %s89
    %s92 = sphi 0, %s91
    %s106 = sphi 0, %s92
    %s110 = sphi 0, %s110
    %s112 = sphi 0, %s110
    %s113 = sphi 0, %s112
    %s127 = sphi 0, %s113
    %s131 = sphi 0, %s131
    %s133 = sphi 0, %s131
    %s134 = sphi 0, %s133
    %s148 = sphi 0, %s134
    %s152 = sphi 0, %s152
    %s154 = sphi 0, %s152
    %s155 = sphi 0, %s154
    %s169 = sphi 0, %s155
    %s175 = sphi 0, %s177
    %s178 = sphi 0, %s175
    %s179 = sphi 0, %s178
    %s195 = sphi 0, %s179
  $region4: #{model_forward.1} parent=0 // loop_header_branch
    %16 = sbr.rel (%p14) target = $region8
  $region5: #{model_forward.1} parent=0 // loop_body
    %s18 = ssub.s32 %s13, 1
    %s19 = ssub.s32 %s13, 2
    %s20 = sadd.s32 %s13, 1
    %s21 = ssub.s32 %s13, %s20
    %p22 = scmp.eq.s32.totalorder %s21, 0
    %s24 = sadd.s32 %s23, 1
    %s25 = scalar_select %p22, %s23, %s24
    %p28 = pneg %p22
    %p29 = scmp.eq.s32.totalorder %s13, 1
    %p30 = por %p28, %p29
    %p31 = scmp.ne.s32.totalorder %s23, %s26
    %p32 = scmp.eq.s32.totalorder %s13, 0
    %p33 = por %p31, %p32
    %p34 = scmp.ne.s32.totalorder %s23, %s26
    %p35 = scmp.eq.s32.totalorder %s18, 1
    %p36 = por %p34, %p35
    %p37 = scmp.ne.s32.totalorder %s26, %s27
    %p38 = scmp.eq.s32.totalorder %s18, 0
    %p39 = por %p37, %p38
    %p40 = scmp.ne.s32.totalorder %s26, %s27
    %p41 = scmp.eq.s32.totalorder %s19, 1
    %p42 = por %p40, %p41
    %p44 = scmp.ne.s32.totalorder %s27, %s43
    %p45 = scmp.eq.s32.totalorder %s19, 0
    %p46 = por %p44, %p45
    %s48 = sadd.s32 %s47, 1
    %p51 = scmp.eq.s32.totalorder %s13, 1
    %p52 = scmp.ne.s32.totalorder %s47, %s49
    %p53 = scmp.eq.s32.totalorder %s13, 0
    %p54 = por %p52, %p53
    %p55 = scmp.ne.s32.totalorder %s47, %s49
    %p56 = scmp.eq.s32.totalorder %s18, 1
    %p57 = por %p55, %p56
    %p58 = scmp.ne.s32.totalorder %s49, %s50
    %p59 = scmp.eq.s32.totalorder %s18, 0
    %p60 = por %p58, %p59
    %p61 = scmp.ne.s32.totalorder %s49, %s50
    %p62 = scmp.eq.s32.totalorder %s19, 1
    %p63 = por %p61, %p62
    %p65 = scmp.ne.s32.totalorder %s50, %s64
    %p66 = scmp.eq.s32.totalorder %s19, 0
    %p67 = por %p65, %p66
    %s69 = sadd.s32 %s68, 1
    %p72 = scmp.eq.s32.totalorder %s13, 1
    %p73 = scmp.ne.s32.totalorder %s68, %s70
    %p74 = scmp.eq.s32.totalorder %s13, 0
    %p75 = por %p73, %p74
    %p76 = scmp.ne.s32.totalorder %s68, %s70
    %p77 = scmp.eq.s32.totalorder %s18, 1
    %p78 = por %p76, %p77
    %p79 = scmp.ne.s32.totalorder %s70, %s71
    %p80 = scmp.eq.s32.totalorder %s18, 0
    %p81 = por %p79, %p80
    %p82 = scmp.ne.s32.totalorder %s70, %s71
    %p83 = scmp.eq.s32.totalorder %s19, 1
    %p84 = por %p82, %p83
    %p86 = scmp.ne.s32.totalorder %s71, %s85
    %p87 = scmp.eq.s32.totalorder %s19, 0
    %p88 = por %p86, %p87
    %s90 = sadd.s32 %s89, 1
    %p93 = scmp.eq.s32.totalorder %s13, 1
    %p94 = scmp.ne.s32.totalorder %s89, %s91
    %p95 = scmp.eq.s32.totalorder %s13, 0
    %p96 = por %p94, %p95
    %p97 = scmp.ne.s32.totalorder %s89, %s91
    %p98 = scmp.eq.s32.totalorder %s18, 1
    %p99 = por %p97, %p98
    %p100 = scmp.ne.s32.totalorder %s91, %s92
    %p101 = scmp.eq.s32.totalorder %s18, 0
    %p102 = por %p100, %p101
    %p103 = scmp.ne.s32.totalorder %s91, %s92
    %p104 = scmp.eq.s32.totalorder %s19, 1
    %p105 = por %p103, %p104
    %p107 = scmp.ne.s32.totalorder %s92, %s106
    %p108 = scmp.eq.s32.totalorder %s19, 0
    %p109 = por %p107, %p108
    %s111 = sadd.s32 %s110, 1
    %p114 = scmp.eq.s32.totalorder %s13, 1
    %p115 = scmp.ne.s32.totalorder %s110, %s112
    %p116 = scmp.eq.s32.totalorder %s13, 0
    %p117 = por %p115, %p116
    %p118 = scmp.ne.s32.totalorder %s110, %s112
    %p119 = scmp.eq.s32.totalorder %s18, 1
    %p120 = por %p118, %p119
    %p121 = scmp.ne.s32.totalorder %s112, %s113
    %p122 = scmp.eq.s32.totalorder %s18, 0
    %p123 = por %p121, %p122
    %p124 = scmp.ne.s32.totalorder %s112, %s113
    %p125 = scmp.eq.s32.totalorder %s19, 1
    %p126 = por %p124, %p125
    %p128 = scmp.ne.s32.totalorder %s113, %s127
    %p129 = scmp.eq.s32.totalorder %s19, 0
    %p130 = por %p128, %p129
    %s132 = sadd.s32 %s131, 1
    %p135 = scmp.eq.s32.totalorder %s13, 1
    %p136 = scmp.ne.s32.totalorder %s131, %s133
    %p137 = scmp.eq.s32.totalorder %s13, 0
    %p138 = por %p136, %p137
    %p139 = scmp.ne.s32.totalorder %s131, %s133
    %p140 = scmp.eq.s32.totalorder %s18, 1
    %p141 = por %p139, %p140
    %p142 = scmp.ne.s32.totalorder %s133, %s134
    %p143 = scmp.eq.s32.totalorder %s18, 0
    %p144 = por %p142, %p143
    %p145 = scmp.ne.s32.totalorder %s133, %s134
    %p146 = scmp.eq.s32.totalorder %s19, 1
    %p147 = por %p145, %p146
    %p149 = scmp.ne.s32.totalorder %s134, %s148
    %p150 = scmp.eq.s32.totalorder %s19, 0
    %p151 = por %p149, %p150
    %s153 = sadd.s32 %s152, 1
    %p156 = scmp.eq.s32.totalorder %s13, 1
    %p157 = scmp.ne.s32.totalorder %s152, %s154
    %p158 = scmp.eq.s32.totalorder %s13, 0
    %p159 = por %p157, %p158
    %p160 = scmp.ne.s32.totalorder %s152, %s154
    %p161 = scmp.eq.s32.totalorder %s18, 1
    %p162 = por %p160, %p161
    %p163 = scmp.ne.s32.totalorder %s154, %s155
    %p164 = scmp.eq.s32.totalorder %s18, 0
    %p165 = por %p163, %p164
    %p166 = scmp.ne.s32.totalorder %s154, %s155
    %p167 = scmp.eq.s32.totalorder %s19, 1
    %p168 = por %p166, %p167
    %p170 = scmp.ne.s32.totalorder %s155, %s169
    %p171 = scmp.eq.s32.totalorder %s19, 0
    %p172 = por %p170, %p171
    %s173 = ssub.s32 %s13, %s20
    %p174 = scmp.eq.s32.totalorder %s173, 0
    %s176 = sadd.s32 %s175, 1
    %s177 = scalar_select %p174, %s175, %s176
    %p180 = pneg %p174
    %p181 = scmp.eq.s32.totalorder %s13, 1
    %p182 = por %p180, %p181
    %p183 = scmp.ne.s32.totalorder %s175, %s178
    %p184 = scmp.eq.s32.totalorder %s13, 0
    %p185 = por %p183, %p184
    %p186 = scmp.ne.s32.totalorder %s175, %s178
    %p187 = scmp.eq.s32.totalorder %s18, 1
    %p188 = por %p186, %p187
    %p189 = scmp.ne.s32.totalorder %s178, %s179
    %p190 = scmp.eq.s32.totalorder %s18, 0
    %p191 = por %p189, %p190
    %p192 = scmp.ne.s32.totalorder %s178, %s179
    %p193 = scmp.eq.s32.totalorder %s19, 1
    %p194 = por %p192, %p193
    %p196 = scmp.ne.s32.totalorder %s179, %s195
    %p197 = scmp.eq.s32.totalorder %s19, 0
    %p198 = por %p196, %p197
    %p199 = scmp.le.s32.totalorder 1, %s13
    %p200 = scmp.lt.s32.totalorder %s13, 3
    %p201 = pnand %p199, %p200
    %p202 = pneg %p201
    // Predicated region
    $region9: #{model_forward.1} parent=5 // pred_check
      _
    $region10: #{model_forward.1} parent=5 // pred_check_branch
      %204 = sbr.rel (%p201) target = $region12
    $region11: #{model_forward.1} parent=5 // pred_region
      %s205 = ssub.s32 %s13, 1
      // Predicated region
      $region13: #{model_forward.1} parent=11 // pred_check
        %p206 = pneg %p60
      $region14: #{model_forward.1} parent=11 // pred_check_branch
        %208 = sbr.rel (%p206) target = $region16
      $region15: #{model_forward.1} parent=11 // pred_region
        _
      $region16: #{model_forward.1} parent=11 // pred_fallthru
        _
      // Predicated region
      $region17: #{model_forward.1} parent=11 // pred_check
        %p209 = pneg %p81
      $region18: #{model_forward.1} parent=11 // pred_check_branch
        %211 = sbr.rel (%p209) target = $region20
      $region19: #{model_forward.1} parent=11 // pred_region
        _
      $region20: #{model_forward.1} parent=11 // pred_fallthru
        _
      // Predicated region
      $region21: #{model_forward.1} parent=11 // pred_check
        %p212 = pneg %p102
      $region22: #{model_forward.1} parent=11 // pred_check_branch
        %214 = sbr.rel (%p212) target = $region24
      $region23: #{model_forward.1} parent=11 // pred_region
        _
      $region24: #{model_forward.1} parent=11 // pred_fallthru
        _
      // Predicated region
      $region25: #{model_forward.1} parent=11 // pred_check
        %p215 = pneg %p123
      $region26: #{model_forward.1} parent=11 // pred_check_branch
        %217 = sbr.rel (%p215) target = $region28
      $region27: #{model_forward.1} parent=11 // pred_region
        _
      $region28: #{model_forward.1} parent=11 // pred_fallthru
        _
      // Predicated region
      $region29: #{model_forward.1} parent=11 // pred_check
        %p218 = pneg %p144
      $region30: #{model_forward.1} parent=11 // pred_check_branch
        %220 = sbr.rel (%p218) target = $region32
      $region31: #{model_forward.1} parent=11 // pred_region
        _
      $region32: #{model_forward.1} parent=11 // pred_fallthru
        _
      // Predicated region
      $region33: #{model_forward.1} parent=11 // pred_check
        %p221 = pneg %p165
      $region34: #{model_forward.1} parent=11 // pred_check_branch
        %223 = sbr.rel (%p221) target = $region36
      $region35: #{model_forward.1} parent=11 // pred_region
        _
      $region36: #{model_forward.1} parent=11 // pred_fallthru
        _
    $region12: #{model_forward.1} parent=5 // pred_fallthru
      _
    %p224 = scmp.lt.s32.totalorder %s13, 2
    // Predicated region
    $region37: #{model_forward.1} parent=5 // pred_check
      %p225 = pneg %p224
    $region38: #{model_forward.1} parent=5 // pred_check_branch
      %227 = sbr.rel (%p225) target = $region40
    $region39: #{model_forward.1} parent=5 // pred_region
      // Predicated region
      $region41: #{model_forward.1} parent=39 // pred_check
        %p228 = pneg %p33
      $region42: #{model_forward.1} parent=39 // pred_check_branch
        %230 = sbr.rel (%p228) target = $region44
      $region43: #{model_forward.1} parent=39 // pred_region
        %s231 = smul.u32 2, %s13
        %p232 = scmp.lt.s32.totalorder %s231, 3
        %s233 = scalar_select %p232, %s231, 3
        %s234 = smul.addr %s233, 18
        %s235 = smul.addr %s234, 8
        %s236 = scalar_lea.vmem %s0, %s235
        %s237 = smul.u32 2, %s13
      $region44: #{model_forward.1} parent=39 // pred_fallthru
        _
    $region40: #{model_forward.1} parent=5 // pred_fallthru
      _
    %p238 = scmp.le.s32.totalorder 1, %s13
    %p239 = scmp.lt.s32.totalorder %s13, 3
    %p240 = pnand %p238, %p239
    %p241 = pneg %p240
    // Predicated region
    $region45: #{model_forward.1} parent=5 // pred_check
      _
    $region46: #{model_forward.1} parent=5 // pred_check_branch
      %243 = sbr.rel (%p240) target = $region48
    $region47: #{model_forward.1} parent=5 // pred_region
      %s244 = ssub.s32 %s13, 1
      %s245 = smul.u32 2, %s18
      %p246 = scmp.lt.s32.totalorder %s245, 3
      %s247 = scalar_select %p246, %s245, 3
      %s248 = smul.addr %s247, 18
      %s249 = smul.addr %s248, 8
      %s250 = scalar_lea.vmem %s0, %s249
      %p251 = pneg %p39
      %p252 = pneg %p36
      %p253 = pneg %p60
      %p254 = pneg %p57
      %p255 = pneg %p81
      %p256 = pneg %p78
      %p257 = pneg %p102
      %p258 = pneg %p99
      %p259 = pneg %p123
      %p260 = pneg %p120
      %p261 = pneg %p144
      %p262 = pneg %p141
      %p263 = pneg %p165
      %p264 = pneg %p162
      %p265 = pneg %p191
      %p266 = pneg %p188
      %s267 = smul.u32 2, %s18
      %p268 = scmp.lt.s32.totalorder %s267, 3
      %s269 = scalar_select %p268, %s267, 3
      %s270 = smul.addr %s269, 18
      %s271 = smul.addr %s270, 8
      %s272 = scalar_lea.vmem %s7, %s271
      %s273 = smul.u32 2, %s18
      %p274 = scmp.lt.s32.totalorder %s273, 3
      %s275 = scalar_select %p274, %s273, 3
      %s276 = smul.addr %s275, 18
      %s277 = smul.addr %s276, 8
      %s278 = scalar_lea.vmem %s0, %s277
      %s279 = smul.u32 2, %s18
      %s280 = smul.u32 2, %s18
      %p281 = scmp.lt.s32.totalorder %s280, 3
      %s282 = scalar_select %p281, %s280, 3
      %s283 = smul.addr %s282, 18
      %s284 = smul.addr %s283, 8
      %s285 = scalar_lea.vmem %s7, %s284
      %s286 = smul.u32 2, %s18
      %v287 = vld [vmem:[%s278] sm:$0xff]
      %v288 = vld [vmem:[%s278 + $0x8] sm:$0xff]
      %v289 = vld [vmem:[%s278 + $0x10] sm:$0xff]
      %v290 = vld [vmem:[%s278 + $0x18] sm:$0xff]
      %v291 = vld [vmem:[%s278 + $0x20] sm:$0xff]
      %v292 = vld [vmem:[%s278 + $0x28] sm:$0xff]
      %v293 = vld [vmem:[%s278 + $0x30] sm:$0xff]
      %v294 = vld [vmem:[%s278 + $0x38] sm:$0xff]
      %v295 = vld [vmem:[%s278 + $0x40] sm:$0xff]
      %v296 = vld [vmem:[%s278 + $0x48] sm:$0xff]
      %v297 = vld [vmem:[%s278 + $0x50] sm:$0xff]
      %v298 = vld [vmem:[%s278 + $0x58] sm:$0xff]
      %v299 = vld [vmem:[%s278 + $0x60] sm:$0xff]
      %v300 = vld [vmem:[%s278 + $0x68] sm:$0xff]
      %v301 = vld [vmem:[%s278 + $0x70] sm:$0xff]
      %v302 = vld [vmem:[%s278 + $0x78] sm:$0xff]
      %v303 = vld [vmem:[%s278 + $0x80] sm:$0xff]
      %v304 = vld [vmem:[%s278 + $0x88] sm:$0xff]
      %v305 = vld [vmem:[%s278 + $0x90] sm:$0xff]
      %v306 = vld [vmem:[%s278 + $0x98] sm:$0xff]
      %v307 = vld [vmem:[%s278 + $0xa0] sm:$0xff]
      %v308 = vld [vmem:[%s278 + $0xa8] sm:$0xff]
      %v309 = vld [vmem:[%s278 + $0xb0] sm:$0xff]
      %v310 = vld [vmem:[%s278 + $0xb8] sm:$0xff]
      %v311 = vld [vmem:[%s278 + $0xc0] sm:$0xff]
      %v312 = vld [vmem:[%s278 + $0xc8] sm:$0xff]
      %v313 = vld [vmem:[%s278 + $0xd0] sm:$0xff]
      %v314 = vld [vmem:[%s278 + $0xd8] sm:$0xff]
      %v315 = vld [vmem:[%s278 + $0xe0] sm:$0xff]
      %v316 = vld [vmem:[%s278 + $0xe8] sm:$0xff]
      %v317 = vld [vmem:[%s278 + $0xf0] sm:$0xff]
      %v318 = vld [vmem:[%s278 + $0xf8] sm:$0xff]
      %v319 = vld [vmem:[%s278 + $0x100] sm:$0xff]
      %v320 = vld [vmem:[%s278 + $0x108] sm:$0xff]
      %v321 = vld [vmem:[%s278 + $0x110] sm:$0xff]
      %v322 = vld [vmem:[%s278 + $0x118] sm:$0xff]
      %v323 = vld [vmem:[%s1] sm:$0xff]
      %v324 = vld [vmem:[%s1 + $0x8] sm:$0xff]
      %v325 = vld [vmem:[%s1 + $0x10] sm:$0xff]
      %v326 = vld [vmem:[%s1 + $0x18] sm:$0xff]
      %v327 = vld [vmem:[%s1 + $0x20] sm:$0xff]
      %v328 = vld [vmem:[%s1 + $0x28] sm:$0xff]
      %v329 = vld [vmem:[%s1 + $0x30] sm:$0xff]
      %v330 = vld [vmem:[%s1 + $0x38] sm:$0xff]
      %v331 = vld [vmem:[%s1 + $0x40] sm:$0xff]
      %v332 = vld [vmem:[%s1 + $0x48] sm:$0xff]
      %v333 = vld [vmem:[%s1 + $0x50] sm:$0xff]
      %v334 = vld [vmem:[%s1 + $0x58] sm:$0xff]
      %v335 = vld [vmem:[%s1 + $0x60] sm:$0xff]
      %v336 = vld [vmem:[%s1 + $0x68] sm:$0xff]
      %v337 = vld [vmem:[%s1 + $0x70] sm:$0xff]
      %v338 = vld [vmem:[%s1 + $0x78] sm:$0xff]
      %v339 = vld [vmem:[%s2] sm:$0x1]
      %v341 = vlaneseq
      %v342 = vshrl.u32 %v341, 7
      %v343 = vsub.s32 0, %v342
      %v344 = vrot.slane %v339, %v343
      %346 = vmatprep.subr.mxu0 0.0
      %347 = vmatpush1.msra.mxu0 %v338
      %348 = vmatprep.subr.mxu0 0.0
      %349 = vmatpush1.msra.mxu0 %v337
      %350 = vmatprep.subr.mxu0 0.0
      %351 = vmatpush1.msra.mxu0 %v336
      %352 = vmatprep.subr.mxu0 0.0
      %353 = vmatpush1.msra.mxu0 %v335
      %354 = vmatprep.subr.mxu0 0.0
      %355 = vmatpush1.msra.mxu0 %v334
      %356 = vmatprep.subr.mxu0 0.0
      %357 = vmatpush1.msra.mxu0 %v333
      %358 = vmatprep.subr.mxu0 0.0
      %359 = vmatpush1.msra.mxu0 %v332
      %360 = vmatprep.subr.mxu0 0.0
      %361 = vmatpush1.msra.mxu0 %v331
      %362 = vmatprep.subr.mxu0 0.0
      %363 = vmatpush1.msra.mxu0 %v330
      %364 = vmatprep.subr.mxu0 0.0
      %365 = vmatpush1.msra.mxu0 %v329
      %366 = vmatprep.subr.mxu0 0.0
      %367 = vmatpush1.msra.mxu0 %v328
      %368 = vmatprep.subr.mxu0 0.0
      %369 = vmatpush1.msra.mxu0 %v327
      %370 = vmatprep.subr.mxu0 0.0
      %371 = vmatpush1.msra.mxu0 %v326
      %372 = vmatprep.subr.mxu0 0.0
      %373 = vmatpush1.msra.mxu0 %v325
      %374 = vmatprep.subr.mxu0 0.0
      %375 = vmatpush1.msra.mxu0 %v324
      %376 = vmatprep.subr.mxu0 0.0
      %377 = vmatpush1.msra.mxu0 %v323
      %378 = vmatprep.subr.mxu0 0.0
      %379 = vmatpush2.msra.mxu0 0.0
      %380 = vmatprep.subr.mxu0 0.0
      %381 = vmatpush2.msra.mxu0 0.0
      %382 = vmatprep.subr.mxu0 0.0
      %383 = vmatpush2.msra.mxu0 0.0
      %384 = vmatprep.subr.mxu0 0.0
      %385 = vmatpush2.msra.mxu0 0.0
      %386 = vmatprep.subr.mxu0 0.0
      %387 = vmatpush2.msra.mxu0 0.0
      %388 = vmatprep.subr.mxu0 0.0
      %389 = vmatpush2.msra.mxu0 0.0
      %390 = vmatprep.subr.mxu0 0.0
      %391 = vmatpush2.msra.mxu0 0.0
      %392 = vmatprep.subr.mxu0 0.0
      %393 = vmatpush2.msra.mxu0 0.0
      %394 = vmatprep.subr.mxu0 0.0
      %395 = vmatpush2.msra.mxu0 0.0
      %396 = vmatprep.subr.mxu0 0.0
      %397 = vmatpush2.msra.mxu0 0.0
      %398 = vmatprep.subr.mxu0 0.0
      %399 = vmatpush2.msra.mxu0 0.0
      %400 = vmatprep.subr.mxu0 0.0
      %401 = vmatpush2.msra.mxu0 0.0
      %402 = vmatprep.subr.mxu0 0.0
      %403 = vmatpush2.msra.mxu0 0.0
      %404 = vmatprep.subr.mxu0 0.0
      %405 = vmatpush2.msra.mxu0 0.0
      %406 = vmatprep.subr.mxu0 0.0
      %407 = vmatpush2.msra.mxu0 0.0
      %408 = vmatprep.subr.mxu0 0.0
      %409 = vmatpush2.msra.mxu0 0.0
      %410 = vmatprep.mubr.f32.mxu0 0.0
      %411 = vmatmul.mubr.f32.gmra.mxu0 %v287
      %v412 = vpop.f32.mrf.mxu0
      %v413 = vadd.f32 %v344, %v412
      %v414 = vpop.f32.mrf.mxu0
      %415 = vmatprep.mubr.f32.mxu0 0.0
      %416 = vmatmul.mubr.f32.gmra.mxu0 %v288
      %v417 = vpop.f32.mrf.mxu0
      %v418 = vadd.f32 %v344, %v417
      %v419 = vpop.f32.mrf.mxu0
      %420 = vmatprep.mubr.f32.mxu0 0.0
      %421 = vmatmul.mubr.f32.gmra.mxu0 %v289
      %v422 = vpop.f32.mrf.mxu0
      %v423 = vadd.f32 %v344, %v422
      %v424 = vpop.f32.mrf.mxu0
      %425 = vmatprep.mubr.f32.mxu0 0.0
      %426 = vmatmul.mubr.f32.gmra.mxu0 %v290
      %v427 = vpop.f32.mrf.mxu0
      %v428 = vadd.f32 %v344, %v427
      %v429 = vpop.f32.mrf.mxu0
      %430 = vmatprep.mubr.f32.mxu0 0.0
      %431 = vmatmul.mubr.f32.gmra.mxu0 %v291
      %v432 = vpop.f32.mrf.mxu0
      %v433 = vadd.f32 %v344, %v432
      %v434 = vpop.f32.mrf.mxu0
      %435 = vmatprep.mubr.f32.mxu0 0.0
      %436 = vmatmul.mubr.f32.gmra.mxu0 %v292
      %v437 = vpop.f32.mrf.mxu0
      %v438 = vadd.f32 %v344, %v437
      %v439 = vpop.f32.mrf.mxu0
      %440 = vmatprep.mubr.f32.mxu0 0.0
      %441 = vmatmul.mubr.f32.gmra.mxu0 %v293
      %v442 = vpop.f32.mrf.mxu0
      %v443 = vadd.f32 %v344, %v442
      %v444 = vpop.f32.mrf.mxu0
      %445 = vmatprep.mubr.f32.mxu0 0.0
      %446 = vmatmul.mubr.f32.gmra.mxu0 %v294
      %v447 = vpop.f32.mrf.mxu0
      %v448 = vadd.f32 %v344, %v447
      %v449 = vpop.f32.mrf.mxu0
      %450 = vmatprep.mubr.f32.mxu0 0.0
      %451 = vmatmul.mubr.f32.gmra.mxu0 %v295
      %v452 = vpop.f32.mrf.mxu0
      %v453 = vadd.f32 %v344, %v452
      %v454 = vpop.f32.mrf.mxu0
      %455 = vmatprep.mubr.f32.mxu0 0.0
      %456 = vmatmul.mubr.f32.gmra.mxu0 %v296
      %v457 = vpop.f32.mrf.mxu0
      %v458 = vadd.f32 %v344, %v457
      %v459 = vpop.f32.mrf.mxu0
      %460 = vmatprep.mubr.f32.mxu0 0.0
      %461 = vmatmul.mubr.f32.gmra.mxu0 %v297
      %v462 = vpop.f32.mrf.mxu0
      %v463 = vadd.f32 %v344, %v462
      %v464 = vpop.f32.mrf.mxu0
      %465 = vmatprep.mubr.f32.mxu0 0.0
      %466 = vmatmul.mubr.f32.gmra.mxu0 %v298
      %v467 = vpop.f32.mrf.mxu0
      %v468 = vadd.f32 %v344, %v467
      %v469 = vpop.f32.mrf.mxu0
      %470 = vmatprep.mubr.f32.mxu0 0.0
      %471 = vmatmul.mubr.f32.gmra.mxu0 %v299
      %v472 = vpop.f32.mrf.mxu0
      %v473 = vadd.f32 %v344, %v472
      %v474 = vpop.f32.mrf.mxu0
      %475 = vmatprep.mubr.f32.mxu0 0.0
      %476 = vmatmul.mubr.f32.gmra.mxu0 %v300
      %v477 = vpop.f32.mrf.mxu0
      %v478 = vadd.f32 %v344, %v477
      %v479 = vpop.f32.mrf.mxu0
      %480 = vmatprep.mubr.f32.mxu0 0.0
      %481 = vmatmul.mubr.f32.gmra.mxu0 %v301
      %v482 = vpop.f32.mrf.mxu0
      %v483 = vadd.f32 %v344, %v482
      %v484 = vpop.f32.mrf.mxu0
      %485 = vmatprep.mubr.f32.mxu0 0.0
      %486 = vmatmul.mubr.f32.gmra.mxu0 %v302
      %v487 = vpop.f32.mrf.mxu0
      %v488 = vadd.f32 %v344, %v487
      %v489 = vpop.f32.mrf.mxu0
      %490 = vmatprep.mubr.f32.mxu0 0.0
      %491 = vmatmul.mubr.f32.gmra.mxu0 %v303
      %v492 = vpop.f32.mrf.mxu0
      %v493 = vadd.f32 %v344, %v492
      %v494 = vpop.f32.mrf.mxu0
      %495 = vmatprep.mubr.f32.mxu0 0.0
      %496 = vmatmul.mubr.f32.gmra.mxu0 %v304
      %v497 = vpop.f32.mrf.mxu0
      %v498 = vadd.f32 %v344, %v497
      %v499 = vpop.f32.mrf.mxu0
      %500 = vmatprep.mubr.f32.mxu0 0.0
      %501 = vmatmul.mubr.f32.gmra.mxu0 %v305
      %v502 = vpop.f32.mrf.mxu0
      %v503 = vadd.f32 %v344, %v502
      %v504 = vpop.f32.mrf.mxu0
      %505 = vmatprep.mubr.f32.mxu0 0.0
      %506 = vmatmul.mubr.f32.gmra.mxu0 %v306
      %v507 = vpop.f32.mrf.mxu0
      %v508 = vadd.f32 %v344, %v507
      %v509 = vpop.f32.mrf.mxu0
      %510 = vmatprep.mubr.f32.mxu0 0.0
      %511 = vmatmul.mubr.f32.gmra.mxu0 %v307
      %v512 = vpop.f32.mrf.mxu0
      %v513 = vadd.f32 %v344, %v512
      %v514 = vpop.f32.mrf.mxu0
      %515 = vmatprep.mubr.f32.mxu0 0.0
      %516 = vmatmul.mubr.f32.gmra.mxu0 %v308
      %v517 = vpop.f32.mrf.mxu0
      %v518 = vadd.f32 %v344, %v517
      %v519 = vpop.f32.mrf.mxu0
      %520 = vmatprep.mubr.f32.mxu0 0.0
      %521 = vmatmul.mubr.f32.gmra.mxu0 %v309
      %v522 = vpop.f32.mrf.mxu0
      %v523 = vadd.f32 %v344, %v522
      %v524 = vpop.f32.mrf.mxu0
      %525 = vmatprep.mubr.f32.mxu0 0.0
      %526 = vmatmul.mubr.f32.gmra.mxu0 %v310
      %v527 = vpop.f32.mrf.mxu0
      %v528 = vadd.f32 %v344, %v527
      %v529 = vpop.f32.mrf.mxu0
      %530 = vmatprep.mubr.f32.mxu0 0.0
      %531 = vmatmul.mubr.f32.gmra.mxu0 %v311
      %v532 = vpop.f32.mrf.mxu0
      %v533 = vadd.f32 %v344, %v532
      %v534 = vpop.f32.mrf.mxu0
      %535 = vmatprep.mubr.f32.mxu0 0.0
      %536 = vmatmul.mubr.f32.gmra.mxu0 %v312
      %v537 = vpop.f32.mrf.mxu0
      %v538 = vadd.f32 %v344, %v537
      %v539 = vpop.f32.mrf.mxu0
      %540 = vmatprep.mubr.f32.mxu0 0.0
      %541 = vmatmul.mubr.f32.gmra.mxu0 %v313
      %v542 = vpop.f32.mrf.mxu0
      %v543 = vadd.f32 %v344, %v542
      %v544 = vpop.f32.mrf.mxu0
      %545 = vmatprep.mubr.f32.mxu0 0.0
      %546 = vmatmul.mubr.f32.gmra.mxu0 %v314
      %v547 = vpop.f32.mrf.mxu0
      %v548 = vadd.f32 %v344, %v547
      %v549 = vpop.f32.mrf.mxu0
      %550 = vmatprep.mubr.f32.mxu0 0.0
      %551 = vmatmul.mubr.f32.gmra.mxu0 %v315
      %v552 = vpop.f32.mrf.mxu0
      %v553 = vadd.f32 %v344, %v552
      %v554 = vpop.f32.mrf.mxu0
      %555 = vmatprep.mubr.f32.mxu0 0.0
      %556 = vmatmul.mubr.f32.gmra.mxu0 %v316
      %v557 = vpop.f32.mrf.mxu0
      %v558 = vadd.f32 %v344, %v557
      %v559 = vpop.f32.mrf.mxu0
      %560 = vmatprep.mubr.f32.mxu0 0.0
      %561 = vmatmul.mubr.f32.gmra.mxu0 %v317
      %v562 = vpop.f32.mrf.mxu0
      %v563 = vadd.f32 %v344, %v562
      %v564 = vpop.f32.mrf.mxu0
      %565 = vmatprep.mubr.f32.mxu0 0.0
      %566 = vmatmul.mubr.f32.gmra.mxu0 %v318
      %v567 = vpop.f32.mrf.mxu0
      %v568 = vadd.f32 %v344, %v567
      %v569 = vpop.f32.mrf.mxu0
      %570 = vmatprep.mubr.f32.mxu0 0.0
      %571 = vmatmul.mubr.f32.gmra.mxu0 %v319
      %v572 = vpop.f32.mrf.mxu0
      %v573 = vadd.f32 %v344, %v572
      %v574 = vpop.f32.mrf.mxu0
      %575 = vmatprep.mubr.f32.mxu0 0.0
      %576 = vmatmul.mubr.f32.gmra.mxu0 %v320
      %v577 = vpop.f32.mrf.mxu0
      %v578 = vadd.f32 %v344, %v577
      %v579 = vpop.f32.mrf.mxu0
      %580 = vmatprep.mubr.f32.mxu0 0.0
      %581 = vmatmul.mubr.f32.gmra.mxu0 %v321
      %v582 = vpop.f32.mrf.mxu0
      %v583 = vadd.f32 %v344, %v582
      %v584 = vpop.f32.mrf.mxu0
      %585 = vmatprep.mubr.f32.mxu0 0.0
      %586 = vmatmul.mubr.f32.gmra.mxu0 %v322
      %v587 = vpop.f32.mrf.mxu0
      %v588 = vadd.f32 %v344, %v587
      %v589 = vpop.f32.mrf.mxu0
      %590 = vdwg.mxu0
      %v591 = vxor.u32 %v413, 2147483648
      %v592 = vxor.u32 %v418, 2147483648
      %v593 = vxor.u32 %v423, 2147483648
      %v594 = vxor.u32 %v428, 2147483648
      %v595 = vxor.u32 %v433, 2147483648
      %v596 = vxor.u32 %v438, 2147483648
      %v597 = vxor.u32 %v443, 2147483648
      %v598 = vxor.u32 %v448, 2147483648
      %v599 = vxor.u32 %v453, 2147483648
      %v600 = vxor.u32 %v458, 2147483648
      %v601 = vxor.u32 %v463, 2147483648
      %v602 = vxor.u32 %v468, 2147483648
      %v603 = vxor.u32 %v473, 2147483648
      %v604 = vxor.u32 %v478, 2147483648
      %v605 = vxor.u32 %v483, 2147483648
      %v606 = vxor.u32 %v488, 2147483648
      %v607 = vxor.u32 %v493, 2147483648
      %v608 = vxor.u32 %v498, 2147483648
      %v609 = vxor.u32 %v503, 2147483648
      %v610 = vxor.u32 %v508, 2147483648
      %v611 = vxor.u32 %v513, 2147483648
      %v612 = vxor.u32 %v518, 2147483648
      %v613 = vxor.u32 %v523, 2147483648
      %v614 = vxor.u32 %v528, 2147483648
      %v615 = vxor.u32 %v533, 2147483648
      %v616 = vxor.u32 %v538, 2147483648
      %v617 = vxor.u32 %v543, 2147483648
      %v618 = vxor.u32 %v548, 2147483648
      %v619 = vxor.u32 %v553, 2147483648
      %v620 = vxor.u32 %v558, 2147483648
      %v621 = vxor.u32 %v563, 2147483648
      %v622 = vxor.u32 %v568, 2147483648
      %v623 = vxor.u32 %v573, 2147483648
      %v624 = vxor.u32 %v578, 2147483648
      %v625 = vxor.u32 %v583, 2147483648
      %v626 = vxor.u32 %v588, 2147483648
      %v627 = vmul.f32 %v591, 1.442695
      %v628 = vpow.pop %v627
      %v629 = vmul.f32 %v592, 1.442695
      %v630 = vpow.pop %v629
      %v631 = vmul.f32 %v593, 1.442695
      %v632 = vpow.pop %v631
      %v633 = vmul.f32 %v594, 1.442695
      %v634 = vpow.pop %v633
      %v635 = vmul.f32 %v595, 1.442695
      %v636 = vpow.pop %v635
      %v637 = vmul.f32 %v596, 1.442695
      %v638 = vpow.pop %v637
      %v639 = vmul.f32 %v597, 1.442695
      %v640 = vpow.pop %v639
      %v641 = vmul.f32 %v598, 1.442695
      %v642 = vpow.pop %v641
      %v643 = vmul.f32 %v599, 1.442695
      %v644 = vpow.pop %v643
      %v645 = vmul.f32 %v600, 1.442695
      %v646 = vpow.pop %v645
      %v647 = vmul.f32 %v601, 1.442695
      %v648 = vpow.pop %v647
      %v649 = vmul.f32 %v602, 1.442695
      %v650 = vpow.pop %v649
      %v651 = vmul.f32 %v603, 1.442695
      %v652 = vpow.pop %v651
      %v653 = vmul.f32 %v604, 1.442695
      %v654 = vpow.pop %v653
      %v655 = vmul.f32 %v605, 1.442695
      %v656 = vpow.pop %v655
      %v657 = vmul.f32 %v606, 1.442695
      %v658 = vpow.pop %v657
      %v659 = vmul.f32 %v607, 1.442695
      %v660 = vpow.pop %v659
      %v661 = vmul.f32 %v608, 1.442695
      %v662 = vpow.pop %v661
      %v663 = vmul.f32 %v609, 1.442695
      %v664 = vpow.pop %v663
      %v665 = vmul.f32 %v610, 1.442695
      %v666 = vpow.pop %v665
      %v667 = vmul.f32 %v611, 1.442695
      %v668 = vpow.pop %v667
      %v669 = vmul.f32 %v612, 1.442695
      %v670 = vpow.pop %v669
      %v671 = vmul.f32 %v613, 1.442695
      %v672 = vpow.pop %v671
      %v673 = vmul.f32 %v614, 1.442695
      %v674 = vpow.pop %v673
      %v675 = vmul.f32 %v615, 1.442695
      %v676 = vpow.pop %v675
      %v677 = vmul.f32 %v616, 1.442695
      %v678 = vpow.pop %v677
      %v679 = vmul.f32 %v617, 1.442695
      %v680 = vpow.pop %v679
      %v681 = vmul.f32 %v618, 1.442695
      %v682 = vpow.pop %v681
      %v683 = vmul.f32 %v619, 1.442695
      %v684 = vpow.pop %v683
      %v685 = vmul.f32 %v620, 1.442695
      %v686 = vpow.pop %v685
      %v687 = vmul.f32 %v621, 1.442695
      %v688 = vpow.pop %v687
      %v689 = vmul.f32 %v622, 1.442695
      %v690 = vpow.pop %v689
      %v691 = vmul.f32 %v623, 1.442695
      %v692 = vpow.pop %v691
      %v693 = vmul.f32 %v624, 1.442695
      %v694 = vpow.pop %v693
      %v695 = vmul.f32 %v625, 1.442695
      %v696 = vpow.pop %v695
      %v697 = vmul.f32 %v626, 1.442695
      %v698 = vpow.pop %v697
      %v699 = vadd.f32 %v628, 1.0
      %v700 = vadd.f32 %v630, 1.0
      %v701 = vadd.f32 %v632, 1.0
      %v702 = vadd.f32 %v634, 1.0
      %v703 = vadd.f32 %v636, 1.0
      %v704 = vadd.f32 %v638, 1.0
      %v705 = vadd.f32 %v640, 1.0
      %v706 = vadd.f32 %v642, 1.0
      %v707 = vadd.f32 %v644, 1.0
      %v708 = vadd.f32 %v646, 1.0
      %v709 = vadd.f32 %v648, 1.0
      %v710 = vadd.f32 %v650, 1.0
      %v711 = vadd.f32 %v652, 1.0
      %v712 = vadd.f32 %v654, 1.0
      %v713 = vadd.f32 %v656, 1.0
      %v714 = vadd.f32 %v658, 1.0
      %v715 = vadd.f32 %v660, 1.0
      %v716 = vadd.f32 %v662, 1.0
      %v717 = vadd.f32 %v664, 1.0
      %v718 = vadd.f32 %v666, 1.0
      %v719 = vadd.f32 %v668, 1.0
      %v720 = vadd.f32 %v670, 1.0
      %v721 = vadd.f32 %v672, 1.0
      %v722 = vadd.f32 %v674, 1.0
      %v723 = vadd.f32 %v676, 1.0
      %v724 = vadd.f32 %v678, 1.0
      %v725 = vadd.f32 %v680, 1.0
      %v726 = vadd.f32 %v682, 1.0
      %v727 = vadd.f32 %v684, 1.0
      %v728 = vadd.f32 %v686, 1.0
      %v729 = vadd.f32 %v688, 1.0
      %v730 = vadd.f32 %v690, 1.0
      %v731 = vadd.f32 %v692, 1.0
      %v732 = vadd.f32 %v694, 1.0
      %v733 = vadd.f32 %v696, 1.0
      %v734 = vadd.f32 %v698, 1.0
      %v735 = vrcp.pop %v699
      %v736 = vmul.f32 1.0, %v735
      %v737 = vrcp.pop %v700
      %v738 = vmul.f32 1.0, %v737
      %v739 = vrcp.pop %v701
      %v740 = vmul.f32 1.0, %v739
      %v741 = vrcp.pop %v702
      %v742 = vmul.f32 1.0, %v741
      %v743 = vrcp.pop %v703
      %v744 = vmul.f32 1.0, %v743
      %v745 = vrcp.pop %v704
      %v746 = vmul.f32 1.0, %v745
      %v747 = vrcp.pop %v705
      %v748 = vmul.f32 1.0, %v747
      %v749 = vrcp.pop %v706
      %v750 = vmul.f32 1.0, %v749
      %v751 = vrcp.pop %v707
      %v752 = vmul.f32 1.0, %v751
      %v753 = vrcp.pop %v708
      %v754 = vmul.f32 1.0, %v753
      %v755 = vrcp.pop %v709
      %v756 = vmul.f32 1.0, %v755
      %v757 = vrcp.pop %v710
      %v758 = vmul.f32 1.0, %v757
      %v759 = vrcp.pop %v711
      %v760 = vmul.f32 1.0, %v759
      %v761 = vrcp.pop %v712
      %v762 = vmul.f32 1.0, %v761
      %v763 = vrcp.pop %v713
      %v764 = vmul.f32 1.0, %v763
      %v765 = vrcp.pop %v714
      %v766 = vmul.f32 1.0, %v765
      %v767 = vrcp.pop %v715
      %v768 = vmul.f32 1.0, %v767
      %v769 = vrcp.pop %v716
      %v770 = vmul.f32 1.0, %v769
      %v771 = vrcp.pop %v717
      %v772 = vmul.f32 1.0, %v771
      %v773 = vrcp.pop %v718
      %v774 = vmul.f32 1.0, %v773
      %v775 = vrcp.pop %v719
      %v776 = vmul.f32 1.0, %v775
      %v777 = vrcp.pop %v720
      %v778 = vmul.f32 1.0, %v777
      %v779 = vrcp.pop %v721
      %v780 = vmul.f32 1.0, %v779
      %v781 = vrcp.pop %v722
      %v782 = vmul.f32 1.0, %v781
      %v783 = vrcp.pop %v723
      %v784 = vmul.f32 1.0, %v783
      %v785 = vrcp.pop %v724
      %v786 = vmul.f32 1.0, %v785
      %v787 = vrcp.pop %v725
      %v788 = vmul.f32 1.0, %v787
      %v789 = vrcp.pop %v726
      %v790 = vmul.f32 1.0, %v789
      %v791 = vrcp.pop %v727
      %v792 = vmul.f32 1.0, %v791
      %v793 = vrcp.pop %v728
      %v794 = vmul.f32 1.0, %v793
      %v795 = vrcp.pop %v729
      %v796 = vmul.f32 1.0, %v795
      %v797 = vrcp.pop %v730
      %v798 = vmul.f32 1.0, %v797
      %v799 = vrcp.pop %v731
      %v800 = vmul.f32 1.0, %v799
      %v801 = vrcp.pop %v732
      %v802 = vmul.f32 1.0, %v801
      %v803 = vrcp.pop %v733
      %v804 = vmul.f32 1.0, %v803
      %v805 = vrcp.pop %v734
      %v806 = vmul.f32 1.0, %v805
      %v807 = vmul.f32 %v413, %v736
      %v808 = vmul.f32 %v418, %v738
      %v809 = vmul.f32 %v423, %v740
      %v810 = vmul.f32 %v428, %v742
      %v811 = vmul.f32 %v433, %v744
      %v812 = vmul.f32 %v438, %v746
      %v813 = vmul.f32 %v443, %v748
      %v814 = vmul.f32 %v448, %v750
      %v815 = vmul.f32 %v453, %v752
      %v816 = vmul.f32 %v458, %v754
      %v817 = vmul.f32 %v463, %v756
      %v818 = vmul.f32 %v468, %v758
      %v819 = vmul.f32 %v473, %v760
      %v820 = vmul.f32 %v478, %v762
      %v821 = vmul.f32 %v483, %v764
      %v822 = vmul.f32 %v488, %v766
      %v823 = vmul.f32 %v493, %v768
      %v824 = vmul.f32 %v498, %v770
      %v825 = vmul.f32 %v503, %v772
      %v826 = vmul.f32 %v508, %v774
      %v827 = vmul.f32 %v513, %v776
      %v828 = vmul.f32 %v518, %v778
      %v829 = vmul.f32 %v523, %v780
      %v830 = vmul.f32 %v528, %v782
      %v831 = vmul.f32 %v533, %v784
      %v832 = vmul.f32 %v538, %v786
      %v833 = vmul.f32 %v543, %v788
      %v834 = vmul.f32 %v548, %v790
      %v835 = vmul.f32 %v553, %v792
      %v836 = vmul.f32 %v558, %v794
      %v837 = vmul.f32 %v563, %v796
      %v838 = vmul.f32 %v568, %v798
      %v839 = vmul.f32 %v573, %v800
      %v840 = vmul.f32 %v578, %v802
      %v841 = vmul.f32 %v583, %v804
      %v842 = vmul.f32 %v588, %v806
      %v843 = vld [vmem:[%s3] sm:$0xff]
      %v844 = vld [vmem:[%s3 + $0x8] sm:$0xff]
      %v845 = vld [vmem:[%s3 + $0x10] sm:$0xff]
      %v846 = vld [vmem:[%s3 + $0x18] sm:$0xff]
      %v847 = vld [vmem:[%s3 + $0x20] sm:$0xff]
      %v848 = vld [vmem:[%s3 + $0x28] sm:$0xff]
      %v849 = vld [vmem:[%s3 + $0x30] sm:$0xff]
      %v850 = vld [vmem:[%s3 + $0x38] sm:$0xff]
      %v851 = vld [vmem:[%s3 + $0x40] sm:$0xff]
      %v852 = vld [vmem:[%s3 + $0x48] sm:$0xff]
      %v853 = vld [vmem:[%s3 + $0x50] sm:$0xff]
      %v854 = vld [vmem:[%s3 + $0x58] sm:$0xff]
      %v855 = vld [vmem:[%s3 + $0x60] sm:$0xff]
      %v856 = vld [vmem:[%s3 + $0x68] sm:$0xff]
      %v857 = vld [vmem:[%s3 + $0x70] sm:$0xff]
      %v858 = vld [vmem:[%s3 + $0x78] sm:$0xff]
      %859 = vmatprep.subr.mxu0 0.0
      %860 = vmatpush1.msra.mxu0 %v858
      %861 = vmatprep.subr.mxu0 0.0
      %862 = vmatpush1.msra.mxu0 %v857
      %863 = vmatprep.subr.mxu0 0.0
      %864 = vmatpush1.msra.mxu0 %v856
      %865 = vmatprep.subr.mxu0 0.0
      %866 = vmatpush1.msra.mxu0 %v855
      %867 = vmatprep.subr.mxu0 0.0
      %868 = vmatpush1.msra.mxu0 %v854
      %869 = vmatprep.subr.mxu0 0.0
      %870 = vmatpush1.msra.mxu0 %v853
      %871 = vmatprep.subr.mxu0 0.0
      %872 = vmatpush1.msra.mxu0 %v852
      %873 = vmatprep.subr.mxu0 0.0
      %874 = vmatpush1.msra.mxu0 %v851
      %875 = vmatprep.subr.mxu0 0.0
      %876 = vmatpush1.msra.mxu0 %v850
      %877 = vmatprep.subr.mxu0 0.0
      %878 = vmatpush1.msra.mxu0 %v849
      %879 = vmatprep.subr.mxu0 0.0
      %880 = vmatpush1.msra.mxu0 %v848
      %881 = vmatprep.subr.mxu0 0.0
      %882 = vmatpush1.msra.mxu0 %v847
      %883 = vmatprep.subr.mxu0 0.0
      %884 = vmatpush1.msra.mxu0 %v846
      %885 = vmatprep.subr.mxu0 0.0
      %886 = vmatpush1.msra.mxu0 %v845
      %887 = vmatprep.subr.mxu0 0.0
      %888 = vmatpush1.msra.mxu0 %v844
      %889 = vmatprep.subr.mxu0 0.0
      %890 = vmatpush1.msra.mxu0 %v843
      %891 = vmatprep.subr.mxu0 0.0
      %892 = vmatpush2.msra.mxu0 0.0
      %893 = vmatprep.subr.mxu0 0.0
      %894 = vmatpush2.msra.mxu0 0.0
      %895 = vmatprep.subr.mxu0 0.0
      %896 = vmatpush2.msra.mxu0 0.0
      %897 = vmatprep.subr.mxu0 0.0
      %898 = vmatpush2.msra.mxu0 0.0
      %899 = vmatprep.subr.mxu0 0.0
      %900 = vmatpush2.msra.mxu0 0.0
      %901 = vmatprep.subr.mxu0 0.0
      %902 = vmatpush2.msra.mxu0 0.0
      %903 = vmatprep.subr.mxu0 0.0
      %904 = vmatpush2.msra.mxu0 0.0
      %905 = vmatprep.subr.mxu0 0.0
      %906 = vmatpush2.msra.mxu0 0.0
      %907 = vmatprep.subr.mxu0 0.0
      %908 = vmatpush2.msra.mxu0 0.0
      %909 = vmatprep.subr.mxu0 0.0
      %910 = vmatpush2.msra.mxu0 0.0
      %911 = vmatprep.subr.mxu0 0.0
      %912 = vmatpush2.msra.mxu0 0.0
      %913 = vmatprep.subr.mxu0 0.0
      %914 = vmatpush2.msra.mxu0 0.0
      %915 = vmatprep.subr.mxu0 0.0
      %916 = vmatpush2.msra.mxu0 0.0
      %917 = vmatprep.subr.mxu0 0.0
      %918 = vmatpush2.msra.mxu0 0.0
      %919 = vmatprep.subr.mxu0 0.0
      %920 = vmatpush2.msra.mxu0 0.0
      %921 = vmatprep.subr.mxu0 0.0
      %922 = vmatpush2.msra.mxu0 0.0
      %923 = vmatprep.mubr.f32.mxu0 0.0
      %924 = vmatmul.mubr.f32.gmra.mxu0 %v807
      %v925 = vpop.f32.mrf.mxu0
      %v926 = vadd.f32 0.0, %v925
      %v927 = vpop.f32.mrf.mxu0
      %928 = vmatprep.mubr.f32.mxu0 0.0
      %929 = vmatmul.mubr.f32.gmra.mxu0 %v808
      %v930 = vpop.f32.mrf.mxu0
      %v931 = vadd.f32 0.0, %v930
      %v932 = vpop.f32.mrf.mxu0
      %933 = vmatprep.mubr.f32.mxu0 0.0
      %934 = vmatmul.mubr.f32.gmra.mxu0 %v809
      %v935 = vpop.f32.mrf.mxu0
      %v936 = vadd.f32 0.0, %v935
      %v937 = vpop.f32.mrf.mxu0
      %938 = vmatprep.mubr.f32.mxu0 0.0
      %939 = vmatmul.mubr.f32.gmra.mxu0 %v810
      %v940 = vpop.f32.mrf.mxu0
      %v941 = vadd.f32 0.0, %v940
      %v942 = vpop.f32.mrf.mxu0
      %943 = vmatprep.mubr.f32.mxu0 0.0
      %944 = vmatmul.mubr.f32.gmra.mxu0 %v811
      %v945 = vpop.f32.mrf.mxu0
      %v946 = vadd.f32 0.0, %v945
      %v947 = vpop.f32.mrf.mxu0
      %948 = vmatprep.mubr.f32.mxu0 0.0
      %949 = vmatmul.mubr.f32.gmra.mxu0 %v812
      %v950 = vpop.f32.mrf.mxu0
      %v951 = vadd.f32 0.0, %v950
      %v952 = vpop.f32.mrf.mxu0
      %953 = vmatprep.mubr.f32.mxu0 0.0
      %954 = vmatmul.mubr.f32.gmra.mxu0 %v813
      %v955 = vpop.f32.mrf.mxu0
      %v956 = vadd.f32 0.0, %v955
      %v957 = vpop.f32.mrf.mxu0
      %958 = vmatprep.mubr.f32.mxu0 0.0
      %959 = vmatmul.mubr.f32.gmra.mxu0 %v814
      %v960 = vpop.f32.mrf.mxu0
      %v961 = vadd.f32 0.0, %v960
      %v962 = vpop.f32.mrf.mxu0
      %963 = vmatprep.mubr.f32.mxu0 0.0
      %964 = vmatmul.mubr.f32.gmra.mxu0 %v815
      %v965 = vpop.f32.mrf.mxu0
      %v966 = vadd.f32 0.0, %v965
      %v967 = vpop.f32.mrf.mxu0
      %968 = vmatprep.mubr.f32.mxu0 0.0
      %969 = vmatmul.mubr.f32.gmra.mxu0 %v816
      %v970 = vpop.f32.mrf.mxu0
      %v971 = vadd.f32 0.0, %v970
      %v972 = vpop.f32.mrf.mxu0
      %973 = vmatprep.mubr.f32.mxu0 0.0
      %974 = vmatmul.mubr.f32.gmra.mxu0 %v817
      %v975 = vpop.f32.mrf.mxu0
      %v976 = vadd.f32 0.0, %v975
      %v977 = vpop.f32.mrf.mxu0
      %978 = vmatprep.mubr.f32.mxu0 0.0
      %979 = vmatmul.mubr.f32.gmra.mxu0 %v818
      %v980 = vpop.f32.mrf.mxu0
      %v981 = vadd.f32 0.0, %v980
      %v982 = vpop.f32.mrf.mxu0
      %983 = vmatprep.mubr.f32.mxu0 0.0
      %984 = vmatmul.mubr.f32.gmra.mxu0 %v819
      %v985 = vpop.f32.mrf.mxu0
      %v986 = vadd.f32 0.0, %v985
      %v987 = vpop.f32.mrf.mxu0
      %988 = vmatprep.mubr.f32.mxu0 0.0
      %989 = vmatmul.mubr.f32.gmra.mxu0 %v820
      %v990 = vpop.f32.mrf.mxu0
      %v991 = vadd.f32 0.0, %v990
      %v992 = vpop.f32.mrf.mxu0
      %993 = vmatprep.mubr.f32.mxu0 0.0
      %994 = vmatmul.mubr.f32.gmra.mxu0 %v821
      %v995 = vpop.f32.mrf.mxu0
      %v996 = vadd.f32 0.0, %v995
      %v997 = vpop.f32.mrf.mxu0
      %998 = vmatprep.mubr.f32.mxu0 0.0
      %999 = vmatmul.mubr.f32.gmra.mxu0 %v822
      %v1000 = vpop.f32.mrf.mxu0
      %v1001 = vadd.f32 0.0, %v1000
      %v1002 = vpop.f32.mrf.mxu0
      %1003 = vmatprep.mubr.f32.mxu0 0.0
      %1004 = vmatmul.mubr.f32.gmra.mxu0 %v823
      %v1005 = vpop.f32.mrf.mxu0
      %v1006 = vadd.f32 0.0, %v1005
      %v1007 = vpop.f32.mrf.mxu0
      %1008 = vmatprep.mubr.f32.mxu0 0.0
      %1009 = vmatmul.mubr.f32.gmra.mxu0 %v824
      %v1010 = vpop.f32.mrf.mxu0
      %v1011 = vadd.f32 0.0, %v1010
      %v1012 = vpop.f32.mrf.mxu0
      %1013 = vmatprep.mubr.f32.mxu0 0.0
      %1014 = vmatmul.mubr.f32.gmra.mxu0 %v825
      %v1015 = vpop.f32.mrf.mxu0
      %v1016 = vadd.f32 0.0, %v1015
      %v1017 = vpop.f32.mrf.mxu0
      %1018 = vmatprep.mubr.f32.mxu0 0.0
      %1019 = vmatmul.mubr.f32.gmra.mxu0 %v826
      %v1020 = vpop.f32.mrf.mxu0
      %v1021 = vadd.f32 0.0, %v1020
      %v1022 = vpop.f32.mrf.mxu0
      %1023 = vmatprep.mubr.f32.mxu0 0.0
      %1024 = vmatmul.mubr.f32.gmra.mxu0 %v827
      %v1025 = vpop.f32.mrf.mxu0
      %v1026 = vadd.f32 0.0, %v1025
      %v1027 = vpop.f32.mrf.mxu0
      %1028 = vmatprep.mubr.f32.mxu0 0.0
      %1029 = vmatmul.mubr.f32.gmra.mxu0 %v828
      %v1030 = vpop.f32.mrf.mxu0
      %v1031 = vadd.f32 0.0, %v1030
      %v1032 = vpop.f32.mrf.mxu0
      %1033 = vmatprep.mubr.f32.mxu0 0.0
      %1034 = vmatmul.mubr.f32.gmra.mxu0 %v829
      %v1035 = vpop.f32.mrf.mxu0
      %v1036 = vadd.f32 0.0, %v1035
      %v1037 = vpop.f32.mrf.mxu0
      %1038 = vmatprep.mubr.f32.mxu0 0.0
      %1039 = vmatmul.mubr.f32.gmra.mxu0 %v830
      %v1040 = vpop.f32.mrf.mxu0
      %v1041 = vadd.f32 0.0, %v1040
      %v1042 = vpop.f32.mrf.mxu0
      %1043 = vmatprep.mubr.f32.mxu0 0.0
      %1044 = vmatmul.mubr.f32.gmra.mxu0 %v831
      %v1045 = vpop.f32.mrf.mxu0
      %v1046 = vadd.f32 0.0, %v1045
      %v1047 = vpop.f32.mrf.mxu0
      %1048 = vmatprep.mubr.f32.mxu0 0.0
      %1049 = vmatmul.mubr.f32.gmra.mxu0 %v832
      %v1050 = vpop.f32.mrf.mxu0
      %v1051 = vadd.f32 0.0, %v1050
      %v1052 = vpop.f32.mrf.mxu0
      %1053 = vmatprep.mubr.f32.mxu0 0.0
      %1054 = vmatmul.mubr.f32.gmra.mxu0 %v833
      %v1055 = vpop.f32.mrf.mxu0
      %v1056 = vadd.f32 0.0, %v1055
      %v1057 = vpop.f32.mrf.mxu0
      %1058 = vmatprep.mubr.f32.mxu0 0.0
      %1059 = vmatmul.mubr.f32.gmra.mxu0 %v834
      %v1060 = vpop.f32.mrf.mxu0
      %v1061 = vadd.f32 0.0, %v1060
      %v1062 = vpop.f32.mrf.mxu0
      %1063 = vmatprep.mubr.f32.mxu0 0.0
      %1064 = vmatmul.mubr.f32.gmra.mxu0 %v835
      %v1065 = vpop.f32.mrf.mxu0
      %v1066 = vadd.f32 0.0, %v1065
      %v1067 = vpop.f32.mrf.mxu0
      %1068 = vmatprep.mubr.f32.mxu0 0.0
      %1069 = vmatmul.mubr.f32.gmra.mxu0 %v836
      %v1070 = vpop.f32.mrf.mxu0
      %v1071 = vadd.f32 0.0, %v1070
      %v1072 = vpop.f32.mrf.mxu0
      %1073 = vmatprep.mubr.f32.mxu0 0.0
      %1074 = vmatmul.mubr.f32.gmra.mxu0 %v837
      %v1075 = vpop.f32.mrf.mxu0
      %v1076 = vadd.f32 0.0, %v1075
      %v1077 = vpop.f32.mrf.mxu0
      %1078 = vmatprep.mubr.f32.mxu0 0.0
      %1079 = vmatmul.mubr.f32.gmra.mxu0 %v838
      %v1080 = vpop.f32.mrf.mxu0
      %v1081 = vadd.f32 0.0, %v1080
      %v1082 = vpop.f32.mrf.mxu0
      %1083 = vmatprep.mubr.f32.mxu0 0.0
      %1084 = vmatmul.mubr.f32.gmra.mxu0 %v839
      %v1085 = vpop.f32.mrf.mxu0
      %v1086 = vadd.f32 0.0, %v1085
      %v1087 = vpop.f32.mrf.mxu0
      %1088 = vmatprep.mubr.f32.mxu0 0.0
      %1089 = vmatmul.mubr.f32.gmra.mxu0 %v840
      %v1090 = vpop.f32.mrf.mxu0
      %v1091 = vadd.f32 0.0, %v1090
      %v1092 = vpop.f32.mrf.mxu0
      %1093 = vmatprep.mubr.f32.mxu0 0.0
      %1094 = vmatmul.mubr.f32.gmra.mxu0 %v841
      %v1095 = vpop.f32.mrf.mxu0
      %v1096 = vadd.f32 0.0, %v1095
      %v1097 = vpop.f32.mrf.mxu0
      %1098 = vmatprep.mubr.f32.mxu0 0.0
      %1099 = vmatmul.mubr.f32.gmra.mxu0 %v842
      %v1100 = vpop.f32.mrf.mxu0
      %v1101 = vadd.f32 0.0, %v1100
      %v1102 = vpop.f32.mrf.mxu0
      %1103 = vdwg.mxu0
      %vm1104 = vcmask 146432
      %1105 = vst.msk [vmem:[#allocation2] sm:$0xff] %vm1104, 0.0
      %vm1106 = vcmask 144384
      %1107 = vst.msk [vmem:[#allocation2 + $0x8] sm:$0x3f] %vm1106, 0.0
      %1108 = vst.msk [vmem:[#allocation2 + $0x10] sm:$0xff] %vm1104, 0.0
      %1109 = vst.msk [vmem:[#allocation2 + $0x18] sm:$0x3f] %vm1106, 0.0
      %1110 = vst.msk [vmem:[#allocation2 + $0x20] sm:$0xff] %vm1104, 0.0
      %1111 = vst.msk [vmem:[#allocation2 + $0x28] sm:$0x3f] %vm1106, 0.0
      %1112 = vst.msk [vmem:[#allocation2 + $0x30] sm:$0xff] %vm1104, 0.0
      %1113 = vst.msk [vmem:[#allocation2 + $0x38] sm:$0x3f] %vm1106, 0.0
      %1114 = vst.msk [vmem:[#allocation2 + $0x40] sm:$0xff] %vm1104, 0.0
      %1115 = vst.msk [vmem:[#allocation2 + $0x48] sm:$0x3f] %vm1106, 0.0
      %1116 = vst.msk [vmem:[#allocation2 + $0x50] sm:$0xff] %vm1104, 0.0
      %1117 = vst.msk [vmem:[#allocation2 + $0x58] sm:$0x3f] %vm1106, 0.0
      %1118 = vst.msk [vmem:[#allocation2 + $0x60] sm:$0xff] %vm1104, 0.0
      %1119 = vst.msk [vmem:[#allocation2 + $0x68] sm:$0x3f] %vm1106, 0.0
      %1120 = vst.msk [vmem:[#allocation2 + $0x70] sm:$0xff] %vm1104, 0.0
      %1121 = vst.msk [vmem:[#allocation2 + $0x78] sm:$0x3f] %vm1106, 0.0
      %1122 = vst.msk [vmem:[#allocation2 + $0x80] sm:$0xff] %vm1104, 0.0
      %1123 = vst.msk [vmem:[#allocation2 + $0x88] sm:$0x3f] %vm1106, 0.0
      %1124 = vst.msk [vmem:[#allocation2 + $0x90] sm:$0xff] %vm1104, 0.0
      %1125 = vst.msk [vmem:[#allocation2 + $0x98] sm:$0x3f] %vm1106, 0.0
      %1126 = vst.msk [vmem:[#allocation2 + $0xa0] sm:$0xff] %vm1104, 0.0
      %1127 = vst.msk [vmem:[#allocation2 + $0xa8] sm:$0x3f] %vm1106, 0.0
      %1128 = vst.msk [vmem:[#allocation2 + $0xb0] sm:$0xff] %vm1104, 0.0
      %1129 = vst.msk [vmem:[#allocation2 + $0xb8] sm:$0x3f] %vm1106, 0.0
      %1130 = vst.msk [vmem:[#allocation2 + $0xc0] sm:$0xff] %vm1104, 0.0
      %1131 = vst.msk [vmem:[#allocation2 + $0xc8] sm:$0x3f] %vm1106, 0.0
      %1132 = vst.msk [vmem:[#allocation2 + $0xd0] sm:$0xff] %vm1104, 0.0
      %1133 = vst.msk [vmem:[#allocation2 + $0xd8] sm:$0x3f] %vm1106, 0.0
      %1134 = vst.msk [vmem:[#allocation2 + $0xe0] sm:$0xff] %vm1104, 0.0
      %1135 = vst.msk [vmem:[#allocation2 + $0xe8] sm:$0x3f] %vm1106, 0.0
      %1136 = vst.msk [vmem:[#allocation2 + $0xf0] sm:$0xff] %vm1104, 0.0
      %1137 = vst.msk [vmem:[#allocation2 + $0xf8] sm:$0x3f] %vm1106, 0.0
      %1138 = vst.msk [vmem:[#allocation2 + $0x100] sm:$0xff] %vm1104, 0.0
      %1139 = vst.msk [vmem:[#allocation2 + $0x108] sm:$0x3f] %vm1106, 0.0
      %1140 = vst.msk [vmem:[#allocation2 + $0x110] sm:$0xff] %vm1104, 0.0
      %1141 = vst.msk [vmem:[#allocation2 + $0x118] sm:$0x3f] %vm1106, 0.0
      %1142 = vst.msk [vmem:[#allocation2 + $0x120] sm:$0xff] %vm1104, 0.0
      %1143 = vst.msk [vmem:[#allocation2 + $0x128] sm:$0x3f] %vm1106, 0.0
      %1144 = vst.msk [vmem:[#allocation2 + $0x130] sm:$0xff] %vm1104, 0.0
      %1145 = vst.msk [vmem:[#allocation2 + $0x138] sm:$0x3f] %vm1106, 0.0
      %1146 = vst.msk [vmem:[#allocation2 + $0x140] sm:$0xff] %vm1104, 0.0
      %1147 = vst.msk [vmem:[#allocation2 + $0x148] sm:$0x3f] %vm1106, 0.0
      %1148 = vst.msk [vmem:[#allocation2 + $0x150] sm:$0xff] %vm1104, 0.0
      %1149 = vst.msk [vmem:[#allocation2 + $0x158] sm:$0x3f] %vm1106, 0.0
      %1150 = vst.msk [vmem:[#allocation2 + $0x160] sm:$0xff] %vm1104, 0.0
      %1151 = vst.msk [vmem:[#allocation2 + $0x168] sm:$0x3f] %vm1106, 0.0
      %1152 = vst.msk [vmem:[#allocation2 + $0x170] sm:$0xff] %vm1104, 0.0
      %1153 = vst.msk [vmem:[#allocation2 + $0x178] sm:$0x3f] %vm1106, 0.0
      %1154 = vst.msk [vmem:[#allocation2 + $0x180] sm:$0xff] %vm1104, 0.0
      %1155 = vst.msk [vmem:[#allocation2 + $0x188] sm:$0x3f] %vm1106, 0.0
      %1156 = vst.msk [vmem:[#allocation2 + $0x190] sm:$0xff] %vm1104, 0.0
      %1157 = vst.msk [vmem:[#allocation2 + $0x198] sm:$0x3f] %vm1106, 0.0
      %1158 = vst.msk [vmem:[#allocation2 + $0x1a0] sm:$0xff] %vm1104, 0.0
      %1159 = vst.msk [vmem:[#allocation2 + $0x1a8] sm:$0x3f] %vm1106, 0.0
      %1160 = vst.msk [vmem:[#allocation2 + $0x1b0] sm:$0xff] %vm1104, 0.0
      %1161 = vst.msk [vmem:[#allocation2 + $0x1b8] sm:$0x3f] %vm1106, 0.0
      %v1198 = vcombine.high %v926, %v926
      %v1199 = vcombine.high %v931, %v931
      %v1200 = vcombine.high %v936, %v936
      %v1201 = vcombine.high %v941, %v941
      %v1202 = vcombine.high %v946, %v946
      %v1203 = vcombine.high %v951, %v951
      %v1204 = vcombine.high %v956, %v956
      %v1205 = vcombine.high %v961, %v961
      %v1206 = vcombine.high %v966, %v966
      %v1207 = vcombine.high %v971, %v971
      %v1208 = vcombine.high %v976, %v976
      %v1209 = vcombine.high %v981, %v981
      %v1210 = vcombine.high %v986, %v986
      %v1211 = vcombine.high %v991, %v991
      %v1212 = vcombine.high %v996, %v996
      %v1213 = vcombine.high %v1001, %v1001
      %v1214 = vcombine.high %v1006, %v1006
      %v1215 = vcombine.high %v1011, %v1011
      %v1216 = vcombine.high %v1016, %v1016
      %v1217 = vcombine.high %v1021, %v1021
      %v1218 = vcombine.high %v1026, %v1026
      %v1219 = vcombine.high %v1031, %v1031
      %v1220 = vcombine.high %v1036, %v1036
      %v1221 = vcombine.high %v1041, %v1041
      %v1222 = vcombine.high %v1046, %v1046
      %v1223 = vcombine.high %v1051, %v1051
      %v1224 = vcombine.high %v1056, %v1056
      %v1225 = vcombine.high %v1061, %v1061
      %v1226 = vcombine.high %v1066, %v1066
      %v1227 = vcombine.high %v1071, %v1071
      %v1228 = vcombine.high %v1076, %v1076
      %v1229 = vcombine.high %v1081, %v1081
      %v1230 = vcombine.high %v1086, %v1086
      %v1231 = vcombine.high %v1091, %v1091
      %v1232 = vcombine.high %v1096, %v1096
      %v1233 = vcombine.high %v1101, %v1101
      %v1246 = vcombine.low %v926, %v1198
      %v1247 = vcombine.low %v1199, %v936
      %v1248 = vcombine.low %v941, %v1201
      %v1249 = vcombine.low %v1202, %v951
      %v1250 = vcombine.low %v956, %v1204
      %v1251 = vcombine.low %v1205, %v966
      %v1252 = vcombine.low %v971, %v1207
      %v1253 = vcombine.low %v1208, %v981
      %v1254 = vcombine.low %v986, %v1210
      %v1255 = vcombine.low %v1211, %v996
      %v1256 = vcombine.low %v1001, %v1213
      %v1257 = vcombine.low %v1214, %v1011
      %v1258 = vcombine.low %v1016, %v1216
      %v1259 = vcombine.low %v1217, %v1026
      %v1260 = vcombine.low %v1031, %v1219
      %v1261 = vcombine.low %v1220, %v1041
      %v1262 = vcombine.low %v1046, %v1222
      %v1263 = vcombine.low %v1223, %v1056
      %v1264 = vcombine.low %v1061, %v1225
      %v1265 = vcombine.low %v1226, %v1071
      %v1266 = vcombine.low %v1076, %v1228
      %v1267 = vcombine.low %v1229, %v1086
      %v1268 = vcombine.low %v1091, %v1231
      %v1269 = vcombine.low %v1232, %v1101
      %s1294 = scalar_lea.vmem [#allocation2], 16
      %1295 = vst.msk [vmem:[%s1294 + $0x1] sm:$0xff] %vm1104, %v1246
      %vm1296 = vcmask 142336
      %1297 = vst.msk [vmem:[%s1294 + $0x9] sm:$0xf] %vm1296, %v931
      %1298 = vst.msk [vmem:[%s1294 + $0x11] sm:$0xff] %vm1104, %v1247
      %1299 = vst.msk [vmem:[%s1294 + $0x19] sm:$0xf] %vm1296, %v1200
      %1300 = vst.msk [vmem:[%s1294 + $0x21] sm:$0xff] %vm1104, %v1248
      %1301 = vst.msk [vmem:[%s1294 + $0x29] sm:$0xf] %vm1296, %v946
      %1302 = vst.msk [vmem:[%s1294 + $0x31] sm:$0xff] %vm1104, %v1249
      %1303 = vst.msk [vmem:[%s1294 + $0x39] sm:$0xf] %vm1296, %v1203
      %1304 = vst.msk [vmem:[%s1294 + $0x41] sm:$0xff] %vm1104, %v1250
      %1305 = vst.msk [vmem:[%s1294 + $0x49] sm:$0xf] %vm1296, %v961
      %1306 = vst.msk [vmem:[%s1294 + $0x51] sm:$0xff] %vm1104, %v1251
      %1307 = vst.msk [vmem:[%s1294 + $0x59] sm:$0xf] %vm1296, %v1206
      %1308 = vst.msk [vmem:[%s1294 + $0x61] sm:$0xff] %vm1104, %v1252
      %1309 = vst.msk [vmem:[%s1294 + $0x69] sm:$0xf] %vm1296, %v976
      %1310 = vst.msk [vmem:[%s1294 + $0x71] sm:$0xff] %vm1104, %v1253
      %1311 = vst.msk [vmem:[%s1294 + $0x79] sm:$0xf] %vm1296, %v1209
      %1312 = vst.msk [vmem:[%s1294 + $0x81] sm:$0xff] %vm1104, %v1254
      %1313 = vst.msk [vmem:[%s1294 + $0x89] sm:$0xf] %vm1296, %v991
      %1314 = vst.msk [vmem:[%s1294 + $0x91] sm:$0xff] %vm1104, %v1255
      %1315 = vst.msk [vmem:[%s1294 + $0x99] sm:$0xf] %vm1296, %v1212
      %1316 = vst.msk [vmem:[%s1294 + $0xa1] sm:$0xff] %vm1104, %v1256
      %1317 = vst.msk [vmem:[%s1294 + $0xa9] sm:$0xf] %vm1296, %v1006
      %1318 = vst.msk [vmem:[%s1294 + $0xb1] sm:$0xff] %vm1104, %v1257
      %1319 = vst.msk [vmem:[%s1294 + $0xb9] sm:$0xf] %vm1296, %v1215
      %1320 = vst.msk [vmem:[%s1294 + $0xe1] sm:$0xff] %vm1104, %v1258
      %1321 = vst.msk [vmem:[%s1294 + $0xe9] sm:$0xf] %vm1296, %v1021
      %1322 = vst.msk [vmem:[%s1294 + $0xf1] sm:$0xff] %vm1104, %v1259
      %1323 = vst.msk [vmem:[%s1294 + $0xf9] sm:$0xf] %vm1296, %v1218
      %1324 = vst.msk [vmem:[%s1294 + $0x101] sm:$0xff] %vm1104, %v1260
      %1325 = vst.msk [vmem:[%s1294 + $0x109] sm:$0xf] %vm1296, %v1036
      %1326 = vst.msk [vmem:[%s1294 + $0x111] sm:$0xff] %vm1104, %v1261
      %1327 = vst.msk [vmem:[%s1294 + $0x119] sm:$0xf] %vm1296, %v1221
      %1328 = vst.msk [vmem:[%s1294 + $0x121] sm:$0xff] %vm1104, %v1262
      %1329 = vst.msk [vmem:[%s1294 + $0x129] sm:$0xf] %vm1296, %v1051
      %1330 = vst.msk [vmem:[%s1294 + $0x131] sm:$0xff] %vm1104, %v1263
      %1331 = vst.msk [vmem:[%s1294 + $0x139] sm:$0xf] %vm1296, %v1224
      %1332 = vst.msk [vmem:[%s1294 + $0x141] sm:$0xff] %vm1104, %v1264
      %1333 = vst.msk [vmem:[%s1294 + $0x149] sm:$0xf] %vm1296, %v1066
      %1334 = vst.msk [vmem:[%s1294 + $0x151] sm:$0xff] %vm1104, %v1265
      %1335 = vst.msk [vmem:[%s1294 + $0x159] sm:$0xf] %vm1296, %v1227
      %1336 = vst.msk [vmem:[%s1294 + $0x161] sm:$0xff] %vm1104, %v1266
      %1337 = vst.msk [vmem:[%s1294 + $0x169] sm:$0xf] %vm1296, %v1081
      %1338 = vst.msk [vmem:[%s1294 + $0x171] sm:$0xff] %vm1104, %v1267
      %1339 = vst.msk [vmem:[%s1294 + $0x179] sm:$0xf] %vm1296, %v1230
      %1340 = vst.msk [vmem:[%s1294 + $0x181] sm:$0xff] %vm1104, %v1268
      %1341 = vst.msk [vmem:[%s1294 + $0x189] sm:$0xf] %vm1296, %v1096
      %1342 = vst.msk [vmem:[%s1294 + $0x191] sm:$0xff] %vm1104, %v1269
      %1343 = vst.msk [vmem:[%s1294 + $0x199] sm:$0xf] %vm1296, %v1233
      %v1344 = vld [vmem:[#allocation2] sm:$0xff]
      %v1345 = vld [vmem:[#allocation2 + $0x8] sm:$0x3f]
      %v1346 = vld [vmem:[#allocation2 + $0x10] sm:$0xff]
      %v1347 = vld [vmem:[#allocation2 + $0x18] sm:$0x3f]
      %v1348 = vld [vmem:[#allocation2 + $0x20] sm:$0xff]
      %v1349 = vld [vmem:[#allocation2 + $0x28] sm:$0x3f]
      %v1350 = vld [vmem:[#allocation2 + $0x30] sm:$0xff]
      %v1351 = vld [vmem:[#allocation2 + $0x38] sm:$0x3f]
      %v1352 = vld [vmem:[#allocation2 + $0x40] sm:$0xff]
      %v1353 = vld [vmem:[#allocation2 + $0x48] sm:$0x3f]
      %v1354 = vld [vmem:[#allocation2 + $0x50] sm:$0xff]
      %v1355 = vld [vmem:[#allocation2 + $0x58] sm:$0x3f]
      %v1356 = vld [vmem:[#allocation2 + $0x60] sm:$0xff]
      %v1357 = vld [vmem:[#allocation2 + $0x68] sm:$0x3f]
      %v1358 = vld [vmem:[#allocation2 + $0x70] sm:$0xff]
      %v1359 = vld [vmem:[#allocation2 + $0x78] sm:$0x3f]
      %v1360 = vld [vmem:[#allocation2 + $0x80] sm:$0xff]
      %v1361 = vld [vmem:[#allocation2 + $0x88] sm:$0x3f]
      %v1362 = vld [vmem:[#allocation2 + $0x90] sm:$0xff]
      %v1363 = vld [vmem:[#allocation2 + $0x98] sm:$0x3f]
      %v1364 = vld [vmem:[#allocation2 + $0xa0] sm:$0xff]
      %v1365 = vld [vmem:[#allocation2 + $0xa8] sm:$0x3f]
      %v1366 = vld [vmem:[#allocation2 + $0xb0] sm:$0xff]
      %v1367 = vld [vmem:[#allocation2 + $0xb8] sm:$0x3f]
      %v1368 = vld [vmem:[#allocation2 + $0xc0] sm:$0xff]
      %v1369 = vld [vmem:[#allocation2 + $0xc8] sm:$0x3f]
      %v1370 = vld [vmem:[#allocation2 + $0xd0] sm:$0xff]
      %v1371 = vld [vmem:[#allocation2 + $0xd8] sm:$0x3f]
      %v1372 = vld [vmem:[#allocation2 + $0xe0] sm:$0xff]
      %v1373 = vld [vmem:[#allocation2 + $0xe8] sm:$0x3f]
      %v1374 = vld [vmem:[#allocation2 + $0xf0] sm:$0xff]
      %v1375 = vld [vmem:[#allocation2 + $0xf8] sm:$0x3f]
      %v1376 = vld [vmem:[#allocation2 + $0x100] sm:$0xff]
      %v1377 = vld [vmem:[#allocation2 + $0x108] sm:$0x3f]
      %v1378 = vld [vmem:[#allocation2 + $0x110] sm:$0xff]
      %v1379 = vld [vmem:[#allocation2 + $0x118] sm:$0x3f]
      %v1380 = vld [vmem:[#allocation2 + $0x120] sm:$0xff]
      %v1381 = vld [vmem:[#allocation2 + $0x128] sm:$0x3f]
      %v1382 = vld [vmem:[#allocation2 + $0x130] sm:$0xff]
      %v1383 = vld [vmem:[#allocation2 + $0x138] sm:$0x3f]
      %v1384 = vld [vmem:[#allocation2 + $0x140] sm:$0xff]
      %v1385 = vld [vmem:[#allocation2 + $0x148] sm:$0x3f]
      %v1386 = vld [vmem:[#allocation2 + $0x150] sm:$0xff]
      %v1387 = vld [vmem:[#allocation2 + $0x158] sm:$0x3f]
      %v1388 = vld [vmem:[#allocation2 + $0x160] sm:$0xff]
      %v1389 = vld [vmem:[#allocation2 + $0x168] sm:$0x3f]
      %v1390 = vld [vmem:[#allocation2 + $0x170] sm:$0xff]
      %v1391 = vld [vmem:[#allocation2 + $0x178] sm:$0x3f]
      %v1392 = vld [vmem:[#allocation2 + $0x180] sm:$0xff]
      %v1393 = vld [vmem:[#allocation2 + $0x188] sm:$0x3f]
      %v1394 = vld [vmem:[#allocation2 + $0x190] sm:$0xff]
      %v1395 = vld [vmem:[#allocation2 + $0x198] sm:$0x3f]
      %v1396 = vld [vmem:[#allocation2 + $0x1a0] sm:$0xff]
      %v1397 = vld [vmem:[#allocation2 + $0x1a8] sm:$0x3f]
      %v1398 = vld [vmem:[#allocation2 + $0x1b0] sm:$0xff]
      %v1399 = vld [vmem:[#allocation2 + $0x1b8] sm:$0x3f]
      %vm1448 = vcmask 1046528
      %v1449 = vrot.slane %v1344, 1
      %v1450 = vrot.slane %v1345, 1
      %v1451 = vsel %vm1448, %v1449, %v1450
      %v1452 = vrot.slane %v1346, 1
      %v1453 = vrot.slane %v1347, 1
      %v1454 = vsel %vm1448, %v1452, %v1453
      %v1455 = vrot.slane %v1348, 1
      %v1456 = vrot.slane %v1349, 1
      %v1457 = vsel %vm1448, %v1455, %v1456
      %v1458 = vrot.slane %v1350, 1
      %v1459 = vrot.slane %v1351, 1
      %v1460 = vsel %vm1448, %v1458, %v1459
      %v1461 = vrot.slane %v1352, 1
      %v1462 = vrot.slane %v1353, 1
      %v1463 = vsel %vm1448, %v1461, %v1462
      %v1464 = vrot.slane %v1354, 1
      %v1465 = vrot.slane %v1355, 1
      %v1466 = vsel %vm1448, %v1464, %v1465
      %v1467 = vrot.slane %v1356, 1
      %v1468 = vrot.slane %v1357, 1
      %v1469 = vsel %vm1448, %v1467, %v1468
      %v1470 = vrot.slane %v1358, 1
      %v1471 = vrot.slane %v1359, 1
      %v1472 = vsel %vm1448, %v1470, %v1471
      %v1473 = vrot.slane %v1360, 1
      %v1474 = vrot.slane %v1361, 1
      %v1475 = vsel %vm1448, %v1473, %v1474
      %v1476 = vrot.slane %v1362, 1
      %v1477 = vrot.slane %v1363, 1
      %v1478 = vsel %vm1448, %v1476, %v1477
      %v1479 = vrot.slane %v1364, 1
      %v1480 = vrot.slane %v1365, 1
      %v1481 = vsel %vm1448, %v1479, %v1480
      %v1482 = vrot.slane %v1366, 1
      %v1483 = vrot.slane %v1367, 1
      %v1484 = vsel %vm1448, %v1482, %v1483
      %v1485 = vrot.slane %v1372, 1
      %v1486 = vrot.slane %v1373, 1
      %v1487 = vsel %vm1448, %v1485, %v1486
      %v1488 = vrot.slane %v1374, 1
      %v1489 = vrot.slane %v1375, 1
      %v1490 = vsel %vm1448, %v1488, %v1489
      %v1491 = vrot.slane %v1376, 1
      %v1492 = vrot.slane %v1377, 1
      %v1493 = vsel %vm1448, %v1491, %v1492
      %v1494 = vrot.slane %v1378, 1
      %v1495 = vrot.slane %v1379, 1
      %v1496 = vsel %vm1448, %v1494, %v1495
      %v1497 = vrot.slane %v1380, 1
      %v1498 = vrot.slane %v1381, 1
      %v1499 = vsel %vm1448, %v1497, %v1498
      %v1500 = vrot.slane %v1382, 1
      %v1501 = vrot.slane %v1383, 1
      %v1502 = vsel %vm1448, %v1500, %v1501
      %v1503 = vrot.slane %v1384, 1
      %v1504 = vrot.slane %v1385, 1
      %v1505 = vsel %vm1448, %v1503, %v1504
      %v1506 = vrot.slane %v1386, 1
      %v1507 = vrot.slane %v1387, 1
      %v1508 = vsel %vm1448, %v1506, %v1507
      %v1509 = vrot.slane %v1388, 1
      %v1510 = vrot.slane %v1389, 1
      %v1511 = vsel %vm1448, %v1509, %v1510
      %v1512 = vrot.slane %v1390, 1
      %v1513 = vrot.slane %v1391, 1
      %v1514 = vsel %vm1448, %v1512, %v1513
      %v1515 = vrot.slane %v1392, 1
      %v1516 = vrot.slane %v1393, 1
      %v1517 = vsel %vm1448, %v1515, %v1516
      %v1518 = vrot.slane %v1394, 1
      %v1519 = vrot.slane %v1395, 1
      %v1520 = vsel %vm1448, %v1518, %v1519
      %1521 = vrot.lane.b32.xlu0 %v1451, 126
      %v1522 = vpop.permute.xlu0 %1521
      %1523 = vrot.lane.b32.xlu0 %v1450, 126
      %v1524 = vpop.permute.xlu0 %1523
      %1525 = vrot.lane.b32.xlu0 %v1454, 126
      %v1526 = vpop.permute.xlu0 %1525
      %1527 = vrot.lane.b32.xlu0 %v1453, 126
      %v1528 = vpop.permute.xlu0 %1527
      %1529 = vrot.lane.b32.xlu0 %v1457, 126
      %v1530 = vpop.permute.xlu0 %1529
      %1531 = vrot.lane.b32.xlu0 %v1456, 126
      %v1532 = vpop.permute.xlu0 %1531
      %1533 = vrot.lane.b32.xlu0 %v1460, 126
      %v1534 = vpop.permute.xlu0 %1533
      %1535 = vrot.lane.b32.xlu0 %v1459, 126
      %v1536 = vpop.permute.xlu0 %1535
      %1537 = vrot.lane.b32.xlu0 %v1463, 126
      %v1538 = vpop.permute.xlu0 %1537
      %1539 = vrot.lane.b32.xlu0 %v1462, 126
      %v1540 = vpop.permute.xlu0 %1539
      %1541 = vrot.lane.b32.xlu0 %v1466, 126
      %v1542 = vpop.permute.xlu0 %1541
      %1543 = vrot.lane.b32.xlu0 %v1465, 126
      %v1544 = vpop.permute.xlu0 %1543
      %1545 = vrot.lane.b32.xlu0 %v1469, 126
      %v1546 = vpop.permute.xlu0 %1545
      %1547 = vrot.lane.b32.xlu0 %v1468, 126
      %v1548 = vpop.permute.xlu0 %1547
      %1549 = vrot.lane.b32.xlu0 %v1472, 126
      %v1550 = vpop.permute.xlu0 %1549
      %1551 = vrot.lane.b32.xlu0 %v1471, 126
      %v1552 = vpop.permute.xlu0 %1551
      %1553 = vrot.lane.b32.xlu0 %v1475, 126
      %v1554 = vpop.permute.xlu0 %1553
      %1555 = vrot.lane.b32.xlu0 %v1474, 126
      %v1556 = vpop.permute.xlu0 %1555
      %1557 = vrot.lane.b32.xlu0 %v1478, 126
      %v1558 = vpop.permute.xlu0 %1557
      %1559 = vrot.lane.b32.xlu0 %v1477, 126
      %v1560 = vpop.permute.xlu0 %1559
      %1561 = vrot.lane.b32.xlu0 %v1481, 126
      %v1562 = vpop.permute.xlu0 %1561
      %1563 = vrot.lane.b32.xlu0 %v1480, 126
      %v1564 = vpop.permute.xlu0 %1563
      %1565 = vrot.lane.b32.xlu0 %v1484, 126
      %v1566 = vpop.permute.xlu0 %1565
      %1567 = vrot.lane.b32.xlu0 %v1483, 126
      %v1568 = vpop.permute.xlu0 %1567
      %1569 = vrot.lane.b32.xlu0 %v1487, 126
      %v1570 = vpop.permute.xlu0 %1569
      %1571 = vrot.lane.b32.xlu0 %v1486, 126
      %v1572 = vpop.permute.xlu0 %1571
      %1573 = vrot.lane.b32.xlu0 %v1490, 126
      %v1574 = vpop.permute.xlu0 %1573
      %1575 = vrot.lane.b32.xlu0 %v1489, 126
      %v1576 = vpop.permute.xlu0 %1575
      %1577 = vrot.lane.b32.xlu0 %v1493, 126
      %v1578 = vpop.permute.xlu0 %1577
      %1579 = vrot.lane.b32.xlu0 %v1492, 126
      %v1580 = vpop.permute.xlu0 %1579
      %1581 = vrot.lane.b32.xlu0 %v1496, 126
      %v1582 = vpop.permute.xlu0 %1581
      %1583 = vrot.lane.b32.xlu0 %v1495, 126
      %v1584 = vpop.permute.xlu0 %1583
      %1585 = vrot.lane.b32.xlu0 %v1499, 126
      %v1586 = vpop.permute.xlu0 %1585
      %1587 = vrot.lane.b32.xlu0 %v1498, 126
      %v1588 = vpop.permute.xlu0 %1587
      %1589 = vrot.lane.b32.xlu0 %v1502, 126
      %v1590 = vpop.permute.xlu0 %1589
      %1591 = vrot.lane.b32.xlu0 %v1501, 126
      %v1592 = vpop.permute.xlu0 %1591
      %1593 = vrot.lane.b32.xlu0 %v1505, 126
      %v1594 = vpop.permute.xlu0 %1593
      %1595 = vrot.lane.b32.xlu0 %v1504, 126
      %v1596 = vpop.permute.xlu0 %1595
      %1597 = vrot.lane.b32.xlu0 %v1508, 126
      %v1598 = vpop.permute.xlu0 %1597
      %1599 = vrot.lane.b32.xlu0 %v1507, 126
      %v1600 = vpop.permute.xlu0 %1599
      %1601 = vrot.lane.b32.xlu0 %v1511, 126
      %v1602 = vpop.permute.xlu0 %1601
      %1603 = vrot.lane.b32.xlu0 %v1510, 126
      %v1604 = vpop.permute.xlu0 %1603
      %1605 = vrot.lane.b32.xlu0 %v1514, 126
      %v1606 = vpop.permute.xlu0 %1605
      %1607 = vrot.lane.b32.xlu0 %v1513, 126
      %v1608 = vpop.permute.xlu0 %1607
      %1609 = vrot.lane.b32.xlu0 %v1517, 126
      %v1610 = vpop.permute.xlu0 %1609
      %1611 = vrot.lane.b32.xlu0 %v1516, 126
      %v1612 = vpop.permute.xlu0 %1611
      %1613 = vrot.lane.b32.xlu0 %v1520, 126
      %v1614 = vpop.permute.xlu0 %1613
      %1615 = vrot.lane.b32.xlu0 %v1519, 126
      %v1616 = vpop.permute.xlu0 %1615
      %v1665 = vadd.f32 %v1344, %v1522
      %v1666 = vadd.f32 %v1345, %v1524
      %v1667 = vadd.f32 %v1346, %v1526
      %v1668 = vadd.f32 %v1347, %v1528
      %v1669 = vadd.f32 %v1348, %v1530
      %v1670 = vadd.f32 %v1349, %v1532
      %v1671 = vadd.f32 %v1350, %v1534
      %v1672 = vadd.f32 %v1351, %v1536
      %v1673 = vadd.f32 %v1352, %v1538
      %v1674 = vadd.f32 %v1353, %v1540
      %v1675 = vadd.f32 %v1354, %v1542
      %v1676 = vadd.f32 %v1355, %v1544
      %v1677 = vadd.f32 %v1356, %v1546
      %v1678 = vadd.f32 %v1357, %v1548
      %v1679 = vadd.f32 %v1358, %v1550
      %v1680 = vadd.f32 %v1359, %v1552
      %v1681 = vadd.f32 %v1360, %v1554
      %v1682 = vadd.f32 %v1361, %v1556
      %v1683 = vadd.f32 %v1362, %v1558
      %v1684 = vadd.f32 %v1363, %v1560
      %v1685 = vadd.f32 %v1364, %v1562
      %v1686 = vadd.f32 %v1365, %v1564
      %v1687 = vadd.f32 %v1366, %v1566
      %v1688 = vadd.f32 %v1367, %v1568
      %v1689 = vadd.f32 %v1372, %v1570
      %v1690 = vadd.f32 %v1373, %v1572
      %v1691 = vadd.f32 %v1374, %v1574
      %v1692 = vadd.f32 %v1375, %v1576
      %v1693 = vadd.f32 %v1376, %v1578
      %v1694 = vadd.f32 %v1377, %v1580
      %v1695 = vadd.f32 %v1378, %v1582
      %v1696 = vadd.f32 %v1379, %v1584
      %v1697 = vadd.f32 %v1380, %v1586
      %v1698 = vadd.f32 %v1381, %v1588
      %v1699 = vadd.f32 %v1382, %v1590
      %v1700 = vadd.f32 %v1383, %v1592
      %v1701 = vadd.f32 %v1384, %v1594
      %v1702 = vadd.f32 %v1385, %v1596
      %v1703 = vadd.f32 %v1386, %v1598
      %v1704 = vadd.f32 %v1387, %v1600
      %v1705 = vadd.f32 %v1388, %v1602
      %v1706 = vadd.f32 %v1389, %v1604
      %v1707 = vadd.f32 %v1390, %v1606
      %v1708 = vadd.f32 %v1391, %v1608
      %v1709 = vadd.f32 %v1392, %v1610
      %v1710 = vadd.f32 %v1393, %v1612
      %v1711 = vadd.f32 %v1394, %v1614
      %v1712 = vadd.f32 %v1395, %v1616
      %vm1713 = vcmask 1045504
      %v1714 = vrot.slane %v1344, 2
      %v1715 = vrot.slane %v1345, 2
      %v1716 = vsel %vm1713, %v1714, %v1715
      %v1717 = vrot.slane %v1346, 2
      %v1718 = vrot.slane %v1347, 2
      %v1719 = vsel %vm1713, %v1717, %v1718
      %v1720 = vrot.slane %v1348, 2
      %v1721 = vrot.slane %v1349, 2
      %v1722 = vsel %vm1713, %v1720, %v1721
      %v1723 = vrot.slane %v1350, 2
      %v1724 = vrot.slane %v1351, 2
      %v1725 = vsel %vm1713, %v1723, %v1724
      %v1726 = vrot.slane %v1352, 2
      %v1727 = vrot.slane %v1353, 2
      %v1728 = vsel %vm1713, %v1726, %v1727
      %v1729 = vrot.slane %v1354, 2
      %v1730 = vrot.slane %v1355, 2
      %v1731 = vsel %vm1713, %v1729, %v1730
      %v1732 = vrot.slane %v1356, 2
      %v1733 = vrot.slane %v1357, 2
      %v1734 = vsel %vm1713, %v1732, %v1733
      %v1735 = vrot.slane %v1358, 2
      %v1736 = vrot.slane %v1359, 2
      %v1737 = vsel %vm1713, %v1735, %v1736
      %v1738 = vrot.slane %v1360, 2
      %v1739 = vrot.slane %v1361, 2
      %v1740 = vsel %vm1713, %v1738, %v1739
      %v1741 = vrot.slane %v1362, 2
      %v1742 = vrot.slane %v1363, 2
      %v1743 = vsel %vm1713, %v1741, %v1742
      %v1744 = vrot.slane %v1364, 2
      %v1745 = vrot.slane %v1365, 2
      %v1746 = vsel %vm1713, %v1744, %v1745
      %v1747 = vrot.slane %v1366, 2
      %v1748 = vrot.slane %v1367, 2
      %v1749 = vsel %vm1713, %v1747, %v1748
      %v1750 = vrot.slane %v1372, 2
      %v1751 = vrot.slane %v1373, 2
      %v1752 = vsel %vm1713, %v1750, %v1751
      %v1753 = vrot.slane %v1374, 2
      %v1754 = vrot.slane %v1375, 2
      %v1755 = vsel %vm1713, %v1753, %v1754
      %v1756 = vrot.slane %v1376, 2
      %v1757 = vrot.slane %v1377, 2
      %v1758 = vsel %vm1713, %v1756, %v1757
      %v1759 = vrot.slane %v1378, 2
      %v1760 = vrot.slane %v1379, 2
      %v1761 = vsel %vm1713, %v1759, %v1760
      %v1762 = vrot.slane %v1380, 2
      %v1763 = vrot.slane %v1381, 2
      %v1764 = vsel %vm1713, %v1762, %v1763
      %v1765 = vrot.slane %v1382, 2
      %v1766 = vrot.slane %v1383, 2
      %v1767 = vsel %vm1713, %v1765, %v1766
      %v1768 = vrot.slane %v1384, 2
      %v1769 = vrot.slane %v1385, 2
      %v1770 = vsel %vm1713, %v1768, %v1769
      %v1771 = vrot.slane %v1386, 2
      %v1772 = vrot.slane %v1387, 2
      %v1773 = vsel %vm1713, %v1771, %v1772
      %v1774 = vrot.slane %v1388, 2
      %v1775 = vrot.slane %v1389, 2
      %v1776 = vsel %vm1713, %v1774, %v1775
      %v1777 = vrot.slane %v1390, 2
      %v1778 = vrot.slane %v1391, 2
      %v1779 = vsel %vm1713, %v1777, %v1778
      %v1780 = vrot.slane %v1392, 2
      %v1781 = vrot.slane %v1393, 2
      %v1782 = vsel %vm1713, %v1780, %v1781
      %v1783 = vrot.slane %v1394, 2
      %v1784 = vrot.slane %v1395, 2
      %v1785 = vsel %vm1713, %v1783, %v1784
      %1786 = vrot.lane.b32.xlu0 %v1716, 124
      %v1787 = vpop.permute.xlu0 %1786
      %1788 = vrot.lane.b32.xlu0 %v1715, 124
      %v1789 = vpop.permute.xlu0 %1788
      %1790 = vrot.lane.b32.xlu0 %v1719, 124
      %v1791 = vpop.permute.xlu0 %1790
      %1792 = vrot.lane.b32.xlu0 %v1718, 124
      %v1793 = vpop.permute.xlu0 %1792
      %1794 = vrot.lane.b32.xlu0 %v1722, 124
      %v1795 = vpop.permute.xlu0 %1794
      %1796 = vrot.lane.b32.xlu0 %v1721, 124
      %v1797 = vpop.permute.xlu0 %1796
      %1798 = vrot.lane.b32.xlu0 %v1725, 124
      %v1799 = vpop.permute.xlu0 %1798
      %1800 = vrot.lane.b32.xlu0 %v1724, 124
      %v1801 = vpop.permute.xlu0 %1800
      %1802 = vrot.lane.b32.xlu0 %v1728, 124
      %v1803 = vpop.permute.xlu0 %1802
      %1804 = vrot.lane.b32.xlu0 %v1727, 124
      %v1805 = vpop.permute.xlu0 %1804
      %1806 = vrot.lane.b32.xlu0 %v1731, 124
      %v1807 = vpop.permute.xlu0 %1806
      %1808 = vrot.lane.b32.xlu0 %v1730, 124
      %v1809 = vpop.permute.xlu0 %1808
      %1810 = vrot.lane.b32.xlu0 %v1734, 124
      %v1811 = vpop.permute.xlu0 %1810
      %1812 = vrot.lane.b32.xlu0 %v1733, 124
      %v1813 = vpop.permute.xlu0 %1812
      %1814 = vrot.lane.b32.xlu0 %v1737, 124
      %v1815 = vpop.permute.xlu0 %1814
      %1816 = vrot.lane.b32.xlu0 %v1736, 124
      %v1817 = vpop.permute.xlu0 %1816
      %1818 = vrot.lane.b32.xlu0 %v1740, 124
      %v1819 = vpop.permute.xlu0 %1818
      %1820 = vrot.lane.b32.xlu0 %v1739, 124
      %v1821 = vpop.permute.xlu0 %1820
      %1822 = vrot.lane.b32.xlu0 %v1743, 124
      %v1823 = vpop.permute.xlu0 %1822
      %1824 = vrot.lane.b32.xlu0 %v1742, 124
      %v1825 = vpop.permute.xlu0 %1824
      %1826 = vrot.lane.b32.xlu0 %v1746, 124
      %v1827 = vpop.permute.xlu0 %1826
      %1828 = vrot.lane.b32.xlu0 %v1745, 124
      %v1829 = vpop.permute.xlu0 %1828
      %1830 = vrot.lane.b32.xlu0 %v1749, 124
      %v1831 = vpop.permute.xlu0 %1830
      %1832 = vrot.lane.b32.xlu0 %v1748, 124
      %v1833 = vpop.permute.xlu0 %1832
      %1834 = vrot.lane.b32.xlu0 %v1752, 124
      %v1835 = vpop.permute.xlu0 %1834
      %1836 = vrot.lane.b32.xlu0 %v1751, 124
      %v1837 = vpop.permute.xlu0 %1836
      %1838 = vrot.lane.b32.xlu0 %v1755, 124
      %v1839 = vpop.permute.xlu0 %1838
      %1840 = vrot.lane.b32.xlu0 %v1754, 124
      %v1841 = vpop.permute.xlu0 %1840
      %1842 = vrot.lane.b32.xlu0 %v1758, 124
      %v1843 = vpop.permute.xlu0 %1842
      %1844 = vrot.lane.b32.xlu0 %v1757, 124
      %v1845 = vpop.permute.xlu0 %1844
      %1846 = vrot.lane.b32.xlu0 %v1761, 124
      %v1847 = vpop.permute.xlu0 %1846
      %1848 = vrot.lane.b32.xlu0 %v1760, 124
      %v1849 = vpop.permute.xlu0 %1848
      %1850 = vrot.lane.b32.xlu0 %v1764, 124
      %v1851 = vpop.permute.xlu0 %1850
      %1852 = vrot.lane.b32.xlu0 %v1763, 124
      %v1853 = vpop.permute.xlu0 %1852
      %1854 = vrot.lane.b32.xlu0 %v1767, 124
      %v1855 = vpop.permute.xlu0 %1854
      %1856 = vrot.lane.b32.xlu0 %v1766, 124
      %v1857 = vpop.permute.xlu0 %1856
      %1858 = vrot.lane.b32.xlu0 %v1770, 124
      %v1859 = vpop.permute.xlu0 %1858
      %1860 = vrot.lane.b32.xlu0 %v1769, 124
      %v1861 = vpop.permute.xlu0 %1860
      %1862 = vrot.lane.b32.xlu0 %v1773, 124
      %v1863 = vpop.permute.xlu0 %1862
      %1864 = vrot.lane.b32.xlu0 %v1772, 124
      %v1865 = vpop.permute.xlu0 %1864
      %1866 = vrot.lane.b32.xlu0 %v1776, 124
      %v1867 = vpop.permute.xlu0 %1866
      %1868 = vrot.lane.b32.xlu0 %v1775, 124
      %v1869 = vpop.permute.xlu0 %1868
      %1870 = vrot.lane.b32.xlu0 %v1779, 124
      %v1871 = vpop.permute.xlu0 %1870
      %1872 = vrot.lane.b32.xlu0 %v1778, 124
      %v1873 = vpop.permute.xlu0 %1872
      %1874 = vrot.lane.b32.xlu0 %v1782, 124
      %v1875 = vpop.permute.xlu0 %1874
      %1876 = vrot.lane.b32.xlu0 %v1781, 124
      %v1877 = vpop.permute.xlu0 %1876
      %1878 = vrot.lane.b32.xlu0 %v1785, 124
      %v1879 = vpop.permute.xlu0 %1878
      %1880 = vrot.lane.b32.xlu0 %v1784, 124
      %v1881 = vpop.permute.xlu0 %1880
      %v1930 = vadd.f32 %v1665, %v1787
      %v1931 = vadd.f32 %v1666, %v1789
      %v1932 = vadd.f32 %v1667, %v1791
      %v1933 = vadd.f32 %v1668, %v1793
      %v1934 = vadd.f32 %v1669, %v1795
      %v1935 = vadd.f32 %v1670, %v1797
      %v1936 = vadd.f32 %v1671, %v1799
      %v1937 = vadd.f32 %v1672, %v1801
      %v1938 = vadd.f32 %v1673, %v1803
      %v1939 = vadd.f32 %v1674, %v1805
      %v1940 = vadd.f32 %v1675, %v1807
      %v1941 = vadd.f32 %v1676, %v1809
      %v1942 = vadd.f32 %v1677, %v1811
      %v1943 = vadd.f32 %v1678, %v1813
      %v1944 = vadd.f32 %v1679, %v1815
      %v1945 = vadd.f32 %v1680, %v1817
      %v1946 = vadd.f32 %v1681, %v1819
      %v1947 = vadd.f32 %v1682, %v1821
      %v1948 = vadd.f32 %v1683, %v1823
      %v1949 = vadd.f32 %v1684, %v1825
      %v1950 = vadd.f32 %v1685, %v1827
      %v1951 = vadd.f32 %v1686, %v1829
      %v1952 = vadd.f32 %v1687, %v1831
      %v1953 = vadd.f32 %v1688, %v1833
      %v1954 = vadd.f32 %v1689, %v1835
      %v1955 = vadd.f32 %v1690, %v1837
      %v1956 = vadd.f32 %v1691, %v1839
      %v1957 = vadd.f32 %v1692, %v1841
      %v1958 = vadd.f32 %v1693, %v1843
      %v1959 = vadd.f32 %v1694, %v1845
      %v1960 = vadd.f32 %v1695, %v1847
      %v1961 = vadd.f32 %v1696, %v1849
      %v1962 = vadd.f32 %v1697, %v1851
      %v1963 = vadd.f32 %v1698, %v1853
      %v1964 = vadd.f32 %v1699, %v1855
      %v1965 = vadd.f32 %v1700, %v1857
      %v1966 = vadd.f32 %v1701, %v1859
      %v1967 = vadd.f32 %v1702, %v1861
      %v1968 = vadd.f32 %v1703, %v1863
      %v1969 = vadd.f32 %v1704, %v1865
      %v1970 = vadd.f32 %v1705, %v1867
      %v1971 = vadd.f32 %v1706, %v1869
      %v1972 = vadd.f32 %v1707, %v1871
      %v1973 = vadd.f32 %v1708, %v1873
      %v1974 = vadd.f32 %v1709, %v1875
      %v1975 = vadd.f32 %v1710, %v1877
      %v1976 = vadd.f32 %v1711, %v1879
      %v1977 = vadd.f32 %v1712, %v1881
      %1982 = vrot.lane.b32.xlu0 %v1346, 122
      %v1983 = vpop.permute.xlu0 %1982
      %1984 = vrot.lane.b32.xlu0 %v1347, 122
      %v1985 = vpop.permute.xlu0 %1984
      %1986 = vrot.lane.b32.xlu0 %v1348, 122
      %v1987 = vpop.permute.xlu0 %1986
      %1988 = vrot.lane.b32.xlu0 %v1349, 122
      %v1989 = vpop.permute.xlu0 %1988
      %1990 = vrot.lane.b32.xlu0 %v1350, 122
      %v1991 = vpop.permute.xlu0 %1990
      %1992 = vrot.lane.b32.xlu0 %v1351, 122
      %v1993 = vpop.permute.xlu0 %1992
      %1994 = vrot.lane.b32.xlu0 %v1352, 122
      %v1995 = vpop.permute.xlu0 %1994
      %1996 = vrot.lane.b32.xlu0 %v1353, 122
      %v1997 = vpop.permute.xlu0 %1996
      %1998 = vrot.lane.b32.xlu0 %v1354, 122
      %v1999 = vpop.permute.xlu0 %1998
      %2000 = vrot.lane.b32.xlu0 %v1355, 122
      %v2001 = vpop.permute.xlu0 %2000
      %2002 = vrot.lane.b32.xlu0 %v1356, 122
      %v2003 = vpop.permute.xlu0 %2002
      %2004 = vrot.lane.b32.xlu0 %v1357, 122
      %v2005 = vpop.permute.xlu0 %2004
      %2006 = vrot.lane.b32.xlu0 %v1358, 122
      %v2007 = vpop.permute.xlu0 %2006
      %2008 = vrot.lane.b32.xlu0 %v1359, 122
      %v2009 = vpop.permute.xlu0 %2008
      %2010 = vrot.lane.b32.xlu0 %v1360, 122
      %v2011 = vpop.permute.xlu0 %2010
      %2012 = vrot.lane.b32.xlu0 %v1361, 122
      %v2013 = vpop.permute.xlu0 %2012
      %2014 = vrot.lane.b32.xlu0 %v1362, 122
      %v2015 = vpop.permute.xlu0 %2014
      %2016 = vrot.lane.b32.xlu0 %v1363, 122
      %v2017 = vpop.permute.xlu0 %2016
      %2018 = vrot.lane.b32.xlu0 %v1364, 122
      %v2019 = vpop.permute.xlu0 %2018
      %2020 = vrot.lane.b32.xlu0 %v1365, 122
      %v2021 = vpop.permute.xlu0 %2020
      %2022 = vrot.lane.b32.xlu0 %v1366, 122
      %v2023 = vpop.permute.xlu0 %2022
      %2024 = vrot.lane.b32.xlu0 %v1367, 122
      %v2025 = vpop.permute.xlu0 %2024
      %2026 = vrot.lane.b32.xlu0 %v1368, 122
      %v2027 = vpop.permute.xlu0 %2026
      %2028 = vrot.lane.b32.xlu0 %v1369, 122
      %v2029 = vpop.permute.xlu0 %2028
      %2030 = vrot.lane.b32.xlu0 %v1374, 122
      %v2031 = vpop.permute.xlu0 %2030
      %2032 = vrot.lane.b32.xlu0 %v1375, 122
      %v2033 = vpop.permute.xlu0 %2032
      %2034 = vrot.lane.b32.xlu0 %v1376, 122
      %v2035 = vpop.permute.xlu0 %2034
      %2036 = vrot.lane.b32.xlu0 %v1377, 122
      %v2037 = vpop.permute.xlu0 %2036
      %2038 = vrot.lane.b32.xlu0 %v1378, 122
      %v2039 = vpop.permute.xlu0 %2038
      %2040 = vrot.lane.b32.xlu0 %v1379, 122
      %v2041 = vpop.permute.xlu0 %2040
      %2042 = vrot.lane.b32.xlu0 %v1380, 122
      %v2043 = vpop.permute.xlu0 %2042
      %2044 = vrot.lane.b32.xlu0 %v1381, 122
      %v2045 = vpop.permute.xlu0 %2044
      %2046 = vrot.lane.b32.xlu0 %v1382, 122
      %v2047 = vpop.permute.xlu0 %2046
      %2048 = vrot.lane.b32.xlu0 %v1383, 122
      %v2049 = vpop.permute.xlu0 %2048
      %2050 = vrot.lane.b32.xlu0 %v1384, 122
      %v2051 = vpop.permute.xlu0 %2050
      %2052 = vrot.lane.b32.xlu0 %v1385, 122
      %v2053 = vpop.permute.xlu0 %2052
      %2054 = vrot.lane.b32.xlu0 %v1386, 122
      %v2055 = vpop.permute.xlu0 %2054
      %2056 = vrot.lane.b32.xlu0 %v1387, 122
      %v2057 = vpop.permute.xlu0 %2056
      %2058 = vrot.lane.b32.xlu0 %v1388, 122
      %v2059 = vpop.permute.xlu0 %2058
      %2060 = vrot.lane.b32.xlu0 %v1389, 122
      %v2061 = vpop.permute.xlu0 %2060
      %2062 = vrot.lane.b32.xlu0 %v1390, 122
      %v2063 = vpop.permute.xlu0 %2062
      %2064 = vrot.lane.b32.xlu0 %v1391, 122
      %v2065 = vpop.permute.xlu0 %2064
      %2066 = vrot.lane.b32.xlu0 %v1392, 122
      %v2067 = vpop.permute.xlu0 %2066
      %2068 = vrot.lane.b32.xlu0 %v1393, 122
      %v2069 = vpop.permute.xlu0 %2068
      %2070 = vrot.lane.b32.xlu0 %v1394, 122
      %v2071 = vpop.permute.xlu0 %2070
      %2072 = vrot.lane.b32.xlu0 %v1395, 122
      %v2073 = vpop.permute.xlu0 %2072
      %2074 = vrot.lane.b32.xlu0 %v1396, 122
      %v2075 = vpop.permute.xlu0 %2074
      %2076 = vrot.lane.b32.xlu0 %v1397, 122
      %v2077 = vpop.permute.xlu0 %2076
      %v2126 = vadd.f32 %v1930, %v1983
      %v2127 = vadd.f32 %v1931, %v1985
      %v2128 = vadd.f32 %v1932, %v1987
      %v2129 = vadd.f32 %v1933, %v1989
      %v2130 = vadd.f32 %v1934, %v1991
      %v2131 = vadd.f32 %v1935, %v1993
      %v2132 = vadd.f32 %v1936, %v1995
      %v2133 = vadd.f32 %v1937, %v1997
      %v2134 = vadd.f32 %v1938, %v1999
      %v2135 = vadd.f32 %v1939, %v2001
      %v2136 = vadd.f32 %v1940, %v2003
      %v2137 = vadd.f32 %v1941, %v2005
      %v2138 = vadd.f32 %v1942, %v2007
      %v2139 = vadd.f32 %v1943, %v2009
      %v2140 = vadd.f32 %v1944, %v2011
      %v2141 = vadd.f32 %v1945, %v2013
      %v2142 = vadd.f32 %v1946, %v2015
      %v2143 = vadd.f32 %v1947, %v2017
      %v2144 = vadd.f32 %v1948, %v2019
      %v2145 = vadd.f32 %v1949, %v2021
      %v2146 = vadd.f32 %v1950, %v2023
      %v2147 = vadd.f32 %v1951, %v2025
      %v2148 = vadd.f32 %v1952, %v2027
      %v2149 = vadd.f32 %v1953, %v2029
      %v2150 = vadd.f32 %v1954, %v2031
      %v2151 = vadd.f32 %v1955, %v2033
      %v2152 = vadd.f32 %v1956, %v2035
      %v2153 = vadd.f32 %v1957, %v2037
      %v2154 = vadd.f32 %v1958, %v2039
      %v2155 = vadd.f32 %v1959, %v2041
      %v2156 = vadd.f32 %v1960, %v2043
      %v2157 = vadd.f32 %v1961, %v2045
      %v2158 = vadd.f32 %v1962, %v2047
      %v2159 = vadd.f32 %v1963, %v2049
      %v2160 = vadd.f32 %v1964, %v2051
      %v2161 = vadd.f32 %v1965, %v2053
      %v2162 = vadd.f32 %v1966, %v2055
      %v2163 = vadd.f32 %v1967, %v2057
      %v2164 = vadd.f32 %v1968, %v2059
      %v2165 = vadd.f32 %v1969, %v2061
      %v2166 = vadd.f32 %v1970, %v2063
      %v2167 = vadd.f32 %v1971, %v2065
      %v2168 = vadd.f32 %v1972, %v2067
      %v2169 = vadd.f32 %v1973, %v2069
      %v2170 = vadd.f32 %v1974, %v2071
      %v2171 = vadd.f32 %v1975, %v2073
      %v2172 = vadd.f32 %v1976, %v2075
      %v2173 = vadd.f32 %v1977, %v2077
      %v2174 = vrot.slane %v1368, 1
      %v2175 = vrot.slane %v1369, 1
      %v2176 = vsel %vm1448, %v2174, %v2175
      %v2177 = vrot.slane %v1396, 1
      %v2178 = vrot.slane %v1397, 1
      %v2179 = vsel %vm1448, %v2177, %v2178
      %2180 = vrot.lane.b32.xlu0 %v1454, 120
      %v2181 = vpop.permute.xlu0 %2180
      %2182 = vrot.lane.b32.xlu0 %v1453, 120
      %v2183 = vpop.permute.xlu0 %2182
      %2184 = vrot.lane.b32.xlu0 %v1457, 120
      %v2185 = vpop.permute.xlu0 %2184
      %2186 = vrot.lane.b32.xlu0 %v1456, 120
      %v2187 = vpop.permute.xlu0 %2186
      %2188 = vrot.lane.b32.xlu0 %v1460, 120
      %v2189 = vpop.permute.xlu0 %2188
      %2190 = vrot.lane.b32.xlu0 %v1459, 120
      %v2191 = vpop.permute.xlu0 %2190
      %2192 = vrot.lane.b32.xlu0 %v1463, 120
      %v2193 = vpop.permute.xlu0 %2192
      %2194 = vrot.lane.b32.xlu0 %v1462, 120
      %v2195 = vpop.permute.xlu0 %2194
      %2196 = vrot.lane.b32.xlu0 %v1466, 120
      %v2197 = vpop.permute.xlu0 %2196
      %2198 = vrot.lane.b32.xlu0 %v1465, 120
      %v2199 = vpop.permute.xlu0 %2198
      %2200 = vrot.lane.b32.xlu0 %v1469, 120
      %v2201 = vpop.permute.xlu0 %2200
      %2202 = vrot.lane.b32.xlu0 %v1468, 120
      %v2203 = vpop.permute.xlu0 %2202
      %2204 = vrot.lane.b32.xlu0 %v1472, 120
      %v2205 = vpop.permute.xlu0 %2204
      %2206 = vrot.lane.b32.xlu0 %v1471, 120
      %v2207 = vpop.permute.xlu0 %2206
      %2208 = vrot.lane.b32.xlu0 %v1475, 120
      %v2209 = vpop.permute.xlu0 %2208
      %2210 = vrot.lane.b32.xlu0 %v1474, 120
      %v2211 = vpop.permute.xlu0 %2210
      %2212 = vrot.lane.b32.xlu0 %v1478, 120
      %v2213 = vpop.permute.xlu0 %2212
      %2214 = vrot.lane.b32.xlu0 %v1477, 120
      %v2215 = vpop.permute.xlu0 %2214
      %2216 = vrot.lane.b32.xlu0 %v1481, 120
      %v2217 = vpop.permute.xlu0 %2216
      %2218 = vrot.lane.b32.xlu0 %v1480, 120
      %v2219 = vpop.permute.xlu0 %2218
      %2220 = vrot.lane.b32.xlu0 %v1484, 120
      %v2221 = vpop.permute.xlu0 %2220
      %2222 = vrot.lane.b32.xlu0 %v1483, 120
      %v2223 = vpop.permute.xlu0 %2222
      %2224 = vrot.lane.b32.xlu0 %v2176, 120
      %v2225 = vpop.permute.xlu0 %2224
      %2226 = vrot.lane.b32.xlu0 %v2175, 120
      %v2227 = vpop.permute.xlu0 %2226
      %2228 = vrot.lane.b32.xlu0 %v1490, 120
      %v2229 = vpop.permute.xlu0 %2228
      %2230 = vrot.lane.b32.xlu0 %v1489, 120
      %v2231 = vpop.permute.xlu0 %2230
      %2232 = vrot.lane.b32.xlu0 %v1493, 120
      %v2233 = vpop.permute.xlu0 %2232
      %2234 = vrot.lane.b32.xlu0 %v1492, 120
      %v2235 = vpop.permute.xlu0 %2234
      %2236 = vrot.lane.b32.xlu0 %v1496, 120
      %v2237 = vpop.permute.xlu0 %2236
      %2238 = vrot.lane.b32.xlu0 %v1495, 120
      %v2239 = vpop.permute.xlu0 %2238
      %2240 = vrot.lane.b32.xlu0 %v1499, 120
      %v2241 = vpop.permute.xlu0 %2240
      %2242 = vrot.lane.b32.xlu0 %v1498, 120
      %v2243 = vpop.permute.xlu0 %2242
      %2244 = vrot.lane.b32.xlu0 %v1502, 120
      %v2245 = vpop.permute.xlu0 %2244
      %2246 = vrot.lane.b32.xlu0 %v1501, 120
      %v2247 = vpop.permute.xlu0 %2246
      %2248 = vrot.lane.b32.xlu0 %v1505, 120
      %v2249 = vpop.permute.xlu0 %2248
      %2250 = vrot.lane.b32.xlu0 %v1504, 120
      %v2251 = vpop.permute.xlu0 %2250
      %2252 = vrot.lane.b32.xlu0 %v1508, 120
      %v2253 = vpop.permute.xlu0 %2252
      %2254 = vrot.lane.b32.xlu0 %v1507, 120
      %v2255 = vpop.permute.xlu0 %2254
      %2256 = vrot.lane.b32.xlu0 %v1511, 120
      %v2257 = vpop.permute.xlu0 %2256
      %2258 = vrot.lane.b32.xlu0 %v1510, 120
      %v2259 = vpop.permute.xlu0 %2258
      %2260 = vrot.lane.b32.xlu0 %v1514, 120
      %v2261 = vpop.permute.xlu0 %2260
      %2262 = vrot.lane.b32.xlu0 %v1513, 120
      %v2263 = vpop.permute.xlu0 %2262
      %2264 = vrot.lane.b32.xlu0 %v1517, 120
      %v2265 = vpop.permute.xlu0 %2264
      %2266 = vrot.lane.b32.xlu0 %v1516, 120
      %v2267 = vpop.permute.xlu0 %2266
      %2268 = vrot.lane.b32.xlu0 %v1520, 120
      %v2269 = vpop.permute.xlu0 %2268
      %2270 = vrot.lane.b32.xlu0 %v1519, 120
      %v2271 = vpop.permute.xlu0 %2270
      %2272 = vrot.lane.b32.xlu0 %v2179, 120
      %v2273 = vpop.permute.xlu0 %2272
      %2274 = vrot.lane.b32.xlu0 %v2178, 120
      %v2275 = vpop.permute.xlu0 %2274
      %v2324 = vadd.f32 %v2126, %v2181
      %v2325 = vadd.f32 %v2127, %v2183
      %v2326 = vadd.f32 %v2128, %v2185
      %v2327 = vadd.f32 %v2129, %v2187
      %v2328 = vadd.f32 %v2130, %v2189
      %v2329 = vadd.f32 %v2131, %v2191
      %v2330 = vadd.f32 %v2132, %v2193
      %v2331 = vadd.f32 %v2133, %v2195
      %v2332 = vadd.f32 %v2134, %v2197
      %v2333 = vadd.f32 %v2135, %v2199
      %v2334 = vadd.f32 %v2136, %v2201
      %v2335 = vadd.f32 %v2137, %v2203
      %v2336 = vadd.f32 %v2138, %v2205
      %v2337 = vadd.f32 %v2139, %v2207
      %v2338 = vadd.f32 %v2140, %v2209
      %v2339 = vadd.f32 %v2141, %v2211
      %v2340 = vadd.f32 %v2142, %v2213
      %v2341 = vadd.f32 %v2143, %v2215
      %v2342 = vadd.f32 %v2144, %v2217
      %v2343 = vadd.f32 %v2145, %v2219
      %v2344 = vadd.f32 %v2146, %v2221
      %v2345 = vadd.f32 %v2147, %v2223
      %v2346 = vadd.f32 %v2148, %v2225
      %v2347 = vadd.f32 %v2149, %v2227
      %v2348 = vadd.f32 %v2150, %v2229
      %v2349 = vadd.f32 %v2151, %v2231
      %v2350 = vadd.f32 %v2152, %v2233
      %v2351 = vadd.f32 %v2153, %v2235
      %v2352 = vadd.f32 %v2154, %v2237
      %v2353 = vadd.f32 %v2155, %v2239
      %v2354 = vadd.f32 %v2156, %v2241
      %v2355 = vadd.f32 %v2157, %v2243
      %v2356 = vadd.f32 %v2158, %v2245
      %v2357 = vadd.f32 %v2159, %v2247
      %v2358 = vadd.f32 %v2160, %v2249
      %v2359 = vadd.f32 %v2161, %v2251
      %v2360 = vadd.f32 %v2162, %v2253
      %v2361 = vadd.f32 %v2163, %v2255
      %v2362 = vadd.f32 %v2164, %v2257
      %v2363 = vadd.f32 %v2165, %v2259
      %v2364 = vadd.f32 %v2166, %v2261
      %v2365 = vadd.f32 %v2167, %v2263
      %v2366 = vadd.f32 %v2168, %v2265
      %v2367 = vadd.f32 %v2169, %v2267
      %v2368 = vadd.f32 %v2170, %v2269
      %v2369 = vadd.f32 %v2171, %v2271
      %v2370 = vadd.f32 %v2172, %v2273
      %v2371 = vadd.f32 %v2173, %v2275
      %v2372 = vrot.slane %v1368, 2
      %v2373 = vrot.slane %v1369, 2
      %v2374 = vsel %vm1713, %v2372, %v2373
      %v2375 = vrot.slane %v1396, 2
      %v2376 = vrot.slane %v1397, 2
      %v2377 = vsel %vm1713, %v2375, %v2376
      %2378 = vrot.lane.b32.xlu0 %v1719, 118
      %v2379 = vpop.permute.xlu0 %2378
      %2380 = vrot.lane.b32.xlu0 %v1718, 118
      %v2381 = vpop.permute.xlu0 %2380
      %2382 = vrot.lane.b32.xlu0 %v1722, 118
      %v2383 = vpop.permute.xlu0 %2382
      %2384 = vrot.lane.b32.xlu0 %v1721, 118
      %v2385 = vpop.permute.xlu0 %2384
      %2386 = vrot.lane.b32.xlu0 %v1725, 118
      %v2387 = vpop.permute.xlu0 %2386
      %2388 = vrot.lane.b32.xlu0 %v1724, 118
      %v2389 = vpop.permute.xlu0 %2388
      %2390 = vrot.lane.b32.xlu0 %v1728, 118
      %v2391 = vpop.permute.xlu0 %2390
      %2392 = vrot.lane.b32.xlu0 %v1727, 118
      %v2393 = vpop.permute.xlu0 %2392
      %2394 = vrot.lane.b32.xlu0 %v1731, 118
      %v2395 = vpop.permute.xlu0 %2394
      %2396 = vrot.lane.b32.xlu0 %v1730, 118
      %v2397 = vpop.permute.xlu0 %2396
      %2398 = vrot.lane.b32.xlu0 %v1734, 118
      %v2399 = vpop.permute.xlu0 %2398
      %2400 = vrot.lane.b32.xlu0 %v1733, 118
      %v2401 = vpop.permute.xlu0 %2400
      %2402 = vrot.lane.b32.xlu0 %v1737, 118
      %v2403 = vpop.permute.xlu0 %2402
      %2404 = vrot.lane.b32.xlu0 %v1736, 118
      %v2405 = vpop.permute.xlu0 %2404
      %2406 = vrot.lane.b32.xlu0 %v1740, 118
      %v2407 = vpop.permute.xlu0 %2406
      %2408 = vrot.lane.b32.xlu0 %v1739, 118
      %v2409 = vpop.permute.xlu0 %2408
      %2410 = vrot.lane.b32.xlu0 %v1743, 118
      %v2411 = vpop.permute.xlu0 %2410
      %2412 = vrot.lane.b32.xlu0 %v1742, 118
      %v2413 = vpop.permute.xlu0 %2412
      %2414 = vrot.lane.b32.xlu0 %v1746, 118
      %v2415 = vpop.permute.xlu0 %2414
      %2416 = vrot.lane.b32.xlu0 %v1745, 118
      %v2417 = vpop.permute.xlu0 %2416
      %2418 = vrot.lane.b32.xlu0 %v1749, 118
      %v2419 = vpop.permute.xlu0 %2418
      %2420 = vrot.lane.b32.xlu0 %v1748, 118
      %v2421 = vpop.permute.xlu0 %2420
      %2422 = vrot.lane.b32.xlu0 %v2374, 118
      %v2423 = vpop.permute.xlu0 %2422
      %2424 = vrot.lane.b32.xlu0 %v2373, 118
      %v2425 = vpop.permute.xlu0 %2424
      %2426 = vrot.lane.b32.xlu0 %v1755, 118
      %v2427 = vpop.permute.xlu0 %2426
      %2428 = vrot.lane.b32.xlu0 %v1754, 118
      %v2429 = vpop.permute.xlu0 %2428
      %2430 = vrot.lane.b32.xlu0 %v1758, 118
      %v2431 = vpop.permute.xlu0 %2430
      %2432 = vrot.lane.b32.xlu0 %v1757, 118
      %v2433 = vpop.permute.xlu0 %2432
      %2434 = vrot.lane.b32.xlu0 %v1761, 118
      %v2435 = vpop.permute.xlu0 %2434
      %2436 = vrot.lane.b32.xlu0 %v1760, 118
      %v2437 = vpop.permute.xlu0 %2436
      %2438 = vrot.lane.b32.xlu0 %v1764, 118
      %v2439 = vpop.permute.xlu0 %2438
      %2440 = vrot.lane.b32.xlu0 %v1763, 118
      %v2441 = vpop.permute.xlu0 %2440
      %2442 = vrot.lane.b32.xlu0 %v1767, 118
      %v2443 = vpop.permute.xlu0 %2442
      %2444 = vrot.lane.b32.xlu0 %v1766, 118
      %v2445 = vpop.permute.xlu0 %2444
      %2446 = vrot.lane.b32.xlu0 %v1770, 118
      %v2447 = vpop.permute.xlu0 %2446
      %2448 = vrot.lane.b32.xlu0 %v1769, 118
      %v2449 = vpop.permute.xlu0 %2448
      %2450 = vrot.lane.b32.xlu0 %v1773, 118
      %v2451 = vpop.permute.xlu0 %2450
      %2452 = vrot.lane.b32.xlu0 %v1772, 118
      %v2453 = vpop.permute.xlu0 %2452
      %2454 = vrot.lane.b32.xlu0 %v1776, 118
      %v2455 = vpop.permute.xlu0 %2454
      %2456 = vrot.lane.b32.xlu0 %v1775, 118
      %v2457 = vpop.permute.xlu0 %2456
      %2458 = vrot.lane.b32.xlu0 %v1779, 118
      %v2459 = vpop.permute.xlu0 %2458
      %2460 = vrot.lane.b32.xlu0 %v1778, 118
      %v2461 = vpop.permute.xlu0 %2460
      %2462 = vrot.lane.b32.xlu0 %v1782, 118
      %v2463 = vpop.permute.xlu0 %2462
      %2464 = vrot.lane.b32.xlu0 %v1781, 118
      %v2465 = vpop.permute.xlu0 %2464
      %2466 = vrot.lane.b32.xlu0 %v1785, 118
      %v2467 = vpop.permute.xlu0 %2466
      %2468 = vrot.lane.b32.xlu0 %v1784, 118
      %v2469 = vpop.permute.xlu0 %2468
      %2470 = vrot.lane.b32.xlu0 %v2377, 118
      %v2471 = vpop.permute.xlu0 %2470
      %2472 = vrot.lane.b32.xlu0 %v2376, 118
      %v2473 = vpop.permute.xlu0 %2472
      %v2522 = vadd.f32 %v2324, %v2379
      %v2523 = vadd.f32 %v2325, %v2381
      %v2524 = vadd.f32 %v2326, %v2383
      %v2525 = vadd.f32 %v2327, %v2385
      %v2526 = vadd.f32 %v2328, %v2387
      %v2527 = vadd.f32 %v2329, %v2389
      %v2528 = vadd.f32 %v2330, %v2391
      %v2529 = vadd.f32 %v2331, %v2393
      %v2530 = vadd.f32 %v2332, %v2395
      %v2531 = vadd.f32 %v2333, %v2397
      %v2532 = vadd.f32 %v2334, %v2399
      %v2533 = vadd.f32 %v2335, %v2401
      %v2534 = vadd.f32 %v2336, %v2403
      %v2535 = vadd.f32 %v2337, %v2405
      %v2536 = vadd.f32 %v2338, %v2407
      %v2537 = vadd.f32 %v2339, %v2409
      %v2538 = vadd.f32 %v2340, %v2411
      %v2539 = vadd.f32 %v2341, %v2413
      %v2540 = vadd.f32 %v2342, %v2415
      %v2541 = vadd.f32 %v2343, %v2417
      %v2542 = vadd.f32 %v2344, %v2419
      %v2543 = vadd.f32 %v2345, %v2421
      %v2544 = vadd.f32 %v2346, %v2423
      %v2545 = vadd.f32 %v2347, %v2425
      %v2546 = vadd.f32 %v2348, %v2427
      %v2547 = vadd.f32 %v2349, %v2429
      %v2548 = vadd.f32 %v2350, %v2431
      %v2549 = vadd.f32 %v2351, %v2433
      %v2550 = vadd.f32 %v2352, %v2435
      %v2551 = vadd.f32 %v2353, %v2437
      %v2552 = vadd.f32 %v2354, %v2439
      %v2553 = vadd.f32 %v2355, %v2441
      %v2554 = vadd.f32 %v2356, %v2443
      %v2555 = vadd.f32 %v2357, %v2445
      %v2556 = vadd.f32 %v2358, %v2447
      %v2557 = vadd.f32 %v2359, %v2449
      %v2558 = vadd.f32 %v2360, %v2451
      %v2559 = vadd.f32 %v2361, %v2453
      %v2560 = vadd.f32 %v2362, %v2455
      %v2561 = vadd.f32 %v2363, %v2457
      %v2562 = vadd.f32 %v2364, %v2459
      %v2563 = vadd.f32 %v2365, %v2461
      %v2564 = vadd.f32 %v2366, %v2463
      %v2565 = vadd.f32 %v2367, %v2465
      %v2566 = vadd.f32 %v2368, %v2467
      %v2567 = vadd.f32 %v2369, %v2469
      %v2568 = vadd.f32 %v2370, %v2471
      %v2569 = vadd.f32 %v2371, %v2473
      %2574 = vrot.lane.b32.xlu0 %v1348, 116
      %v2575 = vpop.permute.xlu0 %2574
      %2576 = vrot.lane.b32.xlu0 %v1349, 116
      %v2577 = vpop.permute.xlu0 %2576
      %2578 = vrot.lane.b32.xlu0 %v1350, 116
      %v2579 = vpop.permute.xlu0 %2578
      %2580 = vrot.lane.b32.xlu0 %v1351, 116
      %v2581 = vpop.permute.xlu0 %2580
      %2582 = vrot.lane.b32.xlu0 %v1352, 116
      %v2583 = vpop.permute.xlu0 %2582
      %2584 = vrot.lane.b32.xlu0 %v1353, 116
      %v2585 = vpop.permute.xlu0 %2584
      %2586 = vrot.lane.b32.xlu0 %v1354, 116
      %v2587 = vpop.permute.xlu0 %2586
      %2588 = vrot.lane.b32.xlu0 %v1355, 116
      %v2589 = vpop.permute.xlu0 %2588
      %2590 = vrot.lane.b32.xlu0 %v1356, 116
      %v2591 = vpop.permute.xlu0 %2590
      %2592 = vrot.lane.b32.xlu0 %v1357, 116
      %v2593 = vpop.permute.xlu0 %2592
      %2594 = vrot.lane.b32.xlu0 %v1358, 116
      %v2595 = vpop.permute.xlu0 %2594
      %2596 = vrot.lane.b32.xlu0 %v1359, 116
      %v2597 = vpop.permute.xlu0 %2596
      %2598 = vrot.lane.b32.xlu0 %v1360, 116
      %v2599 = vpop.permute.xlu0 %2598
      %2600 = vrot.lane.b32.xlu0 %v1361, 116
      %v2601 = vpop.permute.xlu0 %2600
      %2602 = vrot.lane.b32.xlu0 %v1362, 116
      %v2603 = vpop.permute.xlu0 %2602
      %2604 = vrot.lane.b32.xlu0 %v1363, 116
      %v2605 = vpop.permute.xlu0 %2604
      %2606 = vrot.lane.b32.xlu0 %v1364, 116
      %v2607 = vpop.permute.xlu0 %2606
      %2608 = vrot.lane.b32.xlu0 %v1365, 116
      %v2609 = vpop.permute.xlu0 %2608
      %2610 = vrot.lane.b32.xlu0 %v1366, 116
      %v2611 = vpop.permute.xlu0 %2610
      %2612 = vrot.lane.b32.xlu0 %v1367, 116
      %v2613 = vpop.permute.xlu0 %2612
      %2614 = vrot.lane.b32.xlu0 %v1368, 116
      %v2615 = vpop.permute.xlu0 %2614
      %2616 = vrot.lane.b32.xlu0 %v1369, 116
      %v2617 = vpop.permute.xlu0 %2616
      %2618 = vrot.lane.b32.xlu0 %v1370, 116
      %v2619 = vpop.permute.xlu0 %2618
      %2620 = vrot.lane.b32.xlu0 %v1371, 116
      %v2621 = vpop.permute.xlu0 %2620
      %2622 = vrot.lane.b32.xlu0 %v1376, 116
      %v2623 = vpop.permute.xlu0 %2622
      %2624 = vrot.lane.b32.xlu0 %v1377, 116
      %v2625 = vpop.permute.xlu0 %2624
      %2626 = vrot.lane.b32.xlu0 %v1378, 116
      %v2627 = vpop.permute.xlu0 %2626
      %2628 = vrot.lane.b32.xlu0 %v1379, 116
      %v2629 = vpop.permute.xlu0 %2628
      %2630 = vrot.lane.b32.xlu0 %v1380, 116
      %v2631 = vpop.permute.xlu0 %2630
      %2632 = vrot.lane.b32.xlu0 %v1381, 116
      %v2633 = vpop.permute.xlu0 %2632
      %2634 = vrot.lane.b32.xlu0 %v1382, 116
      %v2635 = vpop.permute.xlu0 %2634
      %2636 = vrot.lane.b32.xlu0 %v1383, 116
      %v2637 = vpop.permute.xlu0 %2636
      %2638 = vrot.lane.b32.xlu0 %v1384, 116
      %v2639 = vpop.permute.xlu0 %2638
      %2640 = vrot.lane.b32.xlu0 %v1385, 116
      %v2641 = vpop.permute.xlu0 %2640
      %2642 = vrot.lane.b32.xlu0 %v1386, 116
      %v2643 = vpop.permute.xlu0 %2642
      %2644 = vrot.lane.b32.xlu0 %v1387, 116
      %v2645 = vpop.permute.xlu0 %2644
      %2646 = vrot.lane.b32.xlu0 %v1388, 116
      %v2647 = vpop.permute.xlu0 %2646
      %2648 = vrot.lane.b32.xlu0 %v1389, 116
      %v2649 = vpop.permute.xlu0 %2648
      %2650 = vrot.lane.b32.xlu0 %v1390, 116
      %v2651 = vpop.permute.xlu0 %2650
      %2652 = vrot.lane.b32.xlu0 %v1391, 116
      %v2653 = vpop.permute.xlu0 %2652
      %2654 = vrot.lane.b32.xlu0 %v1392, 116
      %v2655 = vpop.permute.xlu0 %2654
      %2656 = vrot.lane.b32.xlu0 %v1393, 116
      %v2657 = vpop.permute.xlu0 %2656
      %2658 = vrot.lane.b32.xlu0 %v1394, 116
      %v2659 = vpop.permute.xlu0 %2658
      %2660 = vrot.lane.b32.xlu0 %v1395, 116
      %v2661 = vpop.permute.xlu0 %2660
      %2662 = vrot.lane.b32.xlu0 %v1396, 116
      %v2663 = vpop.permute.xlu0 %2662
      %2664 = vrot.lane.b32.xlu0 %v1397, 116
      %v2665 = vpop.permute.xlu0 %2664
      %2666 = vrot.lane.b32.xlu0 %v1398, 116
      %v2667 = vpop.permute.xlu0 %2666
      %2668 = vrot.lane.b32.xlu0 %v1399, 116
      %v2669 = vpop.permute.xlu0 %2668
      %v2718 = vadd.f32 %v2522, %v2575
      %v2719 = vadd.f32 %v2523, %v2577
      %v2720 = vadd.f32 %v2524, %v2579
      %v2721 = vadd.f32 %v2525, %v2581
      %v2722 = vadd.f32 %v2526, %v2583
      %v2723 = vadd.f32 %v2527, %v2585
      %v2724 = vadd.f32 %v2528, %v2587
      %v2725 = vadd.f32 %v2529, %v2589
      %v2726 = vadd.f32 %v2530, %v2591
      %v2727 = vadd.f32 %v2531, %v2593
      %v2728 = vadd.f32 %v2532, %v2595
      %v2729 = vadd.f32 %v2533, %v2597
      %v2730 = vadd.f32 %v2534, %v2599
      %v2731 = vadd.f32 %v2535, %v2601
      %v2732 = vadd.f32 %v2536, %v2603
      %v2733 = vadd.f32 %v2537, %v2605
      %v2734 = vadd.f32 %v2538, %v2607
      %v2735 = vadd.f32 %v2539, %v2609
      %v2736 = vadd.f32 %v2540, %v2611
      %v2737 = vadd.f32 %v2541, %v2613
      %v2738 = vadd.f32 %v2542, %v2615
      %v2739 = vadd.f32 %v2543, %v2617
      %v2740 = vadd.f32 %v2544, %v2619
      %v2741 = vadd.f32 %v2545, %v2621
      %v2742 = vadd.f32 %v2546, %v2623
      %v2743 = vadd.f32 %v2547, %v2625
      %v2744 = vadd.f32 %v2548, %v2627
      %v2745 = vadd.f32 %v2549, %v2629
      %v2746 = vadd.f32 %v2550, %v2631
      %v2747 = vadd.f32 %v2551, %v2633
      %v2748 = vadd.f32 %v2552, %v2635
      %v2749 = vadd.f32 %v2553, %v2637
      %v2750 = vadd.f32 %v2554, %v2639
      %v2751 = vadd.f32 %v2555, %v2641
      %v2752 = vadd.f32 %v2556, %v2643
      %v2753 = vadd.f32 %v2557, %v2645
      %v2754 = vadd.f32 %v2558, %v2647
      %v2755 = vadd.f32 %v2559, %v2649
      %v2756 = vadd.f32 %v2560, %v2651
      %v2757 = vadd.f32 %v2561, %v2653
      %v2758 = vadd.f32 %v2562, %v2655
      %v2759 = vadd.f32 %v2563, %v2657
      %v2760 = vadd.f32 %v2564, %v2659
      %v2761 = vadd.f32 %v2565, %v2661
      %v2762 = vadd.f32 %v2566, %v2663
      %v2763 = vadd.f32 %v2567, %v2665
      %v2764 = vadd.f32 %v2568, %v2667
      %v2765 = vadd.f32 %v2569, %v2669
      %v2766 = vrot.slane %v1370, 1
      %v2767 = vrot.slane %v1371, 1
      %v2768 = vsel %vm1448, %v2766, %v2767
      %v2769 = vrot.slane %v1398, 1
      %v2770 = vrot.slane %v1399, 1
      %v2771 = vsel %vm1448, %v2769, %v2770
      %2772 = vrot.lane.b32.xlu0 %v1457, 114
      %v2773 = vpop.permute.xlu0 %2772
      %2774 = vrot.lane.b32.xlu0 %v1456, 114
      %v2775 = vpop.permute.xlu0 %2774
      %2776 = vrot.lane.b32.xlu0 %v1460, 114
      %v2777 = vpop.permute.xlu0 %2776
      %2778 = vrot.lane.b32.xlu0 %v1459, 114
      %v2779 = vpop.permute.xlu0 %2778
      %2780 = vrot.lane.b32.xlu0 %v1463, 114
      %v2781 = vpop.permute.xlu0 %2780
      %2782 = vrot.lane.b32.xlu0 %v1462, 114
      %v2783 = vpop.permute.xlu0 %2782
      %2784 = vrot.lane.b32.xlu0 %v1466, 114
      %v2785 = vpop.permute.xlu0 %2784
      %2786 = vrot.lane.b32.xlu0 %v1465, 114
      %v2787 = vpop.permute.xlu0 %2786
      %2788 = vrot.lane.b32.xlu0 %v1469, 114
      %v2789 = vpop.permute.xlu0 %2788
      %2790 = vrot.lane.b32.xlu0 %v1468, 114
      %v2791 = vpop.permute.xlu0 %2790
      %2792 = vrot.lane.b32.xlu0 %v1472, 114
      %v2793 = vpop.permute.xlu0 %2792
      %2794 = vrot.lane.b32.xlu0 %v1471, 114
      %v2795 = vpop.permute.xlu0 %2794
      %2796 = vrot.lane.b32.xlu0 %v1475, 114
      %v2797 = vpop.permute.xlu0 %2796
      %2798 = vrot.lane.b32.xlu0 %v1474, 114
      %v2799 = vpop.permute.xlu0 %2798
      %2800 = vrot.lane.b32.xlu0 %v1478, 114
      %v2801 = vpop.permute.xlu0 %2800
      %2802 = vrot.lane.b32.xlu0 %v1477, 114
      %v2803 = vpop.permute.xlu0 %2802
      %2804 = vrot.lane.b32.xlu0 %v1481, 114
      %v2805 = vpop.permute.xlu0 %2804
      %2806 = vrot.lane.b32.xlu0 %v1480, 114
      %v2807 = vpop.permute.xlu0 %2806
      %2808 = vrot.lane.b32.xlu0 %v1484, 114
      %v2809 = vpop.permute.xlu0 %2808
      %2810 = vrot.lane.b32.xlu0 %v1483, 114
      %v2811 = vpop.permute.xlu0 %2810
      %2812 = vrot.lane.b32.xlu0 %v2176, 114
      %v2813 = vpop.permute.xlu0 %2812
      %2814 = vrot.lane.b32.xlu0 %v2175, 114
      %v2815 = vpop.permute.xlu0 %2814
      %2816 = vrot.lane.b32.xlu0 %v2768, 114
      %v2817 = vpop.permute.xlu0 %2816
      %2818 = vrot.lane.b32.xlu0 %v2767, 114
      %v2819 = vpop.permute.xlu0 %2818
      %2820 = vrot.lane.b32.xlu0 %v1493, 114
      %v2821 = vpop.permute.xlu0 %2820
      %2822 = vrot.lane.b32.xlu0 %v1492, 114
      %v2823 = vpop.permute.xlu0 %2822
      %2824 = vrot.lane.b32.xlu0 %v1496, 114
      %v2825 = vpop.permute.xlu0 %2824
      %2826 = vrot.lane.b32.xlu0 %v1495, 114
      %v2827 = vpop.permute.xlu0 %2826
      %2828 = vrot.lane.b32.xlu0 %v1499, 114
      %v2829 = vpop.permute.xlu0 %2828
      %2830 = vrot.lane.b32.xlu0 %v1498, 114
      %v2831 = vpop.permute.xlu0 %2830
      %2832 = vrot.lane.b32.xlu0 %v1502, 114
      %v2833 = vpop.permute.xlu0 %2832
      %2834 = vrot.lane.b32.xlu0 %v1501, 114
      %v2835 = vpop.permute.xlu0 %2834
      %2836 = vrot.lane.b32.xlu0 %v1505, 114
      %v2837 = vpop.permute.xlu0 %2836
      %2838 = vrot.lane.b32.xlu0 %v1504, 114
      %v2839 = vpop.permute.xlu0 %2838
      %2840 = vrot.lane.b32.xlu0 %v1508, 114
      %v2841 = vpop.permute.xlu0 %2840
      %2842 = vrot.lane.b32.xlu0 %v1507, 114
      %v2843 = vpop.permute.xlu0 %2842
      %2844 = vrot.lane.b32.xlu0 %v1511, 114
      %v2845 = vpop.permute.xlu0 %2844
      %2846 = vrot.lane.b32.xlu0 %v1510, 114
      %v2847 = vpop.permute.xlu0 %2846
      %2848 = vrot.lane.b32.xlu0 %v1514, 114
      %v2849 = vpop.permute.xlu0 %2848
      %2850 = vrot.lane.b32.xlu0 %v1513, 114
      %v2851 = vpop.permute.xlu0 %2850
      %2852 = vrot.lane.b32.xlu0 %v1517, 114
      %v2853 = vpop.permute.xlu0 %2852
      %2854 = vrot.lane.b32.xlu0 %v1516, 114
      %v2855 = vpop.permute.xlu0 %2854
      %2856 = vrot.lane.b32.xlu0 %v1520, 114
      %v2857 = vpop.permute.xlu0 %2856
      %2858 = vrot.lane.b32.xlu0 %v1519, 114
      %v2859 = vpop.permute.xlu0 %2858
      %2860 = vrot.lane.b32.xlu0 %v2179, 114
      %v2861 = vpop.permute.xlu0 %2860
      %2862 = vrot.lane.b32.xlu0 %v2178, 114
      %v2863 = vpop.permute.xlu0 %2862
      %2864 = vrot.lane.b32.xlu0 %v2771, 114
      %v2865 = vpop.permute.xlu0 %2864
      %2866 = vrot.lane.b32.xlu0 %v2770, 114
      %v2867 = vpop.permute.xlu0 %2866
      %v2916 = vadd.f32 %v2718, %v2773
      %v2917 = vadd.f32 %v2719, %v2775
      %v2918 = vadd.f32 %v2720, %v2777
      %v2919 = vadd.f32 %v2721, %v2779
      %v2920 = vadd.f32 %v2722, %v2781
      %v2921 = vadd.f32 %v2723, %v2783
      %v2922 = vadd.f32 %v2724, %v2785
      %v2923 = vadd.f32 %v2725, %v2787
      %v2924 = vadd.f32 %v2726, %v2789
      %v2925 = vadd.f32 %v2727, %v2791
      %v2926 = vadd.f32 %v2728, %v2793
      %v2927 = vadd.f32 %v2729, %v2795
      %v2928 = vadd.f32 %v2730, %v2797
      %v2929 = vadd.f32 %v2731, %v2799
      %v2930 = vadd.f32 %v2732, %v2801
      %v2931 = vadd.f32 %v2733, %v2803
      %v2932 = vadd.f32 %v2734, %v2805
      %v2933 = vadd.f32 %v2735, %v2807
      %v2934 = vadd.f32 %v2736, %v2809
      %v2935 = vadd.f32 %v2737, %v2811
      %v2936 = vadd.f32 %v2738, %v2813
      %v2937 = vadd.f32 %v2739, %v2815
      %v2938 = vadd.f32 %v2740, %v2817
      %v2939 = vadd.f32 %v2741, %v2819
      %v2940 = vadd.f32 %v2742, %v2821
      %v2941 = vadd.f32 %v2743, %v2823
      %v2942 = vadd.f32 %v2744, %v2825
      %v2943 = vadd.f32 %v2745, %v2827
      %v2944 = vadd.f32 %v2746, %v2829
      %v2945 = vadd.f32 %v2747, %v2831
      %v2946 = vadd.f32 %v2748, %v2833
      %v2947 = vadd.f32 %v2749, %v2835
      %v2948 = vadd.f32 %v2750, %v2837
      %v2949 = vadd.f32 %v2751, %v2839
      %v2950 = vadd.f32 %v2752, %v2841
      %v2951 = vadd.f32 %v2753, %v2843
      %v2952 = vadd.f32 %v2754, %v2845
      %v2953 = vadd.f32 %v2755, %v2847
      %v2954 = vadd.f32 %v2756, %v2849
      %v2955 = vadd.f32 %v2757, %v2851
      %v2956 = vadd.f32 %v2758, %v2853
      %v2957 = vadd.f32 %v2759, %v2855
      %v2958 = vadd.f32 %v2760, %v2857
      %v2959 = vadd.f32 %v2761, %v2859
      %v2960 = vadd.f32 %v2762, %v2861
      %v2961 = vadd.f32 %v2763, %v2863
      %v2962 = vadd.f32 %v2764, %v2865
      %v2963 = vadd.f32 %v2765, %v2867
      %v2964 = vrot.slane %v1370, 2
      %v2965 = vrot.slane %v1371, 2
      %v2966 = vsel %vm1713, %v2964, %v2965
      %v2967 = vrot.slane %v1398, 2
      %v2968 = vrot.slane %v1399, 2
      %v2969 = vsel %vm1713, %v2967, %v2968
      %2970 = vrot.lane.b32.xlu0 %v1722, 112
      %v2971 = vpop.permute.xlu0 %2970
      %2972 = vrot.lane.b32.xlu0 %v1721, 112
      %v2973 = vpop.permute.xlu0 %2972
      %2974 = vrot.lane.b32.xlu0 %v1725, 112
      %v2975 = vpop.permute.xlu0 %2974
      %2976 = vrot.lane.b32.xlu0 %v1724, 112
      %v2977 = vpop.permute.xlu0 %2976
      %2978 = vrot.lane.b32.xlu0 %v1728, 112
      %v2979 = vpop.permute.xlu0 %2978
      %2980 = vrot.lane.b32.xlu0 %v1727, 112
      %v2981 = vpop.permute.xlu0 %2980
      %2982 = vrot.lane.b32.xlu0 %v1731, 112
      %v2983 = vpop.permute.xlu0 %2982
      %2984 = vrot.lane.b32.xlu0 %v1730, 112
      %v2985 = vpop.permute.xlu0 %2984
      %2986 = vrot.lane.b32.xlu0 %v1734, 112
      %v2987 = vpop.permute.xlu0 %2986
      %2988 = vrot.lane.b32.xlu0 %v1733, 112
      %v2989 = vpop.permute.xlu0 %2988
      %2990 = vrot.lane.b32.xlu0 %v1737, 112
      %v2991 = vpop.permute.xlu0 %2990
      %2992 = vrot.lane.b32.xlu0 %v1736, 112
      %v2993 = vpop.permute.xlu0 %2992
      %2994 = vrot.lane.b32.xlu0 %v1740, 112
      %v2995 = vpop.permute.xlu0 %2994
      %2996 = vrot.lane.b32.xlu0 %v1739, 112
      %v2997 = vpop.permute.xlu0 %2996
      %2998 = vrot.lane.b32.xlu0 %v1743, 112
      %v2999 = vpop.permute.xlu0 %2998
      %3000 = vrot.lane.b32.xlu0 %v1742, 112
      %v3001 = vpop.permute.xlu0 %3000
      %3002 = vrot.lane.b32.xlu0 %v1746, 112
      %v3003 = vpop.permute.xlu0 %3002
      %3004 = vrot.lane.b32.xlu0 %v1745, 112
      %v3005 = vpop.permute.xlu0 %3004
      %3006 = vrot.lane.b32.xlu0 %v1749, 112
      %v3007 = vpop.permute.xlu0 %3006
      %3008 = vrot.lane.b32.xlu0 %v1748, 112
      %v3009 = vpop.permute.xlu0 %3008
      %3010 = vrot.lane.b32.xlu0 %v2374, 112
      %v3011 = vpop.permute.xlu0 %3010
      %3012 = vrot.lane.b32.xlu0 %v2373, 112
      %v3013 = vpop.permute.xlu0 %3012
      %3014 = vrot.lane.b32.xlu0 %v2966, 112
      %v3015 = vpop.permute.xlu0 %3014
      %3016 = vrot.lane.b32.xlu0 %v2965, 112
      %v3017 = vpop.permute.xlu0 %3016
      %3018 = vrot.lane.b32.xlu0 %v1758, 112
      %v3019 = vpop.permute.xlu0 %3018
      %3020 = vrot.lane.b32.xlu0 %v1757, 112
      %v3021 = vpop.permute.xlu0 %3020
      %3022 = vrot.lane.b32.xlu0 %v1761, 112
      %v3023 = vpop.permute.xlu0 %3022
      %3024 = vrot.lane.b32.xlu0 %v1760, 112
      %v3025 = vpop.permute.xlu0 %3024
      %3026 = vrot.lane.b32.xlu0 %v1764, 112
      %v3027 = vpop.permute.xlu0 %3026
      %3028 = vrot.lane.b32.xlu0 %v1763, 112
      %v3029 = vpop.permute.xlu0 %3028
      %3030 = vrot.lane.b32.xlu0 %v1767, 112
      %v3031 = vpop.permute.xlu0 %3030
      %3032 = vrot.lane.b32.xlu0 %v1766, 112
      %v3033 = vpop.permute.xlu0 %3032
      %3034 = vrot.lane.b32.xlu0 %v1770, 112
      %v3035 = vpop.permute.xlu0 %3034
      %3036 = vrot.lane.b32.xlu0 %v1769, 112
      %v3037 = vpop.permute.xlu0 %3036
      %3038 = vrot.lane.b32.xlu0 %v1773, 112
      %v3039 = vpop.permute.xlu0 %3038
      %3040 = vrot.lane.b32.xlu0 %v1772, 112
      %v3041 = vpop.permute.xlu0 %3040
      %3042 = vrot.lane.b32.xlu0 %v1776, 112
      %v3043 = vpop.permute.xlu0 %3042
      %3044 = vrot.lane.b32.xlu0 %v1775, 112
      %v3045 = vpop.permute.xlu0 %3044
      %3046 = vrot.lane.b32.xlu0 %v1779, 112
      %v3047 = vpop.permute.xlu0 %3046
      %3048 = vrot.lane.b32.xlu0 %v1778, 112
      %v3049 = vpop.permute.xlu0 %3048
      %3050 = vrot.lane.b32.xlu0 %v1782, 112
      %v3051 = vpop.permute.xlu0 %3050
      %3052 = vrot.lane.b32.xlu0 %v1781, 112
      %v3053 = vpop.permute.xlu0 %3052
      %3054 = vrot.lane.b32.xlu0 %v1785, 112
      %v3055 = vpop.permute.xlu0 %3054
      %3056 = vrot.lane.b32.xlu0 %v1784, 112
      %v3057 = vpop.permute.xlu0 %3056
      %3058 = vrot.lane.b32.xlu0 %v2377, 112
      %v3059 = vpop.permute.xlu0 %3058
      %3060 = vrot.lane.b32.xlu0 %v2376, 112
      %v3061 = vpop.permute.xlu0 %3060
      %3062 = vrot.lane.b32.xlu0 %v2969, 112
      %v3063 = vpop.permute.xlu0 %3062
      %3064 = vrot.lane.b32.xlu0 %v2968, 112
      %v3065 = vpop.permute.xlu0 %3064
      %v3114 = vadd.f32 %v2916, %v2971
      %v3115 = vadd.f32 %v2917, %v2973
      %v3116 = vadd.f32 %v2918, %v2975
      %v3117 = vadd.f32 %v2919, %v2977
      %v3118 = vadd.f32 %v2920, %v2979
      %v3119 = vadd.f32 %v2921, %v2981
      %v3120 = vadd.f32 %v2922, %v2983
      %v3121 = vadd.f32 %v2923, %v2985
      %v3122 = vadd.f32 %v2924, %v2987
      %v3123 = vadd.f32 %v2925, %v2989
      %v3124 = vadd.f32 %v2926, %v2991
      %v3125 = vadd.f32 %v2927, %v2993
      %v3126 = vadd.f32 %v2928, %v2995
      %v3127 = vadd.f32 %v2929, %v2997
      %v3128 = vadd.f32 %v2930, %v2999
      %v3129 = vadd.f32 %v2931, %v3001
      %v3130 = vadd.f32 %v2932, %v3003
      %v3131 = vadd.f32 %v2933, %v3005
      %v3132 = vadd.f32 %v2934, %v3007
      %v3133 = vadd.f32 %v2935, %v3009
      %v3134 = vadd.f32 %v2936, %v3011
      %v3135 = vadd.f32 %v2937, %v3013
      %v3136 = vadd.f32 %v2938, %v3015
      %v3137 = vadd.f32 %v2939, %v3017
      %v3138 = vadd.f32 %v2940, %v3019
      %v3139 = vadd.f32 %v2941, %v3021
      %v3140 = vadd.f32 %v2942, %v3023
      %v3141 = vadd.f32 %v2943, %v3025
      %v3142 = vadd.f32 %v2944, %v3027
      %v3143 = vadd.f32 %v2945, %v3029
      %v3144 = vadd.f32 %v2946, %v3031
      %v3145 = vadd.f32 %v2947, %v3033
      %v3146 = vadd.f32 %v2948, %v3035
      %v3147 = vadd.f32 %v2949, %v3037
      %v3148 = vadd.f32 %v2950, %v3039
      %v3149 = vadd.f32 %v2951, %v3041
      %v3150 = vadd.f32 %v2952, %v3043
      %v3151 = vadd.f32 %v2953, %v3045
      %v3152 = vadd.f32 %v2954, %v3047
      %v3153 = vadd.f32 %v2955, %v3049
      %v3154 = vadd.f32 %v2956, %v3051
      %v3155 = vadd.f32 %v2957, %v3053
      %v3156 = vadd.f32 %v2958, %v3055
      %v3157 = vadd.f32 %v2959, %v3057
      %v3158 = vadd.f32 %v2960, %v3059
      %v3159 = vadd.f32 %v2961, %v3061
      %v3160 = vadd.f32 %v2962, %v3063
      %v3161 = vadd.f32 %v2963, %v3065
      %v3186 = vcombine.high %v3114, %v3114
      %v3187 = vcombine.high %v3116, %v3116
      %v3188 = vcombine.high %v3118, %v3118
      %v3189 = vcombine.high %v3120, %v3120
      %v3190 = vcombine.high %v3122, %v3122
      %v3191 = vcombine.high %v3124, %v3124
      %v3192 = vcombine.high %v3126, %v3126
      %v3193 = vcombine.high %v3128, %v3128
      %v3194 = vcombine.high %v3130, %v3130
      %v3195 = vcombine.high %v3132, %v3132
      %v3196 = vcombine.high %v3134, %v3134
      %v3197 = vcombine.high %v3136, %v3136
      %v3198 = vcombine.high %v3138, %v3138
      %v3199 = vcombine.high %v3140, %v3140
      %v3200 = vcombine.high %v3142, %v3142
      %v3201 = vcombine.high %v3144, %v3144
      %v3202 = vcombine.high %v3146, %v3146
      %v3203 = vcombine.high %v3148, %v3148
      %v3204 = vcombine.high %v3150, %v3150
      %v3205 = vcombine.high %v3152, %v3152
      %v3206 = vcombine.high %v3154, %v3154
      %v3207 = vcombine.high %v3156, %v3156
      %v3208 = vcombine.high %v3158, %v3158
      %v3209 = vcombine.high %v3160, %v3160
      %v3234 = vld [vmem:[%s4] sm:$0x1]
      %v3236 = vlaneseq
      %v3237 = vshrl.u32 %v3236, 7
      %v3238 = vsub.s32 0, %v3237
      %v3239 = vrot.slane %v3234, %v3238
      %v3241 = vcombine.high %v3239, %v3239
      %v3243 = vadd.f32 %v3114, %v3239
      %v3244 = vadd.f32 %v3186, %v3241
      %v3245 = vadd.f32 %v3115, %v3239
      %v3246 = vadd.f32 %v3116, %v3241
      %v3247 = vadd.f32 %v3187, %v3239
      %v3248 = vadd.f32 %v3117, %v3241
      %v3249 = vadd.f32 %v3118, %v3239
      %v3250 = vadd.f32 %v3188, %v3241
      %v3251 = vadd.f32 %v3119, %v3239
      %v3252 = vadd.f32 %v3120, %v3241
      %v3253 = vadd.f32 %v3189, %v3239
      %v3254 = vadd.f32 %v3121, %v3241
      %v3255 = vadd.f32 %v3122, %v3239
      %v3256 = vadd.f32 %v3190, %v3241
      %v3257 = vadd.f32 %v3123, %v3239
      %v3258 = vadd.f32 %v3124, %v3241
      %v3259 = vadd.f32 %v3191, %v3239
      %v3260 = vadd.f32 %v3125, %v3241
      %v3261 = vadd.f32 %v3126, %v3239
      %v3262 = vadd.f32 %v3192, %v3241
      %v3263 = vadd.f32 %v3127, %v3239
      %v3264 = vadd.f32 %v3128, %v3241
      %v3265 = vadd.f32 %v3193, %v3239
      %v3266 = vadd.f32 %v3129, %v3241
      %v3267 = vadd.f32 %v3130, %v3239
      %v3268 = vadd.f32 %v3194, %v3241
      %v3269 = vadd.f32 %v3131, %v3239
      %v3270 = vadd.f32 %v3132, %v3241
      %v3271 = vadd.f32 %v3195, %v3239
      %v3272 = vadd.f32 %v3133, %v3241
      %v3273 = vadd.f32 %v3134, %v3239
      %v3274 = vadd.f32 %v3196, %v3241
      %v3275 = vadd.f32 %v3135, %v3239
      %v3276 = vadd.f32 %v3136, %v3241
      %v3277 = vadd.f32 %v3197, %v3239
      %v3278 = vadd.f32 %v3137, %v3241
      %v3279 = vadd.f32 %v3138, %v3239
      %v3280 = vadd.f32 %v3198, %v3241
      %v3281 = vadd.f32 %v3139, %v3239
      %v3282 = vadd.f32 %v3140, %v3241
      %v3283 = vadd.f32 %v3199, %v3239
      %v3284 = vadd.f32 %v3141, %v3241
      %v3285 = vadd.f32 %v3142, %v3239
      %v3286 = vadd.f32 %v3200, %v3241
      %v3287 = vadd.f32 %v3143, %v3239
      %v3288 = vadd.f32 %v3144, %v3241
      %v3289 = vadd.f32 %v3201, %v3239
      %v3290 = vadd.f32 %v3145, %v3241
      %v3291 = vadd.f32 %v3146, %v3239
      %v3292 = vadd.f32 %v3202, %v3241
      %v3293 = vadd.f32 %v3147, %v3239
      %v3294 = vadd.f32 %v3148, %v3241
      %v3295 = vadd.f32 %v3203, %v3239
      %v3296 = vadd.f32 %v3149, %v3241
      %v3297 = vadd.f32 %v3150, %v3239
      %v3298 = vadd.f32 %v3204, %v3241
      %v3299 = vadd.f32 %v3151, %v3239
      %v3300 = vadd.f32 %v3152, %v3241
      %v3301 = vadd.f32 %v3205, %v3239
      %v3302 = vadd.f32 %v3153, %v3241
      %v3303 = vadd.f32 %v3154, %v3239
      %v3304 = vadd.f32 %v3206, %v3241
      %v3305 = vadd.f32 %v3155, %v3239
      %v3306 = vadd.f32 %v3156, %v3241
      %v3307 = vadd.f32 %v3207, %v3239
      %v3308 = vadd.f32 %v3157, %v3241
      %v3309 = vadd.f32 %v3158, %v3239
      %v3310 = vadd.f32 %v3208, %v3241
      %v3311 = vadd.f32 %v3159, %v3239
      %v3312 = vadd.f32 %v3160, %v3241
      %v3313 = vadd.f32 %v3209, %v3239
      %v3314 = vadd.f32 %v3161, %v3241
      %v3315 = vxor.u32 %v3243, 2147483648
      %v3316 = vxor.u32 %v3244, 2147483648
      %v3317 = vxor.u32 %v3245, 2147483648
      %v3318 = vxor.u32 %v3246, 2147483648
      %v3319 = vxor.u32 %v3247, 2147483648
      %v3320 = vxor.u32 %v3248, 2147483648
      %v3321 = vxor.u32 %v3249, 2147483648
      %v3322 = vxor.u32 %v3250, 2147483648
      %v3323 = vxor.u32 %v3251, 2147483648
      %v3324 = vxor.u32 %v3252, 2147483648
      %v3325 = vxor.u32 %v3253, 2147483648
      %v3326 = vxor.u32 %v3254, 2147483648
      %v3327 = vxor.u32 %v3255, 2147483648
      %v3328 = vxor.u32 %v3256, 2147483648
      %v3329 = vxor.u32 %v3257, 2147483648
      %v3330 = vxor.u32 %v3258, 2147483648
      %v3331 = vxor.u32 %v3259, 2147483648
      %v3332 = vxor.u32 %v3260, 2147483648
      %v3333 = vxor.u32 %v3261, 2147483648
      %v3334 = vxor.u32 %v3262, 2147483648
      %v3335 = vxor.u32 %v3263, 2147483648
      %v3336 = vxor.u32 %v3264, 2147483648
      %v3337 = vxor.u32 %v3265, 2147483648
      %v3338 = vxor.u32 %v3266, 2147483648
      %v3339 = vxor.u32 %v3267, 2147483648
      %v3340 = vxor.u32 %v3268, 2147483648
      %v3341 = vxor.u32 %v3269, 2147483648
      %v3342 = vxor.u32 %v3270, 2147483648
      %v3343 = vxor.u32 %v3271, 2147483648
      %v3344 = vxor.u32 %v3272, 2147483648
      %v3345 = vxor.u32 %v3273, 2147483648
      %v3346 = vxor.u32 %v3274, 2147483648
      %v3347 = vxor.u32 %v3275, 2147483648
      %v3348 = vxor.u32 %v3276, 2147483648
      %v3349 = vxor.u32 %v3277, 2147483648
      %v3350 = vxor.u32 %v3278, 2147483648
      %v3351 = vxor.u32 %v3279, 2147483648
      %v3352 = vxor.u32 %v3280, 2147483648
      %v3353 = vxor.u32 %v3281, 2147483648
      %v3354 = vxor.u32 %v3282, 2147483648
      %v3355 = vxor.u32 %v3283, 2147483648
      %v3356 = vxor.u32 %v3284, 2147483648
      %v3357 = vxor.u32 %v3285, 2147483648
      %v3358 = vxor.u32 %v3286, 2147483648
      %v3359 = vxor.u32 %v3287, 2147483648
      %v3360 = vxor.u32 %v3288, 2147483648
      %v3361 = vxor.u32 %v3289, 2147483648
      %v3362 = vxor.u32 %v3290, 2147483648
      %v3363 = vxor.u32 %v3291, 2147483648
      %v3364 = vxor.u32 %v3292, 2147483648
      %v3365 = vxor.u32 %v3293, 2147483648
      %v3366 = vxor.u32 %v3294, 2147483648
      %v3367 = vxor.u32 %v3295, 2147483648
      %v3368 = vxor.u32 %v3296, 2147483648
      %v3369 = vxor.u32 %v3297, 2147483648
      %v3370 = vxor.u32 %v3298, 2147483648
      %v3371 = vxor.u32 %v3299, 2147483648
      %v3372 = vxor.u32 %v3300, 2147483648
      %v3373 = vxor.u32 %v3301, 2147483648
      %v3374 = vxor.u32 %v3302, 2147483648
      %v3375 = vxor.u32 %v3303, 2147483648
      %v3376 = vxor.u32 %v3304, 2147483648
      %v3377 = vxor.u32 %v3305, 2147483648
      %v3378 = vxor.u32 %v3306, 2147483648
      %v3379 = vxor.u32 %v3307, 2147483648
      %v3380 = vxor.u32 %v3308, 2147483648
      %v3381 = vxor.u32 %v3309, 2147483648
      %v3382 = vxor.u32 %v3310, 2147483648
      %v3383 = vxor.u32 %v3311, 2147483648
      %v3384 = vxor.u32 %v3312, 2147483648
      %v3385 = vxor.u32 %v3313, 2147483648
      %v3386 = vxor.u32 %v3314, 2147483648
      %v3387 = vmul.f32 %v3315, 1.442695
      %v3388 = vpow.pop %v3387
      %v3389 = vmul.f32 %v3316, 1.442695
      %v3390 = vpow.pop %v3389
      %v3391 = vmul.f32 %v3317, 1.442695
      %v3392 = vpow.pop %v3391
      %v3393 = vmul.f32 %v3318, 1.442695
      %v3394 = vpow.pop %v3393
      %v3395 = vmul.f32 %v3319, 1.442695
      %v3396 = vpow.pop %v3395
      %v3397 = vmul.f32 %v3320, 1.442695
      %v3398 = vpow.pop %v3397
      %v3399 = vmul.f32 %v3321, 1.442695
      %v3400 = vpow.pop %v3399
      %v3401 = vmul.f32 %v3322, 1.442695
      %v3402 = vpow.pop %v3401
      %v3403 = vmul.f32 %v3323, 1.442695
      %v3404 = vpow.pop %v3403
      %v3405 = vmul.f32 %v3324, 1.442695
      %v3406 = vpow.pop %v3405
      %v3407 = vmul.f32 %v3325, 1.442695
      %v3408 = vpow.pop %v3407
      %v3409 = vmul.f32 %v3326, 1.442695
      %v3410 = vpow.pop %v3409
      %v3411 = vmul.f32 %v3327, 1.442695
      %v3412 = vpow.pop %v3411
      %v3413 = vmul.f32 %v3328, 1.442695
      %v3414 = vpow.pop %v3413
      %v3415 = vmul.f32 %v3329, 1.442695
      %v3416 = vpow.pop %v3415
      %v3417 = vmul.f32 %v3330, 1.442695
      %v3418 = vpow.pop %v3417
      %v3419 = vmul.f32 %v3331, 1.442695
      %v3420 = vpow.pop %v3419
      %v3421 = vmul.f32 %v3332, 1.442695
      %v3422 = vpow.pop %v3421
      %v3423 = vmul.f32 %v3333, 1.442695
      %v3424 = vpow.pop %v3423
      %v3425 = vmul.f32 %v3334, 1.442695
      %v3426 = vpow.pop %v3425
      %v3427 = vmul.f32 %v3335, 1.442695
      %v3428 = vpow.pop %v3427
      %v3429 = vmul.f32 %v3336, 1.442695
      %v3430 = vpow.pop %v3429
      %v3431 = vmul.f32 %v3337, 1.442695
      %v3432 = vpow.pop %v3431
      %v3433 = vmul.f32 %v3338, 1.442695
      %v3434 = vpow.pop %v3433
      %v3435 = vmul.f32 %v3339, 1.442695
      %v3436 = vpow.pop %v3435
      %v3437 = vmul.f32 %v3340, 1.442695
      %v3438 = vpow.pop %v3437
      %v3439 = vmul.f32 %v3341, 1.442695
      %v3440 = vpow.pop %v3439
      %v3441 = vmul.f32 %v3342, 1.442695
      %v3442 = vpow.pop %v3441
      %v3443 = vmul.f32 %v3343, 1.442695
      %v3444 = vpow.pop %v3443
      %v3445 = vmul.f32 %v3344, 1.442695
      %v3446 = vpow.pop %v3445
      %v3447 = vmul.f32 %v3345, 1.442695
      %v3448 = vpow.pop %v3447
      %v3449 = vmul.f32 %v3346, 1.442695
      %v3450 = vpow.pop %v3449
      %v3451 = vmul.f32 %v3347, 1.442695
      %v3452 = vpow.pop %v3451
      %v3453 = vmul.f32 %v3348, 1.442695
      %v3454 = vpow.pop %v3453
      %v3455 = vmul.f32 %v3349, 1.442695
      %v3456 = vpow.pop %v3455
      %v3457 = vmul.f32 %v3350, 1.442695
      %v3458 = vpow.pop %v3457
      %v3459 = vmul.f32 %v3351, 1.442695
      %v3460 = vpow.pop %v3459
      %v3461 = vmul.f32 %v3352, 1.442695
      %v3462 = vpow.pop %v3461
      %v3463 = vmul.f32 %v3353, 1.442695
      %v3464 = vpow.pop %v3463
      %v3465 = vmul.f32 %v3354, 1.442695
      %v3466 = vpow.pop %v3465
      %v3467 = vmul.f32 %v3355, 1.442695
      %v3468 = vpow.pop %v3467
      %v3469 = vmul.f32 %v3356, 1.442695
      %v3470 = vpow.pop %v3469
      %v3471 = vmul.f32 %v3357, 1.442695
      %v3472 = vpow.pop %v3471
      %v3473 = vmul.f32 %v3358, 1.442695
      %v3474 = vpow.pop %v3473
      %v3475 = vmul.f32 %v3359, 1.442695
      %v3476 = vpow.pop %v3475
      %v3477 = vmul.f32 %v3360, 1.442695
      %v3478 = vpow.pop %v3477
      %v3479 = vmul.f32 %v3361, 1.442695
      %v3480 = vpow.pop %v3479
      %v3481 = vmul.f32 %v3362, 1.442695
      %v3482 = vpow.pop %v3481
      %v3483 = vmul.f32 %v3363, 1.442695
      %v3484 = vpow.pop %v3483
      %v3485 = vmul.f32 %v3364, 1.442695
      %v3486 = vpow.pop %v3485
      %v3487 = vmul.f32 %v3365, 1.442695
      %v3488 = vpow.pop %v3487
      %v3489 = vmul.f32 %v3366, 1.442695
      %v3490 = vpow.pop %v3489
      %v3491 = vmul.f32 %v3367, 1.442695
      %v3492 = vpow.pop %v3491
      %v3493 = vmul.f32 %v3368, 1.442695
      %v3494 = vpow.pop %v3493
      %v3495 = vmul.f32 %v3369, 1.442695
      %v3496 = vpow.pop %v3495
      %v3497 = vmul.f32 %v3370, 1.442695
      %v3498 = vpow.pop %v3497
      %v3499 = vmul.f32 %v3371, 1.442695
      %v3500 = vpow.pop %v3499
      %v3501 = vmul.f32 %v3372, 1.442695
      %v3502 = vpow.pop %v3501
      %v3503 = vmul.f32 %v3373, 1.442695
      %v3504 = vpow.pop %v3503
      %v3505 = vmul.f32 %v3374, 1.442695
      %v3506 = vpow.pop %v3505
      %v3507 = vmul.f32 %v3375, 1.442695
      %v3508 = vpow.pop %v3507
      %v3509 = vmul.f32 %v3376, 1.442695
      %v3510 = vpow.pop %v3509
      %v3511 = vmul.f32 %v3377, 1.442695
      %v3512 = vpow.pop %v3511
      %v3513 = vmul.f32 %v3378, 1.442695
      %v3514 = vpow.pop %v3513
      %v3515 = vmul.f32 %v3379, 1.442695
      %v3516 = vpow.pop %v3515
      %v3517 = vmul.f32 %v3380, 1.442695
      %v3518 = vpow.pop %v3517
      %v3519 = vmul.f32 %v3381, 1.442695
      %v3520 = vpow.pop %v3519
      %v3521 = vmul.f32 %v3382, 1.442695
      %v3522 = vpow.pop %v3521
      %v3523 = vmul.f32 %v3383, 1.442695
      %v3524 = vpow.pop %v3523
      %v3525 = vmul.f32 %v3384, 1.442695
      %v3526 = vpow.pop %v3525
      %v3527 = vmul.f32 %v3385, 1.442695
      %v3528 = vpow.pop %v3527
      %v3529 = vmul.f32 %v3386, 1.442695
      %v3530 = vpow.pop %v3529
      %v3531 = vadd.f32 %v3388, 1.0
      %v3532 = vadd.f32 %v3390, 1.0
      %v3533 = vadd.f32 %v3392, 1.0
      %v3534 = vadd.f32 %v3394, 1.0
      %v3535 = vadd.f32 %v3396, 1.0
      %v3536 = vadd.f32 %v3398, 1.0
      %v3537 = vadd.f32 %v3400, 1.0
      %v3538 = vadd.f32 %v3402, 1.0
      %v3539 = vadd.f32 %v3404, 1.0
      %v3540 = vadd.f32 %v3406, 1.0
      %v3541 = vadd.f32 %v3408, 1.0
      %v3542 = vadd.f32 %v3410, 1.0
      %v3543 = vadd.f32 %v3412, 1.0
      %v3544 = vadd.f32 %v3414, 1.0
      %v3545 = vadd.f32 %v3416, 1.0
      %v3546 = vadd.f32 %v3418, 1.0
      %v3547 = vadd.f32 %v3420, 1.0
      %v3548 = vadd.f32 %v3422, 1.0
      %v3549 = vadd.f32 %v3424, 1.0
      %v3550 = vadd.f32 %v3426, 1.0
      %v3551 = vadd.f32 %v3428, 1.0
      %v3552 = vadd.f32 %v3430, 1.0
      %v3553 = vadd.f32 %v3432, 1.0
      %v3554 = vadd.f32 %v3434, 1.0
      %v3555 = vadd.f32 %v3436, 1.0
      %v3556 = vadd.f32 %v3438, 1.0
      %v3557 = vadd.f32 %v3440, 1.0
      %v3558 = vadd.f32 %v3442, 1.0
      %v3559 = vadd.f32 %v3444, 1.0
      %v3560 = vadd.f32 %v3446, 1.0
      %v3561 = vadd.f32 %v3448, 1.0
      %v3562 = vadd.f32 %v3450, 1.0
      %v3563 = vadd.f32 %v3452, 1.0
      %v3564 = vadd.f32 %v3454, 1.0
      %v3565 = vadd.f32 %v3456, 1.0
      %v3566 = vadd.f32 %v3458, 1.0
      %v3567 = vadd.f32 %v3460, 1.0
      %v3568 = vadd.f32 %v3462, 1.0
      %v3569 = vadd.f32 %v3464, 1.0
      %v3570 = vadd.f32 %v3466, 1.0
      %v3571 = vadd.f32 %v3468, 1.0
      %v3572 = vadd.f32 %v3470, 1.0
      %v3573 = vadd.f32 %v3472, 1.0
      %v3574 = vadd.f32 %v3474, 1.0
      %v3575 = vadd.f32 %v3476, 1.0
      %v3576 = vadd.f32 %v3478, 1.0
      %v3577 = vadd.f32 %v3480, 1.0
      %v3578 = vadd.f32 %v3482, 1.0
      %v3579 = vadd.f32 %v3484, 1.0
      %v3580 = vadd.f32 %v3486, 1.0
      %v3581 = vadd.f32 %v3488, 1.0
      %v3582 = vadd.f32 %v3490, 1.0
      %v3583 = vadd.f32 %v3492, 1.0
      %v3584 = vadd.f32 %v3494, 1.0
      %v3585 = vadd.f32 %v3496, 1.0
      %v3586 = vadd.f32 %v3498, 1.0
      %v3587 = vadd.f32 %v3500, 1.0
      %v3588 = vadd.f32 %v3502, 1.0
      %v3589 = vadd.f32 %v3504, 1.0
      %v3590 = vadd.f32 %v3506, 1.0
      %v3591 = vadd.f32 %v3508, 1.0
      %v3592 = vadd.f32 %v3510, 1.0
      %v3593 = vadd.f32 %v3512, 1.0
      %v3594 = vadd.f32 %v3514, 1.0
      %v3595 = vadd.f32 %v3516, 1.0
      %v3596 = vadd.f32 %v3518, 1.0
      %v3597 = vadd.f32 %v3520, 1.0
      %v3598 = vadd.f32 %v3522, 1.0
      %v3599 = vadd.f32 %v3524, 1.0
      %v3600 = vadd.f32 %v3526, 1.0
      %v3601 = vadd.f32 %v3528, 1.0
      %v3602 = vadd.f32 %v3530, 1.0
      %v3603 = vrcp.pop %v3531
      %v3604 = vmul.f32 1.0, %v3603
      %v3605 = vrcp.pop %v3532
      %v3606 = vmul.f32 1.0, %v3605
      %v3607 = vrcp.pop %v3533
      %v3608 = vmul.f32 1.0, %v3607
      %v3609 = vrcp.pop %v3534
      %v3610 = vmul.f32 1.0, %v3609
      %v3611 = vrcp.pop %v3535
      %v3612 = vmul.f32 1.0, %v3611
      %v3613 = vrcp.pop %v3536
      %v3614 = vmul.f32 1.0, %v3613
      %v3615 = vrcp.pop %v3537
      %v3616 = vmul.f32 1.0, %v3615
      %v3617 = vrcp.pop %v3538
      %v3618 = vmul.f32 1.0, %v3617
      %v3619 = vrcp.pop %v3539
      %v3620 = vmul.f32 1.0, %v3619
      %v3621 = vrcp.pop %v3540
      %v3622 = vmul.f32 1.0, %v3621
      %v3623 = vrcp.pop %v3541
      %v3624 = vmul.f32 1.0, %v3623
      %v3625 = vrcp.pop %v3542
      %v3626 = vmul.f32 1.0, %v3625
      %v3627 = vrcp.pop %v3543
      %v3628 = vmul.f32 1.0, %v3627
      %v3629 = vrcp.pop %v3544
      %v3630 = vmul.f32 1.0, %v3629
      %v3631 = vrcp.pop %v3545
      %v3632 = vmul.f32 1.0, %v3631
      %v3633 = vrcp.pop %v3546
      %v3634 = vmul.f32 1.0, %v3633
      %v3635 = vrcp.pop %v3547
      %v3636 = vmul.f32 1.0, %v3635
      %v3637 = vrcp.pop %v3548
      %v3638 = vmul.f32 1.0, %v3637
      %v3639 = vrcp.pop %v3549
      %v3640 = vmul.f32 1.0, %v3639
      %v3641 = vrcp.pop %v3550
      %v3642 = vmul.f32 1.0, %v3641
      %v3643 = vrcp.pop %v3551
      %v3644 = vmul.f32 1.0, %v3643
      %v3645 = vrcp.pop %v3552
      %v3646 = vmul.f32 1.0, %v3645
      %v3647 = vrcp.pop %v3553
      %v3648 = vmul.f32 1.0, %v3647
      %v3649 = vrcp.pop %v3554
      %v3650 = vmul.f32 1.0, %v3649
      %v3651 = vrcp.pop %v3555
      %v3652 = vmul.f32 1.0, %v3651
      %v3653 = vrcp.pop %v3556
      %v3654 = vmul.f32 1.0, %v3653
      %v3655 = vrcp.pop %v3557
      %v3656 = vmul.f32 1.0, %v3655
      %v3657 = vrcp.pop %v3558
      %v3658 = vmul.f32 1.0, %v3657
      %v3659 = vrcp.pop %v3559
      %v3660 = vmul.f32 1.0, %v3659
      %v3661 = vrcp.pop %v3560
      %v3662 = vmul.f32 1.0, %v3661
      %v3663 = vrcp.pop %v3561
      %v3664 = vmul.f32 1.0, %v3663
      %v3665 = vrcp.pop %v3562
      %v3666 = vmul.f32 1.0, %v3665
      %v3667 = vrcp.pop %v3563
      %v3668 = vmul.f32 1.0, %v3667
      %v3669 = vrcp.pop %v3564
      %v3670 = vmul.f32 1.0, %v3669
      %v3671 = vrcp.pop %v3565
      %v3672 = vmul.f32 1.0, %v3671
      %v3673 = vrcp.pop %v3566
      %v3674 = vmul.f32 1.0, %v3673
      %v3675 = vrcp.pop %v3567
      %v3676 = vmul.f32 1.0, %v3675
      %v3677 = vrcp.pop %v3568
      %v3678 = vmul.f32 1.0, %v3677
      %v3679 = vrcp.pop %v3569
      %v3680 = vmul.f32 1.0, %v3679
      %v3681 = vrcp.pop %v3570
      %v3682 = vmul.f32 1.0, %v3681
      %v3683 = vrcp.pop %v3571
      %v3684 = vmul.f32 1.0, %v3683
      %v3685 = vrcp.pop %v3572
      %v3686 = vmul.f32 1.0, %v3685
      %v3687 = vrcp.pop %v3573
      %v3688 = vmul.f32 1.0, %v3687
      %v3689 = vrcp.pop %v3574
      %v3690 = vmul.f32 1.0, %v3689
      %v3691 = vrcp.pop %v3575
      %v3692 = vmul.f32 1.0, %v3691
      %v3693 = vrcp.pop %v3576
      %v3694 = vmul.f32 1.0, %v3693
      %v3695 = vrcp.pop %v3577
      %v3696 = vmul.f32 1.0, %v3695
      %v3697 = vrcp.pop %v3578
      %v3698 = vmul.f32 1.0, %v3697
      %v3699 = vrcp.pop %v3579
      %v3700 = vmul.f32 1.0, %v3699
      %v3701 = vrcp.pop %v3580
      %v3702 = vmul.f32 1.0, %v3701
      %v3703 = vrcp.pop %v3581
      %v3704 = vmul.f32 1.0, %v3703
      %v3705 = vrcp.pop %v3582
      %v3706 = vmul.f32 1.0, %v3705
      %v3707 = vrcp.pop %v3583
      %v3708 = vmul.f32 1.0, %v3707
      %v3709 = vrcp.pop %v3584
      %v3710 = vmul.f32 1.0, %v3709
      %v3711 = vrcp.pop %v3585
      %v3712 = vmul.f32 1.0, %v3711
      %v3713 = vrcp.pop %v3586
      %v3714 = vmul.f32 1.0, %v3713
      %v3715 = vrcp.pop %v3587
      %v3716 = vmul.f32 1.0, %v3715
      %v3717 = vrcp.pop %v3588
      %v3718 = vmul.f32 1.0, %v3717
      %v3719 = vrcp.pop %v3589
      %v3720 = vmul.f32 1.0, %v3719
      %v3721 = vrcp.pop %v3590
      %v3722 = vmul.f32 1.0, %v3721
      %v3723 = vrcp.pop %v3591
      %v3724 = vmul.f32 1.0, %v3723
      %v3725 = vrcp.pop %v3592
      %v3726 = vmul.f32 1.0, %v3725
      %v3727 = vrcp.pop %v3593
      %v3728 = vmul.f32 1.0, %v3727
      %v3729 = vrcp.pop %v3594
      %v3730 = vmul.f32 1.0, %v3729
      %v3731 = vrcp.pop %v3595
      %v3732 = vmul.f32 1.0, %v3731
      %v3733 = vrcp.pop %v3596
      %v3734 = vmul.f32 1.0, %v3733
      %v3735 = vrcp.pop %v3597
      %v3736 = vmul.f32 1.0, %v3735
      %v3737 = vrcp.pop %v3598
      %v3738 = vmul.f32 1.0, %v3737
      %v3739 = vrcp.pop %v3599
      %v3740 = vmul.f32 1.0, %v3739
      %v3741 = vrcp.pop %v3600
      %v3742 = vmul.f32 1.0, %v3741
      %v3743 = vrcp.pop %v3601
      %v3744 = vmul.f32 1.0, %v3743
      %v3745 = vrcp.pop %v3602
      %v3746 = vmul.f32 1.0, %v3745
      %v3747 = vmul.f32 %v3243, %v3604
      %v3748 = vmul.f32 %v3244, %v3606
      %v3749 = vmul.f32 %v3245, %v3608
      %v3750 = vmul.f32 %v3246, %v3610
      %v3751 = vmul.f32 %v3247, %v3612
      %v3752 = vmul.f32 %v3248, %v3614
      %v3753 = vmul.f32 %v3249, %v3616
      %v3754 = vmul.f32 %v3250, %v3618
      %v3755 = vmul.f32 %v3251, %v3620
      %v3756 = vmul.f32 %v3252, %v3622
      %v3757 = vmul.f32 %v3253, %v3624
      %v3758 = vmul.f32 %v3254, %v3626
      %v3759 = vmul.f32 %v3255, %v3628
      %v3760 = vmul.f32 %v3256, %v3630
      %v3761 = vmul.f32 %v3257, %v3632
      %v3762 = vmul.f32 %v3258, %v3634
      %v3763 = vmul.f32 %v3259, %v3636
      %v3764 = vmul.f32 %v3260, %v3638
      %v3765 = vmul.f32 %v3261, %v3640
      %v3766 = vmul.f32 %v3262, %v3642
      %v3767 = vmul.f32 %v3263, %v3644
      %v3768 = vmul.f32 %v3264, %v3646
      %v3769 = vmul.f32 %v3265, %v3648
      %v3770 = vmul.f32 %v3266, %v3650
      %v3771 = vmul.f32 %v3267, %v3652
      %v3772 = vmul.f32 %v3268, %v3654
      %v3773 = vmul.f32 %v3269, %v3656
      %v3774 = vmul.f32 %v3270, %v3658
      %v3775 = vmul.f32 %v3271, %v3660
      %v3776 = vmul.f32 %v3272, %v3662
      %v3777 = vmul.f32 %v3273, %v3664
      %v3778 = vmul.f32 %v3274, %v3666
      %v3779 = vmul.f32 %v3275, %v3668
      %v3780 = vmul.f32 %v3276, %v3670
      %v3781 = vmul.f32 %v3277, %v3672
      %v3782 = vmul.f32 %v3278, %v3674
      %v3783 = vmul.f32 %v3279, %v3676
      %v3784 = vmul.f32 %v3280, %v3678
      %v3785 = vmul.f32 %v3281, %v3680
      %v3786 = vmul.f32 %v3282, %v3682
      %v3787 = vmul.f32 %v3283, %v3684
      %v3788 = vmul.f32 %v3284, %v3686
      %v3789 = vmul.f32 %v3285, %v3688
      %v3790 = vmul.f32 %v3286, %v3690
      %v3791 = vmul.f32 %v3287, %v3692
      %v3792 = vmul.f32 %v3288, %v3694
      %v3793 = vmul.f32 %v3289, %v3696
      %v3794 = vmul.f32 %v3290, %v3698
      %v3795 = vmul.f32 %v3291, %v3700
      %v3796 = vmul.f32 %v3292, %v3702
      %v3797 = vmul.f32 %v3293, %v3704
      %v3798 = vmul.f32 %v3294, %v3706
      %v3799 = vmul.f32 %v3295, %v3708
      %v3800 = vmul.f32 %v3296, %v3710
      %v3801 = vmul.f32 %v3297, %v3712
      %v3802 = vmul.f32 %v3298, %v3714
      %v3803 = vmul.f32 %v3299, %v3716
      %v3804 = vmul.f32 %v3300, %v3718
      %v3805 = vmul.f32 %v3301, %v3720
      %v3806 = vmul.f32 %v3302, %v3722
      %v3807 = vmul.f32 %v3303, %v3724
      %v3808 = vmul.f32 %v3304, %v3726
      %v3809 = vmul.f32 %v3305, %v3728
      %v3810 = vmul.f32 %v3306, %v3730
      %v3811 = vmul.f32 %v3307, %v3732
      %v3812 = vmul.f32 %v3308, %v3734
      %v3813 = vmul.f32 %v3309, %v3736
      %v3814 = vmul.f32 %v3310, %v3738
      %v3815 = vmul.f32 %v3311, %v3740
      %v3816 = vmul.f32 %v3312, %v3742
      %v3817 = vmul.f32 %v3313, %v3744
      %v3818 = vmul.f32 %v3314, %v3746
      %v3819 = vld [vmem:[%s5] sm:$0x1]
      %3821 = vset.pattern.permute.xlu0 0
      %3822 = vperm.xlu0 %3821, %v3747
      %v3823 = vpop.permute.xlu0 %3822
      %v3826 = vunpack.c.l.s4 839922192
      %v3827 = vunpack.c.0.s8 %v3826
      %v3828 = vlaneseq
      %v3829 = vshrl.u32 %v3828, 7
      %v3830 = vsub.s32 %v3827, %v3829
      %v3831 = vrot.slane %v3823, %v3830
      %3833 = vset.pattern.permute.xlu0 0
      %3834 = vperm.xlu0 %3833, %v3748
      %v3835 = vpop.permute.xlu0 %3834
      %v3838 = vunpack.c.l.s4 839922192
      %v3839 = vunpack.c.0.s8 %v3838
      %v3840 = vlaneseq
      %v3841 = vshrl.u32 %v3840, 7
      %v3842 = vsub.s32 %v3839, %v3841
      %v3843 = vrot.slane %v3835, %v3842
      %3845 = vset.pattern.permute.xlu0 0
      %3846 = vperm.xlu0 %3845, %v3749
      %v3847 = vpop.permute.xlu0 %3846
      %v3850 = vunpack.c.l.s4 839922192
      %v3851 = vunpack.c.0.s8 %v3850
      %v3852 = vlaneseq
      %v3853 = vshrl.u32 %v3852, 7
      %v3854 = vsub.s32 %v3851, %v3853
      %v3855 = vrot.slane %v3847, %v3854
      %3857 = vset.pattern.permute.xlu0 0
      %3858 = vperm.xlu0 %3857, %v3750
      %v3859 = vpop.permute.xlu0 %3858
      %v3862 = vunpack.c.l.s4 839922192
      %v3863 = vunpack.c.0.s8 %v3862
      %v3864 = vlaneseq
      %v3865 = vshrl.u32 %v3864, 7
      %v3866 = vsub.s32 %v3863, %v3865
      %v3867 = vrot.slane %v3859, %v3866
      %3869 = vset.pattern.permute.xlu0 0
      %3870 = vperm.xlu0 %3869, %v3751
      %v3871 = vpop.permute.xlu0 %3870
      %v3874 = vunpack.c.l.s4 839922192
      %v3875 = vunpack.c.0.s8 %v3874
      %v3876 = vlaneseq
      %v3877 = vshrl.u32 %v3876, 7
      %v3878 = vsub.s32 %v3875, %v3877
      %v3879 = vrot.slane %v3871, %v3878
      %3881 = vset.pattern.permute.xlu0 0
      %3882 = vperm.xlu0 %3881, %v3752
      %v3883 = vpop.permute.xlu0 %3882
      %v3886 = vunpack.c.l.s4 839922192
      %v3887 = vunpack.c.0.s8 %v3886
      %v3888 = vlaneseq
      %v3889 = vshrl.u32 %v3888, 7
      %v3890 = vsub.s32 %v3887, %v3889
      %v3891 = vrot.slane %v3883, %v3890
      %3893 = vset.pattern.permute.xlu0 0
      %3894 = vperm.xlu0 %3893, %v3753
      %v3895 = vpop.permute.xlu0 %3894
      %v3898 = vunpack.c.l.s4 839922192
      %v3899 = vunpack.c.0.s8 %v3898
      %v3900 = vlaneseq
      %v3901 = vshrl.u32 %v3900, 7
      %v3902 = vsub.s32 %v3899, %v3901
      %v3903 = vrot.slane %v3895, %v3902
      %3905 = vset.pattern.permute.xlu0 0
      %3906 = vperm.xlu0 %3905, %v3754
      %v3907 = vpop.permute.xlu0 %3906
      %v3910 = vunpack.c.l.s4 839922192
      %v3911 = vunpack.c.0.s8 %v3910
      %v3912 = vlaneseq
      %v3913 = vshrl.u32 %v3912, 7
      %v3914 = vsub.s32 %v3911, %v3913
      %v3915 = vrot.slane %v3907, %v3914
      %3917 = vset.pattern.permute.xlu0 0
      %3918 = vperm.xlu0 %3917, %v3755
      %v3919 = vpop.permute.xlu0 %3918
      %v3922 = vunpack.c.l.s4 839922192
      %v3923 = vunpack.c.0.s8 %v3922
      %v3924 = vlaneseq
      %v3925 = vshrl.u32 %v3924, 7
      %v3926 = vsub.s32 %v3923, %v3925
      %v3927 = vrot.slane %v3919, %v3926
      %3929 = vset.pattern.permute.xlu0 0
      %3930 = vperm.xlu0 %3929, %v3756
      %v3931 = vpop.permute.xlu0 %3930
      %v3934 = vunpack.c.l.s4 839922192
      %v3935 = vunpack.c.0.s8 %v3934
      %v3936 = vlaneseq
      %v3937 = vshrl.u32 %v3936, 7
      %v3938 = vsub.s32 %v3935, %v3937
      %v3939 = vrot.slane %v3931, %v3938
      %3941 = vset.pattern.permute.xlu0 0
      %3942 = vperm.xlu0 %3941, %v3757
      %v3943 = vpop.permute.xlu0 %3942
      %v3946 = vunpack.c.l.s4 839922192
      %v3947 = vunpack.c.0.s8 %v3946
      %v3948 = vlaneseq
      %v3949 = vshrl.u32 %v3948, 7
      %v3950 = vsub.s32 %v3947, %v3949
      %v3951 = vrot.slane %v3943, %v3950
      %3953 = vset.pattern.permute.xlu0 0
      %3954 = vperm.xlu0 %3953, %v3758
      %v3955 = vpop.permute.xlu0 %3954
      %v3958 = vunpack.c.l.s4 839922192
      %v3959 = vunpack.c.0.s8 %v3958
      %v3960 = vlaneseq
      %v3961 = vshrl.u32 %v3960, 7
      %v3962 = vsub.s32 %v3959, %v3961
      %v3963 = vrot.slane %v3955, %v3962
      %3965 = vset.pattern.permute.xlu0 0
      %3966 = vperm.xlu0 %3965, %v3759
      %v3967 = vpop.permute.xlu0 %3966
      %v3970 = vunpack.c.l.s4 839922192
      %v3971 = vunpack.c.0.s8 %v3970
      %v3972 = vlaneseq
      %v3973 = vshrl.u32 %v3972, 7
      %v3974 = vsub.s32 %v3971, %v3973
      %v3975 = vrot.slane %v3967, %v3974
      %3977 = vset.pattern.permute.xlu0 0
      %3978 = vperm.xlu0 %3977, %v3760
      %v3979 = vpop.permute.xlu0 %3978
      %v3982 = vunpack.c.l.s4 839922192
      %v3983 = vunpack.c.0.s8 %v3982
      %v3984 = vlaneseq
      %v3985 = vshrl.u32 %v3984, 7
      %v3986 = vsub.s32 %v3983, %v3985
      %v3987 = vrot.slane %v3979, %v3986
      %3989 = vset.pattern.permute.xlu0 0
      %3990 = vperm.xlu0 %3989, %v3761
      %v3991 = vpop.permute.xlu0 %3990
      %v3994 = vunpack.c.l.s4 839922192
      %v3995 = vunpack.c.0.s8 %v3994
      %v3996 = vlaneseq
      %v3997 = vshrl.u32 %v3996, 7
      %v3998 = vsub.s32 %v3995, %v3997
      %v3999 = vrot.slane %v3991, %v3998
      %4001 = vset.pattern.permute.xlu0 0
      %4002 = vperm.xlu0 %4001, %v3762
      %v4003 = vpop.permute.xlu0 %4002
      %v4006 = vunpack.c.l.s4 839922192
      %v4007 = vunpack.c.0.s8 %v4006
      %v4008 = vlaneseq
      %v4009 = vshrl.u32 %v4008, 7
      %v4010 = vsub.s32 %v4007, %v4009
      %v4011 = vrot.slane %v4003, %v4010
      %4013 = vset.pattern.permute.xlu0 0
      %4014 = vperm.xlu0 %4013, %v3763
      %v4015 = vpop.permute.xlu0 %4014
      %v4018 = vunpack.c.l.s4 839922192
      %v4019 = vunpack.c.0.s8 %v4018
      %v4020 = vlaneseq
      %v4021 = vshrl.u32 %v4020, 7
      %v4022 = vsub.s32 %v4019, %v4021
      %v4023 = vrot.slane %v4015, %v4022
      %4025 = vset.pattern.permute.xlu0 0
      %4026 = vperm.xlu0 %4025, %v3764
      %v4027 = vpop.permute.xlu0 %4026
      %v4030 = vunpack.c.l.s4 839922192
      %v4031 = vunpack.c.0.s8 %v4030
      %v4032 = vlaneseq
      %v4033 = vshrl.u32 %v4032, 7
      %v4034 = vsub.s32 %v4031, %v4033
      %v4035 = vrot.slane %v4027, %v4034
      %4037 = vset.pattern.permute.xlu0 0
      %4038 = vperm.xlu0 %4037, %v3765
      %v4039 = vpop.permute.xlu0 %4038
      %v4042 = vunpack.c.l.s4 839922192
      %v4043 = vunpack.c.0.s8 %v4042
      %v4044 = vlaneseq
      %v4045 = vshrl.u32 %v4044, 7
      %v4046 = vsub.s32 %v4043, %v4045
      %v4047 = vrot.slane %v4039, %v4046
      %4049 = vset.pattern.permute.xlu0 0
      %4050 = vperm.xlu0 %4049, %v3766
      %v4051 = vpop.permute.xlu0 %4050
      %v4054 = vunpack.c.l.s4 839922192
      %v4055 = vunpack.c.0.s8 %v4054
      %v4056 = vlaneseq
      %v4057 = vshrl.u32 %v4056, 7
      %v4058 = vsub.s32 %v4055, %v4057
      %v4059 = vrot.slane %v4051, %v4058
      %4061 = vset.pattern.permute.xlu0 0
      %4062 = vperm.xlu0 %4061, %v3767
      %v4063 = vpop.permute.xlu0 %4062
      %v4066 = vunpack.c.l.s4 839922192
      %v4067 = vunpack.c.0.s8 %v4066
      %v4068 = vlaneseq
      %v4069 = vshrl.u32 %v4068, 7
      %v4070 = vsub.s32 %v4067, %v4069
      %v4071 = vrot.slane %v4063, %v4070
      %4073 = vset.pattern.permute.xlu0 0
      %4074 = vperm.xlu0 %4073, %v3768
      %v4075 = vpop.permute.xlu0 %4074
      %v4078 = vunpack.c.l.s4 839922192
      %v4079 = vunpack.c.0.s8 %v4078
      %v4080 = vlaneseq
      %v4081 = vshrl.u32 %v4080, 7
      %v4082 = vsub.s32 %v4079, %v4081
      %v4083 = vrot.slane %v4075, %v4082
      %4085 = vset.pattern.permute.xlu0 0
      %4086 = vperm.xlu0 %4085, %v3769
      %v4087 = vpop.permute.xlu0 %4086
      %v4090 = vunpack.c.l.s4 839922192
      %v4091 = vunpack.c.0.s8 %v4090
      %v4092 = vlaneseq
      %v4093 = vshrl.u32 %v4092, 7
      %v4094 = vsub.s32 %v4091, %v4093
      %v4095 = vrot.slane %v4087, %v4094
      %4097 = vset.pattern.permute.xlu0 0
      %4098 = vperm.xlu0 %4097, %v3770
      %v4099 = vpop.permute.xlu0 %4098
      %v4102 = vunpack.c.l.s4 839922192
      %v4103 = vunpack.c.0.s8 %v4102
      %v4104 = vlaneseq
      %v4105 = vshrl.u32 %v4104, 7
      %v4106 = vsub.s32 %v4103, %v4105
      %v4107 = vrot.slane %v4099, %v4106
      %4109 = vset.pattern.permute.xlu0 0
      %4110 = vperm.xlu0 %4109, %v3771
      %v4111 = vpop.permute.xlu0 %4110
      %v4114 = vunpack.c.l.s4 839922192
      %v4115 = vunpack.c.0.s8 %v4114
      %v4116 = vlaneseq
      %v4117 = vshrl.u32 %v4116, 7
      %v4118 = vsub.s32 %v4115, %v4117
      %v4119 = vrot.slane %v4111, %v4118
      %4121 = vset.pattern.permute.xlu0 0
      %4122 = vperm.xlu0 %4121, %v3772
      %v4123 = vpop.permute.xlu0 %4122
      %v4126 = vunpack.c.l.s4 839922192
      %v4127 = vunpack.c.0.s8 %v4126
      %v4128 = vlaneseq
      %v4129 = vshrl.u32 %v4128, 7
      %v4130 = vsub.s32 %v4127, %v4129
      %v4131 = vrot.slane %v4123, %v4130
      %4133 = vset.pattern.permute.xlu0 0
      %4134 = vperm.xlu0 %4133, %v3773
      %v4135 = vpop.permute.xlu0 %4134
      %v4138 = vunpack.c.l.s4 839922192
      %v4139 = vunpack.c.0.s8 %v4138
      %v4140 = vlaneseq
      %v4141 = vshrl.u32 %v4140, 7
      %v4142 = vsub.s32 %v4139, %v4141
      %v4143 = vrot.slane %v4135, %v4142
      %4145 = vset.pattern.permute.xlu0 0
      %4146 = vperm.xlu0 %4145, %v3774
      %v4147 = vpop.permute.xlu0 %4146
      %v4150 = vunpack.c.l.s4 839922192
      %v4151 = vunpack.c.0.s8 %v4150
      %v4152 = vlaneseq
      %v4153 = vshrl.u32 %v4152, 7
      %v4154 = vsub.s32 %v4151, %v4153
      %v4155 = vrot.slane %v4147, %v4154
      %4157 = vset.pattern.permute.xlu0 0
      %4158 = vperm.xlu0 %4157, %v3775
      %v4159 = vpop.permute.xlu0 %4158
      %v4162 = vunpack.c.l.s4 839922192
      %v4163 = vunpack.c.0.s8 %v4162
      %v4164 = vlaneseq
      %v4165 = vshrl.u32 %v4164, 7
      %v4166 = vsub.s32 %v4163, %v4165
      %v4167 = vrot.slane %v4159, %v4166
      %4169 = vset.pattern.permute.xlu0 0
      %4170 = vperm.xlu0 %4169, %v3776
      %v4171 = vpop.permute.xlu0 %4170
      %v4174 = vunpack.c.l.s4 839922192
      %v4175 = vunpack.c.0.s8 %v4174
      %v4176 = vlaneseq
      %v4177 = vshrl.u32 %v4176, 7
      %v4178 = vsub.s32 %v4175, %v4177
      %v4179 = vrot.slane %v4171, %v4178
      %4181 = vset.pattern.permute.xlu0 0
      %4182 = vperm.xlu0 %4181, %v3777
      %v4183 = vpop.permute.xlu0 %4182
      %v4186 = vunpack.c.l.s4 839922192
      %v4187 = vunpack.c.0.s8 %v4186
      %v4188 = vlaneseq
      %v4189 = vshrl.u32 %v4188, 7
      %v4190 = vsub.s32 %v4187, %v4189
      %v4191 = vrot.slane %v4183, %v4190
      %4193 = vset.pattern.permute.xlu0 0
      %4194 = vperm.xlu0 %4193, %v3778
      %v4195 = vpop.permute.xlu0 %4194
      %v4198 = vunpack.c.l.s4 839922192
      %v4199 = vunpack.c.0.s8 %v4198
      %v4200 = vlaneseq
      %v4201 = vshrl.u32 %v4200, 7
      %v4202 = vsub.s32 %v4199, %v4201
      %v4203 = vrot.slane %v4195, %v4202
      %4205 = vset.pattern.permute.xlu0 0
      %4206 = vperm.xlu0 %4205, %v3779
      %v4207 = vpop.permute.xlu0 %4206
      %v4210 = vunpack.c.l.s4 839922192
      %v4211 = vunpack.c.0.s8 %v4210
      %v4212 = vlaneseq
      %v4213 = vshrl.u32 %v4212, 7
      %v4214 = vsub.s32 %v4211, %v4213
      %v4215 = vrot.slane %v4207, %v4214
      %4217 = vset.pattern.permute.xlu0 0
      %4218 = vperm.xlu0 %4217, %v3780
      %v4219 = vpop.permute.xlu0 %4218
      %v4222 = vunpack.c.l.s4 839922192
      %v4223 = vunpack.c.0.s8 %v4222
      %v4224 = vlaneseq
      %v4225 = vshrl.u32 %v4224, 7
      %v4226 = vsub.s32 %v4223, %v4225
      %v4227 = vrot.slane %v4219, %v4226
      %4229 = vset.pattern.permute.xlu0 0
      %4230 = vperm.xlu0 %4229, %v3781
      %v4231 = vpop.permute.xlu0 %4230
      %v4234 = vunpack.c.l.s4 839922192
      %v4235 = vunpack.c.0.s8 %v4234
      %v4236 = vlaneseq
      %v4237 = vshrl.u32 %v4236, 7
      %v4238 = vsub.s32 %v4235, %v4237
      %v4239 = vrot.slane %v4231, %v4238
      %4241 = vset.pattern.permute.xlu0 0
      %4242 = vperm.xlu0 %4241, %v3782
      %v4243 = vpop.permute.xlu0 %4242
      %v4246 = vunpack.c.l.s4 839922192
      %v4247 = vunpack.c.0.s8 %v4246
      %v4248 = vlaneseq
      %v4249 = vshrl.u32 %v4248, 7
      %v4250 = vsub.s32 %v4247, %v4249
      %v4251 = vrot.slane %v4243, %v4250
      %4253 = vset.pattern.permute.xlu0 0
      %4254 = vperm.xlu0 %4253, %v3783
      %v4255 = vpop.permute.xlu0 %4254
      %v4258 = vunpack.c.l.s4 839922192
      %v4259 = vunpack.c.0.s8 %v4258
      %v4260 = vlaneseq
      %v4261 = vshrl.u32 %v4260, 7
      %v4262 = vsub.s32 %v4259, %v4261
      %v4263 = vrot.slane %v4255, %v4262
      %4265 = vset.pattern.permute.xlu0 0
      %4266 = vperm.xlu0 %4265, %v3784
      %v4267 = vpop.permute.xlu0 %4266
      %v4270 = vunpack.c.l.s4 839922192
      %v4271 = vunpack.c.0.s8 %v4270
      %v4272 = vlaneseq
      %v4273 = vshrl.u32 %v4272, 7
      %v4274 = vsub.s32 %v4271, %v4273
      %v4275 = vrot.slane %v4267, %v4274
      %4277 = vset.pattern.permute.xlu0 0
      %4278 = vperm.xlu0 %4277, %v3785
      %v4279 = vpop.permute.xlu0 %4278
      %v4282 = vunpack.c.l.s4 839922192
      %v4283 = vunpack.c.0.s8 %v4282
      %v4284 = vlaneseq
      %v4285 = vshrl.u32 %v4284, 7
      %v4286 = vsub.s32 %v4283, %v4285
      %v4287 = vrot.slane %v4279, %v4286
      %4289 = vset.pattern.permute.xlu0 0
      %4290 = vperm.xlu0 %4289, %v3786
      %v4291 = vpop.permute.xlu0 %4290
      %v4294 = vunpack.c.l.s4 839922192
      %v4295 = vunpack.c.0.s8 %v4294
      %v4296 = vlaneseq
      %v4297 = vshrl.u32 %v4296, 7
      %v4298 = vsub.s32 %v4295, %v4297
      %v4299 = vrot.slane %v4291, %v4298
      %4301 = vset.pattern.permute.xlu0 0
      %4302 = vperm.xlu0 %4301, %v3787
      %v4303 = vpop.permute.xlu0 %4302
      %v4306 = vunpack.c.l.s4 839922192
      %v4307 = vunpack.c.0.s8 %v4306
      %v4308 = vlaneseq
      %v4309 = vshrl.u32 %v4308, 7
      %v4310 = vsub.s32 %v4307, %v4309
      %v4311 = vrot.slane %v4303, %v4310
      %4313 = vset.pattern.permute.xlu0 0
      %4314 = vperm.xlu0 %4313, %v3788
      %v4315 = vpop.permute.xlu0 %4314
      %v4318 = vunpack.c.l.s4 839922192
      %v4319 = vunpack.c.0.s8 %v4318
      %v4320 = vlaneseq
      %v4321 = vshrl.u32 %v4320, 7
      %v4322 = vsub.s32 %v4319, %v4321
      %v4323 = vrot.slane %v4315, %v4322
      %4325 = vset.pattern.permute.xlu0 0
      %4326 = vperm.xlu0 %4325, %v3789
      %v4327 = vpop.permute.xlu0 %4326
      %v4330 = vunpack.c.l.s4 839922192
      %v4331 = vunpack.c.0.s8 %v4330
      %v4332 = vlaneseq
      %v4333 = vshrl.u32 %v4332, 7
      %v4334 = vsub.s32 %v4331, %v4333
      %v4335 = vrot.slane %v4327, %v4334
      %4337 = vset.pattern.permute.xlu0 0
      %4338 = vperm.xlu0 %4337, %v3790
      %v4339 = vpop.permute.xlu0 %4338
      %v4342 = vunpack.c.l.s4 839922192
      %v4343 = vunpack.c.0.s8 %v4342
      %v4344 = vlaneseq
      %v4345 = vshrl.u32 %v4344, 7
      %v4346 = vsub.s32 %v4343, %v4345
      %v4347 = vrot.slane %v4339, %v4346
      %4349 = vset.pattern.permute.xlu0 0
      %4350 = vperm.xlu0 %4349, %v3791
      %v4351 = vpop.permute.xlu0 %4350
      %v4354 = vunpack.c.l.s4 839922192
      %v4355 = vunpack.c.0.s8 %v4354
      %v4356 = vlaneseq
      %v4357 = vshrl.u32 %v4356, 7
      %v4358 = vsub.s32 %v4355, %v4357
      %v4359 = vrot.slane %v4351, %v4358
      %4361 = vset.pattern.permute.xlu0 0
      %4362 = vperm.xlu0 %4361, %v3792
      %v4363 = vpop.permute.xlu0 %4362
      %v4366 = vunpack.c.l.s4 839922192
      %v4367 = vunpack.c.0.s8 %v4366
      %v4368 = vlaneseq
      %v4369 = vshrl.u32 %v4368, 7
      %v4370 = vsub.s32 %v4367, %v4369
      %v4371 = vrot.slane %v4363, %v4370
      %4373 = vset.pattern.permute.xlu0 0
      %4374 = vperm.xlu0 %4373, %v3793
      %v4375 = vpop.permute.xlu0 %4374
      %v4378 = vunpack.c.l.s4 839922192
      %v4379 = vunpack.c.0.s8 %v4378
      %v4380 = vlaneseq
      %v4381 = vshrl.u32 %v4380, 7
      %v4382 = vsub.s32 %v4379, %v4381
      %v4383 = vrot.slane %v4375, %v4382
      %4385 = vset.pattern.permute.xlu0 0
      %4386 = vperm.xlu0 %4385, %v3794
      %v4387 = vpop.permute.xlu0 %4386
      %v4390 = vunpack.c.l.s4 839922192
      %v4391 = vunpack.c.0.s8 %v4390
      %v4392 = vlaneseq
      %v4393 = vshrl.u32 %v4392, 7
      %v4394 = vsub.s32 %v4391, %v4393
      %v4395 = vrot.slane %v4387, %v4394
      %4397 = vset.pattern.permute.xlu0 0
      %4398 = vperm.xlu0 %4397, %v3795
      %v4399 = vpop.permute.xlu0 %4398
      %v4402 = vunpack.c.l.s4 839922192
      %v4403 = vunpack.c.0.s8 %v4402
      %v4404 = vlaneseq
      %v4405 = vshrl.u32 %v4404, 7
      %v4406 = vsub.s32 %v4403, %v4405
      %v4407 = vrot.slane %v4399, %v4406
      %4409 = vset.pattern.permute.xlu0 0
      %4410 = vperm.xlu0 %4409, %v3796
      %v4411 = vpop.permute.xlu0 %4410
      %v4414 = vunpack.c.l.s4 839922192
      %v4415 = vunpack.c.0.s8 %v4414
      %v4416 = vlaneseq
      %v4417 = vshrl.u32 %v4416, 7
      %v4418 = vsub.s32 %v4415, %v4417
      %v4419 = vrot.slane %v4411, %v4418
      %4421 = vset.pattern.permute.xlu0 0
      %4422 = vperm.xlu0 %4421, %v3797
      %v4423 = vpop.permute.xlu0 %4422
      %v4426 = vunpack.c.l.s4 839922192
      %v4427 = vunpack.c.0.s8 %v4426
      %v4428 = vlaneseq
      %v4429 = vshrl.u32 %v4428, 7
      %v4430 = vsub.s32 %v4427, %v4429
      %v4431 = vrot.slane %v4423, %v4430
      %4433 = vset.pattern.permute.xlu0 0
      %4434 = vperm.xlu0 %4433, %v3798
      %v4435 = vpop.permute.xlu0 %4434
      %v4438 = vunpack.c.l.s4 839922192
      %v4439 = vunpack.c.0.s8 %v4438
      %v4440 = vlaneseq
      %v4441 = vshrl.u32 %v4440, 7
      %v4442 = vsub.s32 %v4439, %v4441
      %v4443 = vrot.slane %v4435, %v4442
      %4445 = vset.pattern.permute.xlu0 0
      %4446 = vperm.xlu0 %4445, %v3799
      %v4447 = vpop.permute.xlu0 %4446
      %v4450 = vunpack.c.l.s4 839922192
      %v4451 = vunpack.c.0.s8 %v4450
      %v4452 = vlaneseq
      %v4453 = vshrl.u32 %v4452, 7
      %v4454 = vsub.s32 %v4451, %v4453
      %v4455 = vrot.slane %v4447, %v4454
      %4457 = vset.pattern.permute.xlu0 0
      %4458 = vperm.xlu0 %4457, %v3800
      %v4459 = vpop.permute.xlu0 %4458
      %v4462 = vunpack.c.l.s4 839922192
      %v4463 = vunpack.c.0.s8 %v4462
      %v4464 = vlaneseq
      %v4465 = vshrl.u32 %v4464, 7
      %v4466 = vsub.s32 %v4463, %v4465
      %v4467 = vrot.slane %v4459, %v4466
      %4469 = vset.pattern.permute.xlu0 0
      %4470 = vperm.xlu0 %4469, %v3801
      %v4471 = vpop.permute.xlu0 %4470
      %v4474 = vunpack.c.l.s4 839922192
      %v4475 = vunpack.c.0.s8 %v4474
      %v4476 = vlaneseq
      %v4477 = vshrl.u32 %v4476, 7
      %v4478 = vsub.s32 %v4475, %v4477
      %v4479 = vrot.slane %v4471, %v4478
      %4481 = vset.pattern.permute.xlu0 0
      %4482 = vperm.xlu0 %4481, %v3802
      %v4483 = vpop.permute.xlu0 %4482
      %v4486 = vunpack.c.l.s4 839922192
      %v4487 = vunpack.c.0.s8 %v4486
      %v4488 = vlaneseq
      %v4489 = vshrl.u32 %v4488, 7
      %v4490 = vsub.s32 %v4487, %v4489
      %v4491 = vrot.slane %v4483, %v4490
      %4493 = vset.pattern.permute.xlu0 0
      %4494 = vperm.xlu0 %4493, %v3803
      %v4495 = vpop.permute.xlu0 %4494
      %v4498 = vunpack.c.l.s4 839922192
      %v4499 = vunpack.c.0.s8 %v4498
      %v4500 = vlaneseq
      %v4501 = vshrl.u32 %v4500, 7
      %v4502 = vsub.s32 %v4499, %v4501
      %v4503 = vrot.slane %v4495, %v4502
      %4505 = vset.pattern.permute.xlu0 0
      %4506 = vperm.xlu0 %4505, %v3804
      %v4507 = vpop.permute.xlu0 %4506
      %v4510 = vunpack.c.l.s4 839922192
      %v4511 = vunpack.c.0.s8 %v4510
      %v4512 = vlaneseq
      %v4513 = vshrl.u32 %v4512, 7
      %v4514 = vsub.s32 %v4511, %v4513
      %v4515 = vrot.slane %v4507, %v4514
      %4517 = vset.pattern.permute.xlu0 0
      %4518 = vperm.xlu0 %4517, %v3805
      %v4519 = vpop.permute.xlu0 %4518
      %v4522 = vunpack.c.l.s4 839922192
      %v4523 = vunpack.c.0.s8 %v4522
      %v4524 = vlaneseq
      %v4525 = vshrl.u32 %v4524, 7
      %v4526 = vsub.s32 %v4523, %v4525
      %v4527 = vrot.slane %v4519, %v4526
      %4529 = vset.pattern.permute.xlu0 0
      %4530 = vperm.xlu0 %4529, %v3806
      %v4531 = vpop.permute.xlu0 %4530
      %v4534 = vunpack.c.l.s4 839922192
      %v4535 = vunpack.c.0.s8 %v4534
      %v4536 = vlaneseq
      %v4537 = vshrl.u32 %v4536, 7
      %v4538 = vsub.s32 %v4535, %v4537
      %v4539 = vrot.slane %v4531, %v4538
      %4541 = vset.pattern.permute.xlu0 0
      %4542 = vperm.xlu0 %4541, %v3807
      %v4543 = vpop.permute.xlu0 %4542
      %v4546 = vunpack.c.l.s4 839922192
      %v4547 = vunpack.c.0.s8 %v4546
      %v4548 = vlaneseq
      %v4549 = vshrl.u32 %v4548, 7
      %v4550 = vsub.s32 %v4547, %v4549
      %v4551 = vrot.slane %v4543, %v4550
      %4553 = vset.pattern.permute.xlu0 0
      %4554 = vperm.xlu0 %4553, %v3808
      %v4555 = vpop.permute.xlu0 %4554
      %v4558 = vunpack.c.l.s4 839922192
      %v4559 = vunpack.c.0.s8 %v4558
      %v4560 = vlaneseq
      %v4561 = vshrl.u32 %v4560, 7
      %v4562 = vsub.s32 %v4559, %v4561
      %v4563 = vrot.slane %v4555, %v4562
      %4565 = vset.pattern.permute.xlu0 0
      %4566 = vperm.xlu0 %4565, %v3809
      %v4567 = vpop.permute.xlu0 %4566
      %v4570 = vunpack.c.l.s4 839922192
      %v4571 = vunpack.c.0.s8 %v4570
      %v4572 = vlaneseq
      %v4573 = vshrl.u32 %v4572, 7
      %v4574 = vsub.s32 %v4571, %v4573
      %v4575 = vrot.slane %v4567, %v4574
      %4577 = vset.pattern.permute.xlu0 0
      %4578 = vperm.xlu0 %4577, %v3810
      %v4579 = vpop.permute.xlu0 %4578
      %v4582 = vunpack.c.l.s4 839922192
      %v4583 = vunpack.c.0.s8 %v4582
      %v4584 = vlaneseq
      %v4585 = vshrl.u32 %v4584, 7
      %v4586 = vsub.s32 %v4583, %v4585
      %v4587 = vrot.slane %v4579, %v4586
      %4589 = vset.pattern.permute.xlu0 0
      %4590 = vperm.xlu0 %4589, %v3811
      %v4591 = vpop.permute.xlu0 %4590
      %v4594 = vunpack.c.l.s4 839922192
      %v4595 = vunpack.c.0.s8 %v4594
      %v4596 = vlaneseq
      %v4597 = vshrl.u32 %v4596, 7
      %v4598 = vsub.s32 %v4595, %v4597
      %v4599 = vrot.slane %v4591, %v4598
      %4601 = vset.pattern.permute.xlu0 0
      %4602 = vperm.xlu0 %4601, %v3812
      %v4603 = vpop.permute.xlu0 %4602
      %v4606 = vunpack.c.l.s4 839922192
      %v4607 = vunpack.c.0.s8 %v4606
      %v4608 = vlaneseq
      %v4609 = vshrl.u32 %v4608, 7
      %v4610 = vsub.s32 %v4607, %v4609
      %v4611 = vrot.slane %v4603, %v4610
      %4613 = vset.pattern.permute.xlu0 0
      %4614 = vperm.xlu0 %4613, %v3813
      %v4615 = vpop.permute.xlu0 %4614
      %v4618 = vunpack.c.l.s4 839922192
      %v4619 = vunpack.c.0.s8 %v4618
      %v4620 = vlaneseq
      %v4621 = vshrl.u32 %v4620, 7
      %v4622 = vsub.s32 %v4619, %v4621
      %v4623 = vrot.slane %v4615, %v4622
      %4625 = vset.pattern.permute.xlu0 0
      %4626 = vperm.xlu0 %4625, %v3814
      %v4627 = vpop.permute.xlu0 %4626
      %v4630 = vunpack.c.l.s4 839922192
      %v4631 = vunpack.c.0.s8 %v4630
      %v4632 = vlaneseq
      %v4633 = vshrl.u32 %v4632, 7
      %v4634 = vsub.s32 %v4631, %v4633
      %v4635 = vrot.slane %v4627, %v4634
      %4637 = vset.pattern.permute.xlu0 0
      %4638 = vperm.xlu0 %4637, %v3815
      %v4639 = vpop.permute.xlu0 %4638
      %v4642 = vunpack.c.l.s4 839922192
      %v4643 = vunpack.c.0.s8 %v4642
      %v4644 = vlaneseq
      %v4645 = vshrl.u32 %v4644, 7
      %v4646 = vsub.s32 %v4643, %v4645
      %v4647 = vrot.slane %v4639, %v4646
      %4649 = vset.pattern.permute.xlu0 0
      %4650 = vperm.xlu0 %4649, %v3816
      %v4651 = vpop.permute.xlu0 %4650
      %v4654 = vunpack.c.l.s4 839922192
      %v4655 = vunpack.c.0.s8 %v4654
      %v4656 = vlaneseq
      %v4657 = vshrl.u32 %v4656, 7
      %v4658 = vsub.s32 %v4655, %v4657
      %v4659 = vrot.slane %v4651, %v4658
      %4661 = vset.pattern.permute.xlu0 0
      %4662 = vperm.xlu0 %4661, %v3817
      %v4663 = vpop.permute.xlu0 %4662
      %v4666 = vunpack.c.l.s4 839922192
      %v4667 = vunpack.c.0.s8 %v4666
      %v4668 = vlaneseq
      %v4669 = vshrl.u32 %v4668, 7
      %v4670 = vsub.s32 %v4667, %v4669
      %v4671 = vrot.slane %v4663, %v4670
      %4673 = vset.pattern.permute.xlu0 0
      %4674 = vperm.xlu0 %4673, %v3818
      %v4675 = vpop.permute.xlu0 %4674
      %v4678 = vunpack.c.l.s4 839922192
      %v4679 = vunpack.c.0.s8 %v4678
      %v4680 = vlaneseq
      %v4681 = vshrl.u32 %v4680, 7
      %v4682 = vsub.s32 %v4679, %v4681
      %v4683 = vrot.slane %v4675, %v4682
      %v4684 = vlaneseq
      %v4685 = vshrl.u32 %v4684, 7
      %v4686 = vsub.s32 0, %v4685
      %v4687 = vrot.slane %v3819, %v4686
      %v4689 = vcombine.high %v4687, %v4687
      %v4691 = vmul.f32 %v3831, %v4687
      %v4692 = vmul.f32 %v3843, %v4689
      %v4693 = vmul.f32 %v3855, %v4687
      %v4694 = vmul.f32 %v3867, %v4689
      %v4695 = vmul.f32 %v3879, %v4687
      %v4696 = vmul.f32 %v3891, %v4689
      %v4697 = vmul.f32 %v3903, %v4687
      %v4698 = vmul.f32 %v3915, %v4689
      %v4699 = vmul.f32 %v3927, %v4687
      %v4700 = vmul.f32 %v3939, %v4689
      %v4701 = vmul.f32 %v3951, %v4687
      %v4702 = vmul.f32 %v3963, %v4689
      %v4703 = vmul.f32 %v3975, %v4687
      %v4704 = vmul.f32 %v3987, %v4689
      %v4705 = vmul.f32 %v3999, %v4687
      %v4706 = vmul.f32 %v4011, %v4689
      %v4707 = vmul.f32 %v4023, %v4687
      %v4708 = vmul.f32 %v4035, %v4689
      %v4709 = vmul.f32 %v4047, %v4687
      %v4710 = vmul.f32 %v4059, %v4689
      %v4711 = vmul.f32 %v4071, %v4687
      %v4712 = vmul.f32 %v4083, %v4689
      %v4713 = vmul.f32 %v4095, %v4687
      %v4714 = vmul.f32 %v4107, %v4689
      %v4715 = vmul.f32 %v4119, %v4687
      %v4716 = vmul.f32 %v4131, %v4689
      %v4717 = vmul.f32 %v4143, %v4687
      %v4718 = vmul.f32 %v4155, %v4689
      %v4719 = vmul.f32 %v4167, %v4687
      %v4720 = vmul.f32 %v4179, %v4689
      %v4721 = vmul.f32 %v4191, %v4687
      %v4722 = vmul.f32 %v4203, %v4689
      %v4723 = vmul.f32 %v4215, %v4687
      %v4724 = vmul.f32 %v4227, %v4689
      %v4725 = vmul.f32 %v4239, %v4687
      %v4726 = vmul.f32 %v4251, %v4689
      %v4727 = vmul.f32 %v4263, %v4687
      %v4728 = vmul.f32 %v4275, %v4689
      %v4729 = vmul.f32 %v4287, %v4687
      %v4730 = vmul.f32 %v4299, %v4689
      %v4731 = vmul.f32 %v4311, %v4687
      %v4732 = vmul.f32 %v4323, %v4689
      %v4733 = vmul.f32 %v4335, %v4687
      %v4734 = vmul.f32 %v4347, %v4689
      %v4735 = vmul.f32 %v4359, %v4687
      %v4736 = vmul.f32 %v4371, %v4689
      %v4737 = vmul.f32 %v4383, %v4687
      %v4738 = vmul.f32 %v4395, %v4689
      %v4739 = vmul.f32 %v4407, %v4687
      %v4740 = vmul.f32 %v4419, %v4689
      %v4741 = vmul.f32 %v4431, %v4687
      %v4742 = vmul.f32 %v4443, %v4689
      %v4743 = vmul.f32 %v4455, %v4687
      %v4744 = vmul.f32 %v4467, %v4689
      %v4745 = vmul.f32 %v4479, %v4687
      %v4746 = vmul.f32 %v4491, %v4689
      %v4747 = vmul.f32 %v4503, %v4687
      %v4748 = vmul.f32 %v4515, %v4689
      %v4749 = vmul.f32 %v4527, %v4687
      %v4750 = vmul.f32 %v4539, %v4689
      %v4751 = vmul.f32 %v4551, %v4687
      %v4752 = vmul.f32 %v4563, %v4689
      %v4753 = vmul.f32 %v4575, %v4687
      %v4754 = vmul.f32 %v4587, %v4689
      %v4755 = vmul.f32 %v4599, %v4687
      %v4756 = vmul.f32 %v4611, %v4689
      %v4757 = vmul.f32 %v4623, %v4687
      %v4758 = vmul.f32 %v4635, %v4689
      %v4759 = vmul.f32 %v4647, %v4687
      %v4760 = vmul.f32 %v4659, %v4689
      %v4761 = vmul.f32 %v4671, %v4687
      %v4762 = vmul.f32 %v4683, %v4689
      %v4763 = vld [vmem:[%s5 + $0x1] sm:$0x1]
      %4764 = vset.pattern.permute.xlu0 1
      %4765 = vperm.xlu0 %4764, %v3747
      %v4766 = vpop.permute.xlu0 %4765
      %v4769 = vunpack.c.l.s4 839922192
      %v4770 = vunpack.c.0.s8 %v4769
      %v4771 = vlaneseq
      %v4772 = vshrl.u32 %v4771, 7
      %v4773 = vsub.s32 %v4770, %v4772
      %v4774 = vrot.slane %v4766, %v4773
      %4775 = vset.pattern.permute.xlu0 1
      %4776 = vperm.xlu0 %4775, %v3748
      %v4777 = vpop.permute.xlu0 %4776
      %v4780 = vunpack.c.l.s4 839922192
      %v4781 = vunpack.c.0.s8 %v4780
      %v4782 = vlaneseq
      %v4783 = vshrl.u32 %v4782, 7
      %v4784 = vsub.s32 %v4781, %v4783
      %v4785 = vrot.slane %v4777, %v4784
      %4786 = vset.pattern.permute.xlu0 1
      %4787 = vperm.xlu0 %4786, %v3749
      %v4788 = vpop.permute.xlu0 %4787
      %v4791 = vunpack.c.l.s4 839922192
      %v4792 = vunpack.c.0.s8 %v4791
      %v4793 = vlaneseq
      %v4794 = vshrl.u32 %v4793, 7
      %v4795 = vsub.s32 %v4792, %v4794
      %v4796 = vrot.slane %v4788, %v4795
      %4797 = vset.pattern.permute.xlu0 1
      %4798 = vperm.xlu0 %4797, %v3750
      %v4799 = vpop.permute.xlu0 %4798
      %v4802 = vunpack.c.l.s4 839922192
      %v4803 = vunpack.c.0.s8 %v4802
      %v4804 = vlaneseq
      %v4805 = vshrl.u32 %v4804, 7
      %v4806 = vsub.s32 %v4803, %v4805
      %v4807 = vrot.slane %v4799, %v4806
      %4808 = vset.pattern.permute.xlu0 1
      %4809 = vperm.xlu0 %4808, %v3751
      %v4810 = vpop.permute.xlu0 %4809
      %v4813 = vunpack.c.l.s4 839922192
      %v4814 = vunpack.c.0.s8 %v4813
      %v4815 = vlaneseq
      %v4816 = vshrl.u32 %v4815, 7
      %v4817 = vsub.s32 %v4814, %v4816
      %v4818 = vrot.slane %v4810, %v4817
      %4819 = vset.pattern.permute.xlu0 1
      %4820 = vperm.xlu0 %4819, %v3752
      %v4821 = vpop.permute.xlu0 %4820
      %v4824 = vunpack.c.l.s4 839922192
      %v4825 = vunpack.c.0.s8 %v4824
      %v4826 = vlaneseq
      %v4827 = vshrl.u32 %v4826, 7
      %v4828 = vsub.s32 %v4825, %v4827
      %v4829 = vrot.slane %v4821, %v4828
      %4830 = vset.pattern.permute.xlu0 1
      %4831 = vperm.xlu0 %4830, %v3753
      %v4832 = vpop.permute.xlu0 %4831
      %v4835 = vunpack.c.l.s4 839922192
      %v4836 = vunpack.c.0.s8 %v4835
      %v4837 = vlaneseq
      %v4838 = vshrl.u32 %v4837, 7
      %v4839 = vsub.s32 %v4836, %v4838
      %v4840 = vrot.slane %v4832, %v4839
      %4841 = vset.pattern.permute.xlu0 1
      %4842 = vperm.xlu0 %4841, %v3754
      %v4843 = vpop.permute.xlu0 %4842
      %v4846 = vunpack.c.l.s4 839922192
      %v4847 = vunpack.c.0.s8 %v4846
      %v4848 = vlaneseq
      %v4849 = vshrl.u32 %v4848, 7
      %v4850 = vsub.s32 %v4847, %v4849
      %v4851 = vrot.slane %v4843, %v4850
      %4852 = vset.pattern.permute.xlu0 1
      %4853 = vperm.xlu0 %4852, %v3755
      %v4854 = vpop.permute.xlu0 %4853
      %v4857 = vunpack.c.l.s4 839922192
      %v4858 = vunpack.c.0.s8 %v4857
      %v4859 = vlaneseq
      %v4860 = vshrl.u32 %v4859, 7
      %v4861 = vsub.s32 %v4858, %v4860
      %v4862 = vrot.slane %v4854, %v4861
      %4863 = vset.pattern.permute.xlu0 1
      %4864 = vperm.xlu0 %4863, %v3756
      %v4865 = vpop.permute.xlu0 %4864
      %v4868 = vunpack.c.l.s4 839922192
      %v4869 = vunpack.c.0.s8 %v4868
      %v4870 = vlaneseq
      %v4871 = vshrl.u32 %v4870, 7
      %v4872 = vsub.s32 %v4869, %v4871
      %v4873 = vrot.slane %v4865, %v4872
      %4874 = vset.pattern.permute.xlu0 1
      %4875 = vperm.xlu0 %4874, %v3757
      %v4876 = vpop.permute.xlu0 %4875
      %v4879 = vunpack.c.l.s4 839922192
      %v4880 = vunpack.c.0.s8 %v4879
      %v4881 = vlaneseq
      %v4882 = vshrl.u32 %v4881, 7
      %v4883 = vsub.s32 %v4880, %v4882
      %v4884 = vrot.slane %v4876, %v4883
      %4885 = vset.pattern.permute.xlu0 1
      %4886 = vperm.xlu0 %4885, %v3758
      %v4887 = vpop.permute.xlu0 %4886
      %v4890 = vunpack.c.l.s4 839922192
      %v4891 = vunpack.c.0.s8 %v4890
      %v4892 = vlaneseq
      %v4893 = vshrl.u32 %v4892, 7
      %v4894 = vsub.s32 %v4891, %v4893
      %v4895 = vrot.slane %v4887, %v4894
      %4896 = vset.pattern.permute.xlu0 1
      %4897 = vperm.xlu0 %4896, %v3759
      %v4898 = vpop.permute.xlu0 %4897
      %v4901 = vunpack.c.l.s4 839922192
      %v4902 = vunpack.c.0.s8 %v4901
      %v4903 = vlaneseq
      %v4904 = vshrl.u32 %v4903, 7
      %v4905 = vsub.s32 %v4902, %v4904
      %v4906 = vrot.slane %v4898, %v4905
      %4907 = vset.pattern.permute.xlu0 1
      %4908 = vperm.xlu0 %4907, %v3760
      %v4909 = vpop.permute.xlu0 %4908
      %v4912 = vunpack.c.l.s4 839922192
      %v4913 = vunpack.c.0.s8 %v4912
      %v4914 = vlaneseq
      %v4915 = vshrl.u32 %v4914, 7
      %v4916 = vsub.s32 %v4913, %v4915
      %v4917 = vrot.slane %v4909, %v4916
      %4918 = vset.pattern.permute.xlu0 1
      %4919 = vperm.xlu0 %4918, %v3761
      %v4920 = vpop.permute.xlu0 %4919
      %v4923 = vunpack.c.l.s4 839922192
      %v4924 = vunpack.c.0.s8 %v4923
      %v4925 = vlaneseq
      %v4926 = vshrl.u32 %v4925, 7
      %v4927 = vsub.s32 %v4924, %v4926
      %v4928 = vrot.slane %v4920, %v4927
      %4929 = vset.pattern.permute.xlu0 1
      %4930 = vperm.xlu0 %4929, %v3762
      %v4931 = vpop.permute.xlu0 %4930
      %v4934 = vunpack.c.l.s4 839922192
      %v4935 = vunpack.c.0.s8 %v4934
      %v4936 = vlaneseq
      %v4937 = vshrl.u32 %v4936, 7
      %v4938 = vsub.s32 %v4935, %v4937
      %v4939 = vrot.slane %v4931, %v4938
      %4940 = vset.pattern.permute.xlu0 1
      %4941 = vperm.xlu0 %4940, %v3763
      %v4942 = vpop.permute.xlu0 %4941
      %v4945 = vunpack.c.l.s4 839922192
      %v4946 = vunpack.c.0.s8 %v4945
      %v4947 = vlaneseq
      %v4948 = vshrl.u32 %v4947, 7
      %v4949 = vsub.s32 %v4946, %v4948
      %v4950 = vrot.slane %v4942, %v4949
      %4951 = vset.pattern.permute.xlu0 1
      %4952 = vperm.xlu0 %4951, %v3764
      %v4953 = vpop.permute.xlu0 %4952
      %v4956 = vunpack.c.l.s4 839922192
      %v4957 = vunpack.c.0.s8 %v4956
      %v4958 = vlaneseq
      %v4959 = vshrl.u32 %v4958, 7
      %v4960 = vsub.s32 %v4957, %v4959
      %v4961 = vrot.slane %v4953, %v4960
      %4962 = vset.pattern.permute.xlu0 1
      %4963 = vperm.xlu0 %4962, %v3765
      %v4964 = vpop.permute.xlu0 %4963
      %v4967 = vunpack.c.l.s4 839922192
      %v4968 = vunpack.c.0.s8 %v4967
      %v4969 = vlaneseq
      %v4970 = vshrl.u32 %v4969, 7
      %v4971 = vsub.s32 %v4968, %v4970
      %v4972 = vrot.slane %v4964, %v4971
      %4973 = vset.pattern.permute.xlu0 1
      %4974 = vperm.xlu0 %4973, %v3766
      %v4975 = vpop.permute.xlu0 %4974
      %v4978 = vunpack.c.l.s4 839922192
      %v4979 = vunpack.c.0.s8 %v4978
      %v4980 = vlaneseq
      %v4981 = vshrl.u32 %v4980, 7
      %v4982 = vsub.s32 %v4979, %v4981
      %v4983 = vrot.slane %v4975, %v4982
      %4984 = vset.pattern.permute.xlu0 1
      %4985 = vperm.xlu0 %4984, %v3767
      %v4986 = vpop.permute.xlu0 %4985
      %v4989 = vunpack.c.l.s4 839922192
      %v4990 = vunpack.c.0.s8 %v4989
      %v4991 = vlaneseq
      %v4992 = vshrl.u32 %v4991, 7
      %v4993 = vsub.s32 %v4990, %v4992
      %v4994 = vrot.slane %v4986, %v4993
      %4995 = vset.pattern.permute.xlu0 1
      %4996 = vperm.xlu0 %4995, %v3768
      %v4997 = vpop.permute.xlu0 %4996
      %v5000 = vunpack.c.l.s4 839922192
      %v5001 = vunpack.c.0.s8 %v5000
      %v5002 = vlaneseq
      %v5003 = vshrl.u32 %v5002, 7
      %v5004 = vsub.s32 %v5001, %v5003
      %v5005 = vrot.slane %v4997, %v5004
      %5006 = vset.pattern.permute.xlu0 1
      %5007 = vperm.xlu0 %5006, %v3769
      %v5008 = vpop.permute.xlu0 %5007
      %v5011 = vunpack.c.l.s4 839922192
      %v5012 = vunpack.c.0.s8 %v5011
      %v5013 = vlaneseq
      %v5014 = vshrl.u32 %v5013, 7
      %v5015 = vsub.s32 %v5012, %v5014
      %v5016 = vrot.slane %v5008, %v5015
      %5017 = vset.pattern.permute.xlu0 1
      %5018 = vperm.xlu0 %5017, %v3770
      %v5019 = vpop.permute.xlu0 %5018
      %v5022 = vunpack.c.l.s4 839922192
      %v5023 = vunpack.c.0.s8 %v5022
      %v5024 = vlaneseq
      %v5025 = vshrl.u32 %v5024, 7
      %v5026 = vsub.s32 %v5023, %v5025
      %v5027 = vrot.slane %v5019, %v5026
      %5028 = vset.pattern.permute.xlu0 1
      %5029 = vperm.xlu0 %5028, %v3771
      %v5030 = vpop.permute.xlu0 %5029
      %v5033 = vunpack.c.l.s4 839922192
      %v5034 = vunpack.c.0.s8 %v5033
      %v5035 = vlaneseq
      %v5036 = vshrl.u32 %v5035, 7
      %v5037 = vsub.s32 %v5034, %v5036
      %v5038 = vrot.slane %v5030, %v5037
      %5039 = vset.pattern.permute.xlu0 1
      %5040 = vperm.xlu0 %5039, %v3772
      %v5041 = vpop.permute.xlu0 %5040
      %v5044 = vunpack.c.l.s4 839922192
      %v5045 = vunpack.c.0.s8 %v5044
      %v5046 = vlaneseq
      %v5047 = vshrl.u32 %v5046, 7
      %v5048 = vsub.s32 %v5045, %v5047
      %v5049 = vrot.slane %v5041, %v5048
      %5050 = vset.pattern.permute.xlu0 1
      %5051 = vperm.xlu0 %5050, %v3773
      %v5052 = vpop.permute.xlu0 %5051
      %v5055 = vunpack.c.l.s4 839922192
      %v5056 = vunpack.c.0.s8 %v5055
      %v5057 = vlaneseq
      %v5058 = vshrl.u32 %v5057, 7
      %v5059 = vsub.s32 %v5056, %v5058
      %v5060 = vrot.slane %v5052, %v5059
      %5061 = vset.pattern.permute.xlu0 1
      %5062 = vperm.xlu0 %5061, %v3774
      %v5063 = vpop.permute.xlu0 %5062
      %v5066 = vunpack.c.l.s4 839922192
      %v5067 = vunpack.c.0.s8 %v5066
      %v5068 = vlaneseq
      %v5069 = vshrl.u32 %v5068, 7
      %v5070 = vsub.s32 %v5067, %v5069
      %v5071 = vrot.slane %v5063, %v5070
      %5072 = vset.pattern.permute.xlu0 1
      %5073 = vperm.xlu0 %5072, %v3775
      %v5074 = vpop.permute.xlu0 %5073
      %v5077 = vunpack.c.l.s4 839922192
      %v5078 = vunpack.c.0.s8 %v5077
      %v5079 = vlaneseq
      %v5080 = vshrl.u32 %v5079, 7
      %v5081 = vsub.s32 %v5078, %v5080
      %v5082 = vrot.slane %v5074, %v5081
      %5083 = vset.pattern.permute.xlu0 1
      %5084 = vperm.xlu0 %5083, %v3776
      %v5085 = vpop.permute.xlu0 %5084
      %v5088 = vunpack.c.l.s4 839922192
      %v5089 = vunpack.c.0.s8 %v5088
      %v5090 = vlaneseq
      %v5091 = vshrl.u32 %v5090, 7
      %v5092 = vsub.s32 %v5089, %v5091
      %v5093 = vrot.slane %v5085, %v5092
      %5094 = vset.pattern.permute.xlu0 1
      %5095 = vperm.xlu0 %5094, %v3777
      %v5096 = vpop.permute.xlu0 %5095
      %v5099 = vunpack.c.l.s4 839922192
      %v5100 = vunpack.c.0.s8 %v5099
      %v5101 = vlaneseq
      %v5102 = vshrl.u32 %v5101, 7
      %v5103 = vsub.s32 %v5100, %v5102
      %v5104 = vrot.slane %v5096, %v5103
      %5105 = vset.pattern.permute.xlu0 1
      %5106 = vperm.xlu0 %5105, %v3778
      %v5107 = vpop.permute.xlu0 %5106
      %v5110 = vunpack.c.l.s4 839922192
      %v5111 = vunpack.c.0.s8 %v5110
      %v5112 = vlaneseq
      %v5113 = vshrl.u32 %v5112, 7
      %v5114 = vsub.s32 %v5111, %v5113
      %v5115 = vrot.slane %v5107, %v5114
      %5116 = vset.pattern.permute.xlu0 1
      %5117 = vperm.xlu0 %5116, %v3779
      %v5118 = vpop.permute.xlu0 %5117
      %v5121 = vunpack.c.l.s4 839922192
      %v5122 = vunpack.c.0.s8 %v5121
      %v5123 = vlaneseq
      %v5124 = vshrl.u32 %v5123, 7
      %v5125 = vsub.s32 %v5122, %v5124
      %v5126 = vrot.slane %v5118, %v5125
      %5127 = vset.pattern.permute.xlu0 1
      %5128 = vperm.xlu0 %5127, %v3780
      %v5129 = vpop.permute.xlu0 %5128
      %v5132 = vunpack.c.l.s4 839922192
      %v5133 = vunpack.c.0.s8 %v5132
      %v5134 = vlaneseq
      %v5135 = vshrl.u32 %v5134, 7
      %v5136 = vsub.s32 %v5133, %v5135
      %v5137 = vrot.slane %v5129, %v5136
      %5138 = vset.pattern.permute.xlu0 1
      %5139 = vperm.xlu0 %5138, %v3781
      %v5140 = vpop.permute.xlu0 %5139
      %v5143 = vunpack.c.l.s4 839922192
      %v5144 = vunpack.c.0.s8 %v5143
      %v5145 = vlaneseq
      %v5146 = vshrl.u32 %v5145, 7
      %v5147 = vsub.s32 %v5144, %v5146
      %v5148 = vrot.slane %v5140, %v5147
      %5149 = vset.pattern.permute.xlu0 1
      %5150 = vperm.xlu0 %5149, %v3782
      %v5151 = vpop.permute.xlu0 %5150
      %v5154 = vunpack.c.l.s4 839922192
      %v5155 = vunpack.c.0.s8 %v5154
      %v5156 = vlaneseq
      %v5157 = vshrl.u32 %v5156, 7
      %v5158 = vsub.s32 %v5155, %v5157
      %v5159 = vrot.slane %v5151, %v5158
      %5160 = vset.pattern.permute.xlu0 1
      %5161 = vperm.xlu0 %5160, %v3783
      %v5162 = vpop.permute.xlu0 %5161
      %v5165 = vunpack.c.l.s4 839922192
      %v5166 = vunpack.c.0.s8 %v5165
      %v5167 = vlaneseq
      %v5168 = vshrl.u32 %v5167, 7
      %v5169 = vsub.s32 %v5166, %v5168
      %v5170 = vrot.slane %v5162, %v5169
      %5171 = vset.pattern.permute.xlu0 1
      %5172 = vperm.xlu0 %5171, %v3784
      %v5173 = vpop.permute.xlu0 %5172
      %v5176 = vunpack.c.l.s4 839922192
      %v5177 = vunpack.c.0.s8 %v5176
      %v5178 = vlaneseq
      %v5179 = vshrl.u32 %v5178, 7
      %v5180 = vsub.s32 %v5177, %v5179
      %v5181 = vrot.slane %v5173, %v5180
      %5182 = vset.pattern.permute.xlu0 1
      %5183 = vperm.xlu0 %5182, %v3785
      %v5184 = vpop.permute.xlu0 %5183
      %v5187 = vunpack.c.l.s4 839922192
      %v5188 = vunpack.c.0.s8 %v5187
      %v5189 = vlaneseq
      %v5190 = vshrl.u32 %v5189, 7
      %v5191 = vsub.s32 %v5188, %v5190
      %v5192 = vrot.slane %v5184, %v5191
      %5193 = vset.pattern.permute.xlu0 1
      %5194 = vperm.xlu0 %5193, %v3786
      %v5195 = vpop.permute.xlu0 %5194
      %v5198 = vunpack.c.l.s4 839922192
      %v5199 = vunpack.c.0.s8 %v5198
      %v5200 = vlaneseq
      %v5201 = vshrl.u32 %v5200, 7
      %v5202 = vsub.s32 %v5199, %v5201
      %v5203 = vrot.slane %v5195, %v5202
      %5204 = vset.pattern.permute.xlu0 1
      %5205 = vperm.xlu0 %5204, %v3787
      %v5206 = vpop.permute.xlu0 %5205
      %v5209 = vunpack.c.l.s4 839922192
      %v5210 = vunpack.c.0.s8 %v5209
      %v5211 = vlaneseq
      %v5212 = vshrl.u32 %v5211, 7
      %v5213 = vsub.s32 %v5210, %v5212
      %v5214 = vrot.slane %v5206, %v5213
      %5215 = vset.pattern.permute.xlu0 1
      %5216 = vperm.xlu0 %5215, %v3788
      %v5217 = vpop.permute.xlu0 %5216
      %v5220 = vunpack.c.l.s4 839922192
      %v5221 = vunpack.c.0.s8 %v5220
      %v5222 = vlaneseq
      %v5223 = vshrl.u32 %v5222, 7
      %v5224 = vsub.s32 %v5221, %v5223
      %v5225 = vrot.slane %v5217, %v5224
      %5226 = vset.pattern.permute.xlu0 1
      %5227 = vperm.xlu0 %5226, %v3789
      %v5228 = vpop.permute.xlu0 %5227
      %v5231 = vunpack.c.l.s4 839922192
      %v5232 = vunpack.c.0.s8 %v5231
      %v5233 = vlaneseq
      %v5234 = vshrl.u32 %v5233, 7
      %v5235 = vsub.s32 %v5232, %v5234
      %v5236 = vrot.slane %v5228, %v5235
      %5237 = vset.pattern.permute.xlu0 1
      %5238 = vperm.xlu0 %5237, %v3790
      %v5239 = vpop.permute.xlu0 %5238
      %v5242 = vunpack.c.l.s4 839922192
      %v5243 = vunpack.c.0.s8 %v5242
      %v5244 = vlaneseq
      %v5245 = vshrl.u32 %v5244, 7
      %v5246 = vsub.s32 %v5243, %v5245
      %v5247 = vrot.slane %v5239, %v5246
      %5248 = vset.pattern.permute.xlu0 1
      %5249 = vperm.xlu0 %5248, %v3791
      %v5250 = vpop.permute.xlu0 %5249
      %v5253 = vunpack.c.l.s4 839922192
      %v5254 = vunpack.c.0.s8 %v5253
      %v5255 = vlaneseq
      %v5256 = vshrl.u32 %v5255, 7
      %v5257 = vsub.s32 %v5254, %v5256
      %v5258 = vrot.slane %v5250, %v5257
      %5259 = vset.pattern.permute.xlu0 1
      %5260 = vperm.xlu0 %5259, %v3792
      %v5261 = vpop.permute.xlu0 %5260
      %v5264 = vunpack.c.l.s4 839922192
      %v5265 = vunpack.c.0.s8 %v5264
      %v5266 = vlaneseq
      %v5267 = vshrl.u32 %v5266, 7
      %v5268 = vsub.s32 %v5265, %v5267
      %v5269 = vrot.slane %v5261, %v5268
      %5270 = vset.pattern.permute.xlu0 1
      %5271 = vperm.xlu0 %5270, %v3793
      %v5272 = vpop.permute.xlu0 %5271
      %v5275 = vunpack.c.l.s4 839922192
      %v5276 = vunpack.c.0.s8 %v5275
      %v5277 = vlaneseq
      %v5278 = vshrl.u32 %v5277, 7
      %v5279 = vsub.s32 %v5276, %v5278
      %v5280 = vrot.slane %v5272, %v5279
      %5281 = vset.pattern.permute.xlu0 1
      %5282 = vperm.xlu0 %5281, %v3794
      %v5283 = vpop.permute.xlu0 %5282
      %v5286 = vunpack.c.l.s4 839922192
      %v5287 = vunpack.c.0.s8 %v5286
      %v5288 = vlaneseq
      %v5289 = vshrl.u32 %v5288, 7
      %v5290 = vsub.s32 %v5287, %v5289
      %v5291 = vrot.slane %v5283, %v5290
      %5292 = vset.pattern.permute.xlu0 1
      %5293 = vperm.xlu0 %5292, %v3795
      %v5294 = vpop.permute.xlu0 %5293
      %v5297 = vunpack.c.l.s4 839922192
      %v5298 = vunpack.c.0.s8 %v5297
      %v5299 = vlaneseq
      %v5300 = vshrl.u32 %v5299, 7
      %v5301 = vsub.s32 %v5298, %v5300
      %v5302 = vrot.slane %v5294, %v5301
      %5303 = vset.pattern.permute.xlu0 1
      %5304 = vperm.xlu0 %5303, %v3796
      %v5305 = vpop.permute.xlu0 %5304
      %v5308 = vunpack.c.l.s4 839922192
      %v5309 = vunpack.c.0.s8 %v5308
      %v5310 = vlaneseq
      %v5311 = vshrl.u32 %v5310, 7
      %v5312 = vsub.s32 %v5309, %v5311
      %v5313 = vrot.slane %v5305, %v5312
      %5314 = vset.pattern.permute.xlu0 1
      %5315 = vperm.xlu0 %5314, %v3797
      %v5316 = vpop.permute.xlu0 %5315
      %v5319 = vunpack.c.l.s4 839922192
      %v5320 = vunpack.c.0.s8 %v5319
      %v5321 = vlaneseq
      %v5322 = vshrl.u32 %v5321, 7
      %v5323 = vsub.s32 %v5320, %v5322
      %v5324 = vrot.slane %v5316, %v5323
      %5325 = vset.pattern.permute.xlu0 1
      %5326 = vperm.xlu0 %5325, %v3798
      %v5327 = vpop.permute.xlu0 %5326
      %v5330 = vunpack.c.l.s4 839922192
      %v5331 = vunpack.c.0.s8 %v5330
      %v5332 = vlaneseq
      %v5333 = vshrl.u32 %v5332, 7
      %v5334 = vsub.s32 %v5331, %v5333
      %v5335 = vrot.slane %v5327, %v5334
      %5336 = vset.pattern.permute.xlu0 1
      %5337 = vperm.xlu0 %5336, %v3799
      %v5338 = vpop.permute.xlu0 %5337
      %v5341 = vunpack.c.l.s4 839922192
      %v5342 = vunpack.c.0.s8 %v5341
      %v5343 = vlaneseq
      %v5344 = vshrl.u32 %v5343, 7
      %v5345 = vsub.s32 %v5342, %v5344
      %v5346 = vrot.slane %v5338, %v5345
      %5347 = vset.pattern.permute.xlu0 1
      %5348 = vperm.xlu0 %5347, %v3800
      %v5349 = vpop.permute.xlu0 %5348
      %v5352 = vunpack.c.l.s4 839922192
      %v5353 = vunpack.c.0.s8 %v5352
      %v5354 = vlaneseq
      %v5355 = vshrl.u32 %v5354, 7
      %v5356 = vsub.s32 %v5353, %v5355
      %v5357 = vrot.slane %v5349, %v5356
      %5358 = vset.pattern.permute.xlu0 1
      %5359 = vperm.xlu0 %5358, %v3801
      %v5360 = vpop.permute.xlu0 %5359
      %v5363 = vunpack.c.l.s4 839922192
      %v5364 = vunpack.c.0.s8 %v5363
      %v5365 = vlaneseq
      %v5366 = vshrl.u32 %v5365, 7
      %v5367 = vsub.s32 %v5364, %v5366
      %v5368 = vrot.slane %v5360, %v5367
      %5369 = vset.pattern.permute.xlu0 1
      %5370 = vperm.xlu0 %5369, %v3802
      %v5371 = vpop.permute.xlu0 %5370
      %v5374 = vunpack.c.l.s4 839922192
      %v5375 = vunpack.c.0.s8 %v5374
      %v5376 = vlaneseq
      %v5377 = vshrl.u32 %v5376, 7
      %v5378 = vsub.s32 %v5375, %v5377
      %v5379 = vrot.slane %v5371, %v5378
      %5380 = vset.pattern.permute.xlu0 1
      %5381 = vperm.xlu0 %5380, %v3803
      %v5382 = vpop.permute.xlu0 %5381
      %v5385 = vunpack.c.l.s4 839922192
      %v5386 = vunpack.c.0.s8 %v5385
      %v5387 = vlaneseq
      %v5388 = vshrl.u32 %v5387, 7
      %v5389 = vsub.s32 %v5386, %v5388
      %v5390 = vrot.slane %v5382, %v5389
      %5391 = vset.pattern.permute.xlu0 1
      %5392 = vperm.xlu0 %5391, %v3804
      %v5393 = vpop.permute.xlu0 %5392
      %v5396 = vunpack.c.l.s4 839922192
      %v5397 = vunpack.c.0.s8 %v5396
      %v5398 = vlaneseq
      %v5399 = vshrl.u32 %v5398, 7
      %v5400 = vsub.s32 %v5397, %v5399
      %v5401 = vrot.slane %v5393, %v5400
      %5402 = vset.pattern.permute.xlu0 1
      %5403 = vperm.xlu0 %5402, %v3805
      %v5404 = vpop.permute.xlu0 %5403
      %v5407 = vunpack.c.l.s4 839922192
      %v5408 = vunpack.c.0.s8 %v5407
      %v5409 = vlaneseq
      %v5410 = vshrl.u32 %v5409, 7
      %v5411 = vsub.s32 %v5408, %v5410
      %v5412 = vrot.slane %v5404, %v5411
      %5413 = vset.pattern.permute.xlu0 1
      %5414 = vperm.xlu0 %5413, %v3806
      %v5415 = vpop.permute.xlu0 %5414
      %v5418 = vunpack.c.l.s4 839922192
      %v5419 = vunpack.c.0.s8 %v5418
      %v5420 = vlaneseq
      %v5421 = vshrl.u32 %v5420, 7
      %v5422 = vsub.s32 %v5419, %v5421
      %v5423 = vrot.slane %v5415, %v5422
      %5424 = vset.pattern.permute.xlu0 1
      %5425 = vperm.xlu0 %5424, %v3807
      %v5426 = vpop.permute.xlu0 %5425
      %v5429 = vunpack.c.l.s4 839922192
      %v5430 = vunpack.c.0.s8 %v5429
      %v5431 = vlaneseq
      %v5432 = vshrl.u32 %v5431, 7
      %v5433 = vsub.s32 %v5430, %v5432
      %v5434 = vrot.slane %v5426, %v5433
      %5435 = vset.pattern.permute.xlu0 1
      %5436 = vperm.xlu0 %5435, %v3808
      %v5437 = vpop.permute.xlu0 %5436
      %v5440 = vunpack.c.l.s4 839922192
      %v5441 = vunpack.c.0.s8 %v5440
      %v5442 = vlaneseq
      %v5443 = vshrl.u32 %v5442, 7
      %v5444 = vsub.s32 %v5441, %v5443
      %v5445 = vrot.slane %v5437, %v5444
      %5446 = vset.pattern.permute.xlu0 1
      %5447 = vperm.xlu0 %5446, %v3809
      %v5448 = vpop.permute.xlu0 %5447
      %v5451 = vunpack.c.l.s4 839922192
      %v5452 = vunpack.c.0.s8 %v5451
      %v5453 = vlaneseq
      %v5454 = vshrl.u32 %v5453, 7
      %v5455 = vsub.s32 %v5452, %v5454
      %v5456 = vrot.slane %v5448, %v5455
      %5457 = vset.pattern.permute.xlu0 1
      %5458 = vperm.xlu0 %5457, %v3810
      %v5459 = vpop.permute.xlu0 %5458
      %v5462 = vunpack.c.l.s4 839922192
      %v5463 = vunpack.c.0.s8 %v5462
      %v5464 = vlaneseq
      %v5465 = vshrl.u32 %v5464, 7
      %v5466 = vsub.s32 %v5463, %v5465
      %v5467 = vrot.slane %v5459, %v5466
      %5468 = vset.pattern.permute.xlu0 1
      %5469 = vperm.xlu0 %5468, %v3811
      %v5470 = vpop.permute.xlu0 %5469
      %v5473 = vunpack.c.l.s4 839922192
      %v5474 = vunpack.c.0.s8 %v5473
      %v5475 = vlaneseq
      %v5476 = vshrl.u32 %v5475, 7
      %v5477 = vsub.s32 %v5474, %v5476
      %v5478 = vrot.slane %v5470, %v5477
      %5479 = vset.pattern.permute.xlu0 1
      %5480 = vperm.xlu0 %5479, %v3812
      %v5481 = vpop.permute.xlu0 %5480
      %v5484 = vunpack.c.l.s4 839922192
      %v5485 = vunpack.c.0.s8 %v5484
      %v5486 = vlaneseq
      %v5487 = vshrl.u32 %v5486, 7
      %v5488 = vsub.s32 %v5485, %v5487
      %v5489 = vrot.slane %v5481, %v5488
      %5490 = vset.pattern.permute.xlu0 1
      %5491 = vperm.xlu0 %5490, %v3813
      %v5492 = vpop.permute.xlu0 %5491
      %v5495 = vunpack.c.l.s4 839922192
      %v5496 = vunpack.c.0.s8 %v5495
      %v5497 = vlaneseq
      %v5498 = vshrl.u32 %v5497, 7
      %v5499 = vsub.s32 %v5496, %v5498
      %v5500 = vrot.slane %v5492, %v5499
      %5501 = vset.pattern.permute.xlu0 1
      %5502 = vperm.xlu0 %5501, %v3814
      %v5503 = vpop.permute.xlu0 %5502
      %v5506 = vunpack.c.l.s4 839922192
      %v5507 = vunpack.c.0.s8 %v5506
      %v5508 = vlaneseq
      %v5509 = vshrl.u32 %v5508, 7
      %v5510 = vsub.s32 %v5507, %v5509
      %v5511 = vrot.slane %v5503, %v5510
      %5512 = vset.pattern.permute.xlu0 1
      %5513 = vperm.xlu0 %5512, %v3815
      %v5514 = vpop.permute.xlu0 %5513
      %v5517 = vunpack.c.l.s4 839922192
      %v5518 = vunpack.c.0.s8 %v5517
      %v5519 = vlaneseq
      %v5520 = vshrl.u32 %v5519, 7
      %v5521 = vsub.s32 %v5518, %v5520
      %v5522 = vrot.slane %v5514, %v5521
      %5523 = vset.pattern.permute.xlu0 1
      %5524 = vperm.xlu0 %5523, %v3816
      %v5525 = vpop.permute.xlu0 %5524
      %v5528 = vunpack.c.l.s4 839922192
      %v5529 = vunpack.c.0.s8 %v5528
      %v5530 = vlaneseq
      %v5531 = vshrl.u32 %v5530, 7
      %v5532 = vsub.s32 %v5529, %v5531
      %v5533 = vrot.slane %v5525, %v5532
      %5534 = vset.pattern.permute.xlu0 1
      %5535 = vperm.xlu0 %5534, %v3817
      %v5536 = vpop.permute.xlu0 %5535
      %v5539 = vunpack.c.l.s4 839922192
      %v5540 = vunpack.c.0.s8 %v5539
      %v5541 = vlaneseq
      %v5542 = vshrl.u32 %v5541, 7
      %v5543 = vsub.s32 %v5540, %v5542
      %v5544 = vrot.slane %v5536, %v5543
      %5545 = vset.pattern.permute.xlu0 1
      %5546 = vperm.xlu0 %5545, %v3818
      %v5547 = vpop.permute.xlu0 %5546
      %v5550 = vunpack.c.l.s4 839922192
      %v5551 = vunpack.c.0.s8 %v5550
      %v5552 = vlaneseq
      %v5553 = vshrl.u32 %v5552, 7
      %v5554 = vsub.s32 %v5551, %v5553
      %v5555 = vrot.slane %v5547, %v5554
      %v5556 = vlaneseq
      %v5557 = vshrl.u32 %v5556, 7
      %v5558 = vsub.s32 0, %v5557
      %v5559 = vrot.slane %v4763, %v5558
      %v5561 = vcombine.high %v5559, %v5559
      %v5563 = vmul.f32 %v4774, %v5559
      %v5564 = vmul.f32 %v4785, %v5561
      %v5565 = vmul.f32 %v4796, %v5559
      %v5566 = vmul.f32 %v4807, %v5561
      %v5567 = vmul.f32 %v4818, %v5559
      %v5568 = vmul.f32 %v4829, %v5561
      %v5569 = vmul.f32 %v4840, %v5559
      %v5570 = vmul.f32 %v4851, %v5561
      %v5571 = vmul.f32 %v4862, %v5559
      %v5572 = vmul.f32 %v4873, %v5561
      %v5573 = vmul.f32 %v4884, %v5559
      %v5574 = vmul.f32 %v4895, %v5561
      %v5575 = vmul.f32 %v4906, %v5559
      %v5576 = vmul.f32 %v4917, %v5561
      %v5577 = vmul.f32 %v4928, %v5559
      %v5578 = vmul.f32 %v4939, %v5561
      %v5579 = vmul.f32 %v4950, %v5559
      %v5580 = vmul.f32 %v4961, %v5561
      %v5581 = vmul.f32 %v4972, %v5559
      %v5582 = vmul.f32 %v4983, %v5561
      %v5583 = vmul.f32 %v4994, %v5559
      %v5584 = vmul.f32 %v5005, %v5561
      %v5585 = vmul.f32 %v5016, %v5559
      %v5586 = vmul.f32 %v5027, %v5561
      %v5587 = vmul.f32 %v5038, %v5559
      %v5588 = vmul.f32 %v5049, %v5561
      %v5589 = vmul.f32 %v5060, %v5559
      %v5590 = vmul.f32 %v5071, %v5561
      %v5591 = vmul.f32 %v5082, %v5559
      %v5592 = vmul.f32 %v5093, %v5561
      %v5593 = vmul.f32 %v5104, %v5559
      %v5594 = vmul.f32 %v5115, %v5561
      %v5595 = vmul.f32 %v5126, %v5559
      %v5596 = vmul.f32 %v5137, %v5561
      %v5597 = vmul.f32 %v5148, %v5559
      %v5598 = vmul.f32 %v5159, %v5561
      %v5599 = vmul.f32 %v5170, %v5559
      %v5600 = vmul.f32 %v5181, %v5561
      %v5601 = vmul.f32 %v5192, %v5559
      %v5602 = vmul.f32 %v5203, %v5561
      %v5603 = vmul.f32 %v5214, %v5559
      %v5604 = vmul.f32 %v5225, %v5561
      %v5605 = vmul.f32 %v5236, %v5559
      %v5606 = vmul.f32 %v5247, %v5561
      %v5607 = vmul.f32 %v5258, %v5559
      %v5608 = vmul.f32 %v5269, %v5561
      %v5609 = vmul.f32 %v5280, %v5559
      %v5610 = vmul.f32 %v5291, %v5561
      %v5611 = vmul.f32 %v5302, %v5559
      %v5612 = vmul.f32 %v5313, %v5561
      %v5613 = vmul.f32 %v5324, %v5559
      %v5614 = vmul.f32 %v5335, %v5561
      %v5615 = vmul.f32 %v5346, %v5559
      %v5616 = vmul.f32 %v5357, %v5561
      %v5617 = vmul.f32 %v5368, %v5559
      %v5618 = vmul.f32 %v5379, %v5561
      %v5619 = vmul.f32 %v5390, %v5559
      %v5620 = vmul.f32 %v5401, %v5561
      %v5621 = vmul.f32 %v5412, %v5559
      %v5622 = vmul.f32 %v5423, %v5561
      %v5623 = vmul.f32 %v5434, %v5559
      %v5624 = vmul.f32 %v5445, %v5561
      %v5625 = vmul.f32 %v5456, %v5559
      %v5626 = vmul.f32 %v5467, %v5561
      %v5627 = vmul.f32 %v5478, %v5559
      %v5628 = vmul.f32 %v5489, %v5561
      %v5629 = vmul.f32 %v5500, %v5559
      %v5630 = vmul.f32 %v5511, %v5561
      %v5631 = vmul.f32 %v5522, %v5559
      %v5632 = vmul.f32 %v5533, %v5561
      %v5633 = vmul.f32 %v5544, %v5559
      %v5634 = vmul.f32 %v5555, %v5561
      %v5635 = vadd.f32 %v4691, %v5563
      %v5636 = vadd.f32 %v4692, %v5564
      %v5637 = vadd.f32 %v4693, %v5565
      %v5638 = vadd.f32 %v4694, %v5566
      %v5639 = vadd.f32 %v4695, %v5567
      %v5640 = vadd.f32 %v4696, %v5568
      %v5641 = vadd.f32 %v4697, %v5569
      %v5642 = vadd.f32 %v4698, %v5570
      %v5643 = vadd.f32 %v4699, %v5571
      %v5644 = vadd.f32 %v4700, %v5572
      %v5645 = vadd.f32 %v4701, %v5573
      %v5646 = vadd.f32 %v4702, %v5574
      %v5647 = vadd.f32 %v4703, %v5575
      %v5648 = vadd.f32 %v4704, %v5576
      %v5649 = vadd.f32 %v4705, %v5577
      %v5650 = vadd.f32 %v4706, %v5578
      %v5651 = vadd.f32 %v4707, %v5579
      %v5652 = vadd.f32 %v4708, %v5580
      %v5653 = vadd.f32 %v4709, %v5581
      %v5654 = vadd.f32 %v4710, %v5582
      %v5655 = vadd.f32 %v4711, %v5583
      %v5656 = vadd.f32 %v4712, %v5584
      %v5657 = vadd.f32 %v4713, %v5585
      %v5658 = vadd.f32 %v4714, %v5586
      %v5659 = vadd.f32 %v4715, %v5587
      %v5660 = vadd.f32 %v4716, %v5588
      %v5661 = vadd.f32 %v4717, %v5589
      %v5662 = vadd.f32 %v4718, %v5590
      %v5663 = vadd.f32 %v4719, %v5591
      %v5664 = vadd.f32 %v4720, %v5592
      %v5665 = vadd.f32 %v4721, %v5593
      %v5666 = vadd.f32 %v4722, %v5594
      %v5667 = vadd.f32 %v4723, %v5595
      %v5668 = vadd.f32 %v4724, %v5596
      %v5669 = vadd.f32 %v4725, %v5597
      %v5670 = vadd.f32 %v4726, %v5598
      %v5671 = vadd.f32 %v4727, %v5599
      %v5672 = vadd.f32 %v4728, %v5600
      %v5673 = vadd.f32 %v4729, %v5601
      %v5674 = vadd.f32 %v4730, %v5602
      %v5675 = vadd.f32 %v4731, %v5603
      %v5676 = vadd.f32 %v4732, %v5604
      %v5677 = vadd.f32 %v4733, %v5605
      %v5678 = vadd.f32 %v4734, %v5606
      %v5679 = vadd.f32 %v4735, %v5607
      %v5680 = vadd.f32 %v4736, %v5608
      %v5681 = vadd.f32 %v4737, %v5609
      %v5682 = vadd.f32 %v4738, %v5610
      %v5683 = vadd.f32 %v4739, %v5611
      %v5684 = vadd.f32 %v4740, %v5612
      %v5685 = vadd.f32 %v4741, %v5613
      %v5686 = vadd.f32 %v4742, %v5614
      %v5687 = vadd.f32 %v4743, %v5615
      %v5688 = vadd.f32 %v4744, %v5616
      %v5689 = vadd.f32 %v4745, %v5617
      %v5690 = vadd.f32 %v4746, %v5618
      %v5691 = vadd.f32 %v4747, %v5619
      %v5692 = vadd.f32 %v4748, %v5620
      %v5693 = vadd.f32 %v4749, %v5621
      %v5694 = vadd.f32 %v4750, %v5622
      %v5695 = vadd.f32 %v4751, %v5623
      %v5696 = vadd.f32 %v4752, %v5624
      %v5697 = vadd.f32 %v4753, %v5625
      %v5698 = vadd.f32 %v4754, %v5626
      %v5699 = vadd.f32 %v4755, %v5627
      %v5700 = vadd.f32 %v4756, %v5628
      %v5701 = vadd.f32 %v4757, %v5629
      %v5702 = vadd.f32 %v4758, %v5630
      %v5703 = vadd.f32 %v4759, %v5631
      %v5704 = vadd.f32 %v4760, %v5632
      %v5705 = vadd.f32 %v4761, %v5633
      %v5706 = vadd.f32 %v4762, %v5634
      %v5707 = vld [vmem:[%s6] sm:$0x1]
      %v5709 = vlaneseq
      %v5710 = vshrl.u32 %v5709, 7
      %v5711 = vsub.s32 0, %v5710
      %v5712 = vrot.slane %v5707, %v5711
      %v5714 = vcombine.high %v5712, %v5712
      %v5716 = vadd.f32 %v5635, %v5712
      %v5717 = vadd.f32 %v5636, %v5714
      %v5718 = vadd.f32 %v5637, %v5712
      %v5719 = vadd.f32 %v5638, %v5714
      %v5720 = vadd.f32 %v5639, %v5712
      %v5721 = vadd.f32 %v5640, %v5714
      %v5722 = vadd.f32 %v5641, %v5712
      %v5723 = vadd.f32 %v5642, %v5714
      %v5724 = vadd.f32 %v5643, %v5712
      %v5725 = vadd.f32 %v5644, %v5714
      %v5726 = vadd.f32 %v5645, %v5712
      %v5727 = vadd.f32 %v5646, %v5714
      %v5728 = vadd.f32 %v5647, %v5712
      %v5729 = vadd.f32 %v5648, %v5714
      %v5730 = vadd.f32 %v5649, %v5712
      %v5731 = vadd.f32 %v5650, %v5714
      %v5732 = vadd.f32 %v5651, %v5712
      %v5733 = vadd.f32 %v5652, %v5714
      %v5734 = vadd.f32 %v5653, %v5712
      %v5735 = vadd.f32 %v5654, %v5714
      %v5736 = vadd.f32 %v5655, %v5712
      %v5737 = vadd.f32 %v5656, %v5714
      %v5738 = vadd.f32 %v5657, %v5712
      %v5739 = vadd.f32 %v5658, %v5714
      %v5740 = vadd.f32 %v5659, %v5712
      %v5741 = vadd.f32 %v5660, %v5714
      %v5742 = vadd.f32 %v5661, %v5712
      %v5743 = vadd.f32 %v5662, %v5714
      %v5744 = vadd.f32 %v5663, %v5712
      %v5745 = vadd.f32 %v5664, %v5714
      %v5746 = vadd.f32 %v5665, %v5712
      %v5747 = vadd.f32 %v5666, %v5714
      %v5748 = vadd.f32 %v5667, %v5712
      %v5749 = vadd.f32 %v5668, %v5714
      %v5750 = vadd.f32 %v5669, %v5712
      %v5751 = vadd.f32 %v5670, %v5714
      %v5752 = vadd.f32 %v5671, %v5712
      %v5753 = vadd.f32 %v5672, %v5714
      %v5754 = vadd.f32 %v5673, %v5712
      %v5755 = vadd.f32 %v5674, %v5714
      %v5756 = vadd.f32 %v5675, %v5712
      %v5757 = vadd.f32 %v5676, %v5714
      %v5758 = vadd.f32 %v5677, %v5712
      %v5759 = vadd.f32 %v5678, %v5714
      %v5760 = vadd.f32 %v5679, %v5712
      %v5761 = vadd.f32 %v5680, %v5714
      %v5762 = vadd.f32 %v5681, %v5712
      %v5763 = vadd.f32 %v5682, %v5714
      %v5764 = vadd.f32 %v5683, %v5712
      %v5765 = vadd.f32 %v5684, %v5714
      %v5766 = vadd.f32 %v5685, %v5712
      %v5767 = vadd.f32 %v5686, %v5714
      %v5768 = vadd.f32 %v5687, %v5712
      %v5769 = vadd.f32 %v5688, %v5714
      %v5770 = vadd.f32 %v5689, %v5712
      %v5771 = vadd.f32 %v5690, %v5714
      %v5772 = vadd.f32 %v5691, %v5712
      %v5773 = vadd.f32 %v5692, %v5714
      %v5774 = vadd.f32 %v5693, %v5712
      %v5775 = vadd.f32 %v5694, %v5714
      %v5776 = vadd.f32 %v5695, %v5712
      %v5777 = vadd.f32 %v5696, %v5714
      %v5778 = vadd.f32 %v5697, %v5712
      %v5779 = vadd.f32 %v5698, %v5714
      %v5780 = vadd.f32 %v5699, %v5712
      %v5781 = vadd.f32 %v5700, %v5714
      %v5782 = vadd.f32 %v5701, %v5712
      %v5783 = vadd.f32 %v5702, %v5714
      %v5784 = vadd.f32 %v5703, %v5712
      %v5785 = vadd.f32 %v5704, %v5714
      %v5786 = vadd.f32 %v5705, %v5712
      %v5787 = vadd.f32 %v5706, %v5714
      %v5860 = vcombine.low %v5716, %v5717
      %v5861 = vcombine.low %v5718, %v5719
      %v5862 = vcombine.low %v5720, %v5721
      %v5863 = vcombine.low %v5722, %v5723
      %v5864 = vcombine.low %v5724, %v5725
      %v5865 = vcombine.low %v5726, %v5727
      %v5866 = vcombine.low %v5728, %v5729
      %v5867 = vcombine.low %v5730, %v5731
      %v5868 = vcombine.low %v5732, %v5733
      %v5869 = vcombine.low %v5734, %v5735
      %v5870 = vcombine.low %v5736, %v5737
      %v5871 = vcombine.low %v5738, %v5739
      %v5872 = vcombine.low %v5740, %v5741
      %v5873 = vcombine.low %v5742, %v5743
      %v5874 = vcombine.low %v5744, %v5745
      %v5875 = vcombine.low %v5746, %v5747
      %v5876 = vcombine.low %v5748, %v5749
      %v5877 = vcombine.low %v5750, %v5751
      %v5878 = vcombine.low %v5752, %v5753
      %v5879 = vcombine.low %v5754, %v5755
      %v5880 = vcombine.low %v5756, %v5757
      %v5881 = vcombine.low %v5758, %v5759
      %v5882 = vcombine.low %v5760, %v5761
      %v5883 = vcombine.low %v5762, %v5763
      %v5884 = vcombine.low %v5764, %v5765
      %v5885 = vcombine.low %v5766, %v5767
      %v5886 = vcombine.low %v5768, %v5769
      %v5887 = vcombine.low %v5770, %v5771
      %v5888 = vcombine.low %v5772, %v5773
      %v5889 = vcombine.low %v5774, %v5775
      %v5890 = vcombine.low %v5776, %v5777
      %v5891 = vcombine.low %v5778, %v5779
      %v5892 = vcombine.low %v5780, %v5781
      %v5893 = vcombine.low %v5782, %v5783
      %v5894 = vcombine.low %v5784, %v5785
      %v5895 = vcombine.low %v5786, %v5787
      %vm5932 = vcmask 64512
      %5933 = vst.msk [vmem:[%s285] sm:$0xff] %vm5932, %v5860
      %5934 = vst.msk [vmem:[%s285 + $0x8] sm:$0xff] %vm5932, %v5861
      %5935 = vst.msk [vmem:[%s285 + $0x10] sm:$0xff] %vm5932, %v5862
      %5936 = vst.msk [vmem:[%s285 + $0x18] sm:$0xff] %vm5932, %v5863
      %5937 = vst.msk [vmem:[%s285 + $0x20] sm:$0xff] %vm5932, %v5864
      %5938 = vst.msk [vmem:[%s285 + $0x28] sm:$0xff] %vm5932, %v5865
      %5939 = vst.msk [vmem:[%s285 + $0x30] sm:$0xff] %vm5932, %v5866
      %5940 = vst.msk [vmem:[%s285 + $0x38] sm:$0xff] %vm5932, %v5867
      %5941 = vst.msk [vmem:[%s285 + $0x40] sm:$0xff] %vm5932, %v5868
      %5942 = vst.msk [vmem:[%s285 + $0x48] sm:$0xff] %vm5932, %v5869
      %5943 = vst.msk [vmem:[%s285 + $0x50] sm:$0xff] %vm5932, %v5870
      %5944 = vst.msk [vmem:[%s285 + $0x58] sm:$0xff] %vm5932, %v5871
      %5945 = vst.msk [vmem:[%s285 + $0x60] sm:$0xff] %vm5932, %v5872
      %5946 = vst.msk [vmem:[%s285 + $0x68] sm:$0xff] %vm5932, %v5873
      %5947 = vst.msk [vmem:[%s285 + $0x70] sm:$0xff] %vm5932, %v5874
      %5948 = vst.msk [vmem:[%s285 + $0x78] sm:$0xff] %vm5932, %v5875
      %5949 = vst.msk [vmem:[%s285 + $0x80] sm:$0xff] %vm5932, %v5876
      %5950 = vst.msk [vmem:[%s285 + $0x88] sm:$0xff] %vm5932, %v5877
      %5951 = vst.msk [vmem:[%s285 + $0x90] sm:$0xff] %vm5932, %v5878
      %5952 = vst.msk [vmem:[%s285 + $0x98] sm:$0xff] %vm5932, %v5879
      %5953 = vst.msk [vmem:[%s285 + $0xa0] sm:$0xff] %vm5932, %v5880
      %5954 = vst.msk [vmem:[%s285 + $0xa8] sm:$0xff] %vm5932, %v5881
      %5955 = vst.msk [vmem:[%s285 + $0xb0] sm:$0xff] %vm5932, %v5882
      %5956 = vst.msk [vmem:[%s285 + $0xb8] sm:$0xff] %vm5932, %v5883
      %5957 = vst.msk [vmem:[%s285 + $0xc0] sm:$0xff] %vm5932, %v5884
      %5958 = vst.msk [vmem:[%s285 + $0xc8] sm:$0xff] %vm5932, %v5885
      %5959 = vst.msk [vmem:[%s285 + $0xd0] sm:$0xff] %vm5932, %v5886
      %5960 = vst.msk [vmem:[%s285 + $0xd8] sm:$0xff] %vm5932, %v5887
      %5961 = vst.msk [vmem:[%s285 + $0xe0] sm:$0xff] %vm5932, %v5888
      %5962 = vst.msk [vmem:[%s285 + $0xe8] sm:$0xff] %vm5932, %v5889
      %5963 = vst.msk [vmem:[%s285 + $0xf0] sm:$0xff] %vm5932, %v5890
      %5964 = vst.msk [vmem:[%s285 + $0xf8] sm:$0xff] %vm5932, %v5891
      %5965 = vst.msk [vmem:[%s285 + $0x100] sm:$0xff] %vm5932, %v5892
      %5966 = vst.msk [vmem:[%s285 + $0x108] sm:$0xff] %vm5932, %v5893
      %5967 = vst.msk [vmem:[%s285 + $0x110] sm:$0xff] %vm5932, %v5894
      %5968 = vst.msk [vmem:[%s285 + $0x118] sm:$0xff] %vm5932, %v5895
      %s5969 = smul.u32 2, %s18
      %p5970 = scmp.lt.s32.totalorder %s5969, 3
      %s5971 = scalar_select %p5970, %s5969, 3
      %s5972 = smul.addr %s5971, 18
      %s5973 = smul.addr %s5972, 8
      %s5974 = scalar_lea.vmem %s7, %s5973
      // Predicated region
      $region49: #{model_forward.1} parent=47 // pred_check
        %p5975 = pneg %p188
      $region50: #{model_forward.1} parent=47 // pred_check_branch
        %5977 = sbr.rel (%p5975) target = $region52
      $region51: #{model_forward.1} parent=47 // pred_region
        %s5978 = smul.u32 2, %s18
      $region52: #{model_forward.1} parent=47 // pred_fallthru
        _
    $region48: #{model_forward.1} parent=5 // pred_fallthru
      _
    %p5979 = scmp.le.s32.totalorder 2, %s13
    // Predicated region
    $region53: #{model_forward.1} parent=5 // pred_check
      %p5980 = pneg %p5979
    $region54: #{model_forward.1} parent=5 // pred_check_branch
      %5982 = sbr.rel (%p5980) target = $region56
    $region55: #{model_forward.1} parent=5 // pred_region
      %s5983 = ssub.s32 %s13, 2
      // Predicated region
      $region57: #{model_forward.1} parent=55 // pred_check
        %p5984 = pneg %p194
      $region58: #{model_forward.1} parent=55 // pred_check_branch
        %5986 = sbr.rel (%p5984) target = $region60
      $region59: #{model_forward.1} parent=55 // pred_region
        %s5987 = smul.u32 2, %s19
        %p5988 = scmp.lt.s32.totalorder %s5987, 3
        %s5989 = scalar_select %p5988, %s5987, 3
        %s5990 = smul.addr %s5989, 18
        %s5991 = smul.addr %s5990, 8
        %s5992 = scalar_lea.vmem %s7, %s5991
      $region60: #{model_forward.1} parent=55 // pred_fallthru
        _
    $region56: #{model_forward.1} parent=5 // pred_fallthru
      _
  $region6: #{model_forward.1} parent=0 // loop_footer
    %s17 = sadd.s32 1, %s13
  $region7: #{model_forward.1} parent=0 // loop_footer_branch
    %12 = sbr.rel target = $region3
  $region8: #{model_forward.1} parent=0 // loop_exit
    _

</llo_original>
